<compile_context>
chip_gen: v7x
topology: tpu7x:2x2x1
jax: 0.10.0
libtpu: 0.0.40
codegen_flags: <defaults>
</compile_context>

<pallas_src>
import math

import jax
import jax.numpy as jnp
from jax.experimental import pallas as pl
from jax.experimental.pallas import tpu as pltpu


# -----------------------------------------------------------------------------
# Fused kernel: all TransformerConv layers + LayerNorms + final sigmoid
# -----------------------------------------------------------------------------
def make_fused_gtrans_kernel(N, H, De0, layer_cfgs):
    """layer_cfgs: per-layer static config dicts with keys
    Din, C, Dout, M (edge feature dim this layer), concat, has_ln."""

    bf16 = jnp.bfloat16

    def kernel(x_ref, neg_ref, ed_ref, *rest):
        out_ref = rest[-1]
        blob_refs = rest[:-1]

        x = x_ref[...]                                 # [N, Din0] node features
        neg = neg_ref[...]                             # [N, N] additive softmax mask
        ed = ed_ref[...]                               # [De0, N, N] dense ini edge attrs
        ed_slabs = [ed[d] for d in range(De0)]         # loop-invariant [N, N] slabs

        alpha_prev = []                                # prev layer per-head alpha [N, N]
        for li, cfg in enumerate(layer_cfgs):
            Din, C, Dout, M = cfg["Din"], cfg["C"], cfg["Dout"], cfg["M"]
            concat, has_ln = cfg["concat"], cfg["has_ln"]
            HC = H * C
            Hprev = M - De0                            # alpha feature columns (0 on layer 0)
            scale = 1.0 / math.sqrt(C)

            blob = blob_refs[li][...]                  # [rows, 3HC+Dout+H*M] packed weights
            w_fused = blob[0:Din, :]                   # [Din, Wl]
            b_fused = blob[Din:Din + 1, :]             # [1, Wl]
            r0 = Din + 1
            we = blob[r0:r0 + M, 0:HC]                 # lin_edge weight [M, HC]
            r1 = r0 + M
            wa = blob[r1:r1 + 1, 0:Dout]               # beta row (out_attn side)
            wx = blob[r1 + 1:r1 + 2, 0:Dout]           # beta row (skip side)

            # ---- ONE fused MXU matmul: q | k | v | x_r | G (edge-score coeffs) ----
            proj = jnp.dot(x.astype(bf16), w_fused.astype(bf16),
                           preferred_element_type=jnp.float32) + b_fused

            head_outs = []
            new_alpha = []
            for h in range(H):                         # static unroll (H is small)
                qh = proj[:, h * C:(h + 1) * C]                        # [N, C]
                kh = proj[:, HC + h * C: HC + (h + 1) * C]             # [N, C]
                vh = proj[:, 2 * HC + h * C: 2 * HC + (h + 1) * C]     # [N, C]
                gbase = 3 * HC + Dout + h * M                          # G block for head h

                # main q.kT on the MXU
                score = jnp.dot(qh.astype(bf16), kh.astype(bf16).T,
                                preferred_element_type=jnp.float32)    # [N, N]
                # edge-feature score corrections: column-broadcast VPU adds,
                # no [N,N,C] temps and no [N*N,HC] edge projection.
                for d in range(De0):
                    score = score + proj[:, gbase + d: gbase + d + 1] * ed_slabs[d]
                for hp in range(Hprev):
                    score = score + (proj[:, gbase + De0 + hp: gbase + De0 + hp + 1]
                                     * alpha_prev[hp])

                # single additive mask; exp underflows to exact 0 off-graph.
                # TODO(synk): add a denom>0 guard if zero-in-degree nodes are possible.
                score = score * scale + neg
                m = jnp.max(score, axis=1, keepdims=True)
                p = jnp.exp(score - m)
                denom = jnp.sum(p, axis=1, keepdims=True)              # >= 1 by construction
                alpha = p * pl.reciprocal(denom, approx=True)          # [N, N]
                new_alpha.append(alpha)
                # TODO(synk): dropout(p=0.1) on alpha omitted (eval/inference mode).

                # main alpha.v on the MXU
                oh = jnp.dot(alpha.astype(bf16), vh.astype(bf16),
                             preferred_element_type=jnp.float32)       # [N, C]
                # value-side edge corrections: row-dots + rank-1 outer adds (VPU/XLU)
                weh = we[:, h * C:(h + 1) * C]                         # [M, C]
                for d in range(De0):
                    r = jnp.sum(alpha * ed_slabs[d], axis=1, keepdims=True)   # [N, 1]
                    oh = oh + r * weh[d:d + 1, :]
                for hp in range(Hprev):
                    r = jnp.sum(alpha * alpha_prev[hp], axis=1, keepdims=True)
                    oh = oh + r * weh[De0 + hp:De0 + hp + 1, :]
                head_outs.append(oh)

            if concat:
                out_attn = jnp.concatenate(head_outs, axis=1)          # [N, H*C]
            else:
                acc = head_outs[0]
                for oh in head_outs[1:]:
                    acc = acc + oh
                out_attn = acc * (1.0 / H)                             # [N, C]

            # gated residual (beta): VPU multiply + lane reduce (no MXU drains)
            x_r = proj[:, 3 * HC: 3 * HC + Dout]
            blog = jnp.sum(out_attn * wa + x_r * wx, axis=1, keepdims=True)
            beta = jax.nn.sigmoid(blog)
            out = beta * x_r + (1.0 - beta) * out_attn

            if has_ln:
                # TODO(synk): per-node torch.nn.LayerNorm semantics assumed (not
                # torch_geometric graph-mode LayerNorm).
                gamma = blob[r1 + 2:r1 + 3, 0:Dout]
                beta_ln = blob[r1 + 3:r1 + 4, 0:Dout]
                mu = jnp.mean(out, axis=-1, keepdims=True)
                var = jnp.mean((out - mu) * (out - mu), axis=-1, keepdims=True)
                out = (out - mu) * jax.lax.rsqrt(var + 1e-5) * gamma + beta_ln

            x = out
            alpha_prev = new_alpha                     # next layer edge feats = cat(ini, alpha)

        out_ref[...] = jax.nn.sigmoid(x)               # final layer output [N, 1]

    return kernel


# -----------------------------------------------------------------------------
# Parameter init (deterministic, synthetic) — PyG TransformerConv layout
# -----------------------------------------------------------------------------
def init_tconv_params(key, Din, H, C, De, concat):
    Dhid = H * C
    Dout = Dhid if concat else C
    ks = jax.random.split(key, 10)

    def lin(k, fi, fo, s=None):
        s = (1.0 / math.sqrt(fi)) if s is None else s
        return jax.random.normal(k, (fi, fo), jnp.float32) * s

    return dict(
        wq=lin(ks[0], Din, Dhid), bq=lin(ks[1], 1, Dhid, 0.01),
        wk=lin(ks[2], Din, Dhid), bk=lin(ks[3], 1, Dhid, 0.01),
        wv=lin(ks[4], Din, Dhid), bv=lin(ks[5], 1, Dhid, 0.01),
        we=lin(ks[6], De, Dhid),                      # lin_edge: bias=False (PyG)
        wskip=lin(ks[7], Din, Dout), bskip=lin(ks[8], 1, Dout, 0.01),
        wbeta=lin(ks[9], 3 * Dout, 1),                # lin_beta: bias=False (PyG)
    )


def init_model_params(key, ini_node_dim, ini_edge_dim, num_layers, num_heads, out_channels):
    # TODO(synk): `beta_attention=True` has no public PyG definition; standard
    # TransformerConv beta gating is implemented. norms_edge is unused in forward.
    params = {"layers": [], "norms": []}
    in_ch = ini_node_dim
    edge_dim = ini_edge_dim
    keys = jax.random.split(key, num_layers + 1)
    for i in range(num_layers):
        params["layers"].append(
            init_tconv_params(keys[i], in_ch, num_heads, out_channels[i], edge_dim, True))
        d = out_channels[i] * num_heads
        params["norms"].append((jnp.ones((1, d), jnp.float32),
                                jnp.zeros((1, d), jnp.float32)))
        in_ch = d
        edge_dim = ini_edge_dim + num_heads
    params["final"] = init_tconv_params(keys[-1], in_ch, num_heads, 1, edge_dim, False)
    return params


# -----------------------------------------------------------------------------
# Wrapper-side packing: fused projection weight, beta split, per-layer blob
# -----------------------------------------------------------------------------
def _pack_layer_blob(lp, ln, Din, H, C, Dout, M, has_ln):
    """One packed f32 blob per layer: [W_fused; b_fused; we; wa; wx; (gamma; beta)]."""
    HC = H * C
    we = lp["we"]                                                     # [M, HC]
    # Block-diagonal per-head we^T so G = q @ Wg gives the score-side edge coeffs;
    # folded into the fused projection (q = x@wq + bq  =>  G = x@(wq@Wg) + bq@Wg).
    Wg = jnp.zeros((HC, H * M), jnp.float32)
    for h in range(H):
        Wg = Wg.at[h * C:(h + 1) * C, h * M:(h + 1) * M].set(we[:, h * C:(h + 1) * C].T)

    w_fused = jnp.concatenate(
        [lp["wq"], lp["wk"], lp["wv"], lp["wskip"], jnp.dot(lp["wq"], Wg)], axis=1)
    b_fused = jnp.concatenate(
        [lp["bq"], lp["bk"], lp["bv"], lp["bskip"], jnp.dot(lp["bq"], Wg)], axis=1)
    Wl = w_fused.shape[1]                                             # 3HC + Dout + H*M

    # lin_beta split: cat([o, x_r, o-x_r]) @ W == o@(W[:D]+W[2D:]) + x_r@(W[D:2D]-W[2D:])
    wb = lp["wbeta"]
    wa = (wb[:Dout] + wb[2 * Dout:]).T                                # [1, Dout]
    wx = (wb[Dout:2 * Dout] - wb[2 * Dout:]).T                        # [1, Dout]

    def padw(a):
        return jnp.pad(a, ((0, 0), (0, Wl - a.shape[1])))

    rows = [w_fused, b_fused, padw(we), padw(wa), padw(wx)]
    if has_ln:
        gamma, beta_ln = ln
        rows += [padw(gamma), padw(beta_ln)]
    return jnp.concatenate(rows, axis=0)


def densify_edges(edge_index, edge_attr, N):
    src, dst = edge_index[0], edge_index[1]
    De = edge_attr.shape[1]
    adj = jnp.zeros((N, N), jnp.float32).at[dst, src].set(1.0)
    edge_dense = jnp.zeros((N, N, De), jnp.float32).at[dst, src].set(edge_attr)
    return adj, edge_dense


def gtrans_forward_batched(params, x, adj, edge_dense, *, num_heads, out_channels):
    """Batched forward: x [B,N,Din0], adj [B,N,N], edge_dense [B,N,N,De0] -> [B,N,1]."""
    B, N, Din0 = x.shape
    De0 = edge_dense.shape[-1]
    H = num_heads

    # hoisted once: additive softmax mask and dst-major dense ini edge slabs
    neg = jnp.where(adj > 0.0, 0.0, -1e30).astype(jnp.float32)        # [B, N, N]
    ed = jnp.transpose(edge_dense, (0, 3, 1, 2)).astype(jnp.float32)  # [B, De0, N, N]

    layer_cfgs, blobs = [], []
    in_ch, M = Din0, De0
    for i, lp in enumerate(params["layers"]):
        C = out_channels[i]
        Dout = H * C
        blobs.append(_pack_layer_blob(lp, params["norms"][i], in_ch, H, C, Dout, M, True))
        layer_cfgs.append(dict(Din=in_ch, C=C, Dout=Dout, M=M, concat=True, has_ln=True))
        in_ch = Dout
        M = De0 + H
    fp = params["final"]
    blobs.append(_pack_layer_blob(fp, None, in_ch, H, 1, 1, M, False))
    layer_cfgs.append(dict(Din=in_ch, C=1, Dout=1, M=M, concat=False, has_ln=False))

    kernel = make_fused_gtrans_kernel(N, H, De0, layer_cfgs)

    in_specs = [
        pl.BlockSpec((None, N, Din0), lambda b: (b, 0, 0)),           # x      (per graph)
        pl.BlockSpec((None, N, N), lambda b: (b, 0, 0)),              # mask   (per graph)
        pl.BlockSpec((None, De0, N, N), lambda b: (b, 0, 0, 0)),      # edges  (per graph)
    ] + [pl.BlockSpec(blob.shape, lambda b: (0, 0)) for blob in blobs]  # weights: DMA'd once

    out = pl.pallas_call(
        kernel,
        out_shape=jax.ShapeDtypeStruct((B, N, 1), jnp.float32),
        grid=(B,),                                                     # one grid step per graph
        in_specs=in_specs,
        out_specs=pl.BlockSpec((None, N, 1), lambda b: (b, 0, 0)),
        compiler_params=pltpu.CompilerParams(
            dimension_semantics=("parallel",)),                        # v7x dual-TC sharding
    )(x, neg, ed, *blobs)
    return out


# -----------------------------------------------------------------------------
if __name__ == "__main__":
    B = 4                  # graphs per batch (grid axis)
    N = 16                 # nodes per graph
    INI_NODE_DIM = 8
    INI_EDGE_DIM = 4
    NUM_LAYERS = 2
    NUM_HEADS = 2
    OUT_CHANNELS = [8, 8]

    key = jax.random.PRNGKey(0)
    kx, ke, kp = jax.random.split(key, 3)

    x = jax.random.normal(kx, (B, N, INI_NODE_DIM), jnp.float32)

    # deterministic edge list: each node i has edges i -> (i+k) % N, k=1..3
    src = jnp.concatenate([jnp.arange(N, dtype=jnp.int32) for _ in range(3)])
    dst = jnp.concatenate([(jnp.arange(N, dtype=jnp.int32) + k) % N for k in (1, 2, 3)])
    edge_index = jnp.stack([src, dst], axis=0)                       # [2, E], E = 48
    E = edge_index.shape[1]
    edge_attr = jax.random.normal(ke, (B, E, INI_EDGE_DIM), jnp.float32)

    adj_list, ed_list = [], []
    for b in range(B):
        a, d = densify_edges(edge_index, edge_attr[b], N)
        adj_list.append(a)
        ed_list.append(d)
    adj = jnp.stack(adj_list)                                        # [B, N, N]
    edge_dense = jnp.stack(ed_list)                                  # [B, N, N, De0]

    params = init_model_params(kp, INI_NODE_DIM, INI_EDGE_DIM,
                               NUM_LAYERS, NUM_HEADS, OUT_CHANNELS)

    fwd = jax.jit(lambda p, xx, aa, ee: gtrans_forward_batched(
        p, xx, aa, ee, num_heads=NUM_HEADS, out_channels=OUT_CHANNELS))
    out = jax.block_until_ready(fwd(params, x, adj, edge_dense))

    assert out.shape == (B, N, 1)
    assert bool(jnp.all(jnp.isfinite(out)))
    assert bool(jnp.all((out >= 0.0) & (out <= 1.0)))
    print("KERNEL_OK")
</pallas_src>

<mosaic_0001>
module attributes {stable_mosaic.version = 11 : i64} {
  func.func @kernel(%arg0: i32, %arg1: memref<1x16x8xf32, #tpu.memory_space<vmem>>, %arg2: memref<1x16x16xf32, #tpu.memory_space<vmem>>, %arg3: memref<1x4x16x16xf32, #tpu.memory_space<vmem>>, %arg4: memref<17x72xf32, #tpu.memory_space<vmem>>, %arg5: memref<27x76xf32, #tpu.memory_space<vmem>>, %arg6: memref<25x19xf32, #tpu.memory_space<vmem>>, %arg7: memref<1x16x1xf32, #tpu.memory_space<vmem>>) attributes {dimension_semantics = [#tpu.dimension_semantics<parallel>], iteration_bounds = array<i64: 4>, scalar_prefetch = 0 : i64, scratch_operands = 0 : i64, tpu.core_type = #tpu.core_type<tc>, window_params = [{transform_indices = @transform_0, window_bounds = array<i64: 1, 16, 8>}, {transform_indices = @transform_1, window_bounds = array<i64: 1, 16, 16>}, {transform_indices = @transform_2, window_bounds = array<i64: 1, 4, 16, 16>}, {pipeline_mode = #tpu.pipeline_mode<synchronous>, transform_indices = @transform_3, window_bounds = array<i64: 17, 72>}, {pipeline_mode = #tpu.pipeline_mode<synchronous>, transform_indices = @transform_4, window_bounds = array<i64: 27, 76>}, {pipeline_mode = #tpu.pipeline_mode<synchronous>, transform_indices = @transform_5, window_bounds = array<i64: 25, 19>}, {transform_indices = @transform_6, window_bounds = array<i64: 1, 16, 1>}]} {
    %c0 = arith.constant 0 : index
    %c0_0 = arith.constant 0 : index
    %c0_1 = arith.constant 0 : index
    %0 = vector.load %arg1[%c0, %c0_0, %c0_1] : memref<1x16x8xf32, #tpu.memory_space<vmem>>, vector<1x16x8xf32>
    %1 = vector.shape_cast %0 : vector<1x16x8xf32> to vector<16x8xf32>
    %c0_2 = arith.constant 0 : index
    %c0_3 = arith.constant 0 : index
    %c0_4 = arith.constant 0 : index
    %2 = vector.load %arg2[%c0_2, %c0_3, %c0_4] : memref<1x16x16xf32, #tpu.memory_space<vmem>>, vector<1x16x16xf32>
    %3 = vector.shape_cast %2 : vector<1x16x16xf32> to vector<16x16xf32>
    %c0_5 = arith.constant 0 : index
    %c0_6 = arith.constant 0 : index
    %c0_7 = arith.constant 0 : index
    %c0_8 = arith.constant 0 : index
    %4 = vector.load %arg3[%c0_5, %c0_6, %c0_7, %c0_8] : memref<1x4x16x16xf32, #tpu.memory_space<vmem>>, vector<1x4x16x16xf32>
    %5 = vector.shape_cast %4 : vector<1x4x16x16xf32> to vector<4x16x16xf32>
    %6 = vector.extract_strided_slice %5 {offsets = [0, 0, 0], sizes = [1, 16, 16], strides = [1, 1, 1]} : vector<4x16x16xf32> to vector<1x16x16xf32>
    %7 = vector.shape_cast %6 : vector<1x16x16xf32> to vector<16x16xf32>
    %8 = vector.extract_strided_slice %5 {offsets = [1, 0, 0], sizes = [1, 16, 16], strides = [1, 1, 1]} : vector<4x16x16xf32> to vector<1x16x16xf32>
    %9 = vector.shape_cast %8 : vector<1x16x16xf32> to vector<16x16xf32>
    %10 = vector.extract_strided_slice %5 {offsets = [2, 0, 0], sizes = [1, 16, 16], strides = [1, 1, 1]} : vector<4x16x16xf32> to vector<1x16x16xf32>
    %11 = vector.shape_cast %10 : vector<1x16x16xf32> to vector<16x16xf32>
    %12 = vector.extract_strided_slice %5 {offsets = [3, 0, 0], sizes = [1, 16, 16], strides = [1, 1, 1]} : vector<4x16x16xf32> to vector<1x16x16xf32>
    %13 = vector.shape_cast %12 : vector<1x16x16xf32> to vector<16x16xf32>
    %c0_9 = arith.constant 0 : index
    %c0_10 = arith.constant 0 : index
    %14 = vector.load %arg4[%c0_9, %c0_10] : memref<17x72xf32, #tpu.memory_space<vmem>>, vector<17x72xf32>
    %15 = vector.extract_strided_slice %14 {offsets = [0, 0], sizes = [8, 72], strides = [1, 1]} : vector<17x72xf32> to vector<8x72xf32>
    %16 = vector.extract_strided_slice %14 {offsets = [8, 0], sizes = [1, 72], strides = [1, 1]} : vector<17x72xf32> to vector<1x72xf32>
    %17 = vector.extract_strided_slice %14 {offsets = [9, 0], sizes = [4, 16], strides = [1, 1]} : vector<17x72xf32> to vector<4x16xf32>
    %18 = vector.extract_strided_slice %14 {offsets = [13, 0], sizes = [1, 16], strides = [1, 1]} : vector<17x72xf32> to vector<1x16xf32>
    %19 = vector.extract_strided_slice %14 {offsets = [14, 0], sizes = [1, 16], strides = [1, 1]} : vector<17x72xf32> to vector<1x16xf32>
    %20 = arith.truncf %1 : vector<16x8xf32> to vector<16x8xbf16>
    %21 = arith.truncf %15 : vector<8x72xf32> to vector<8x72xbf16>
    %cst = arith.constant dense<0.000000e+00> : vector<16x72xf32>
    %22 = tpu.matmul %20, %21, %cst {dimension_numbers = #tpu.dot_dimension_numbers<[1], [0], [0], [1], [0, 0, 1, 1], [], []>} : vector<16x8xbf16>, vector<8x72xbf16>, vector<16x72xf32> -> vector<16x72xf32>
    %23 = vector.broadcast %16 : vector<1x72xf32> to vector<16x72xf32>
    %24 = arith.addf %22, %23 : vector<16x72xf32>
    %25 = vector.extract_strided_slice %24 {offsets = [0, 0], sizes = [16, 8], strides = [1, 1]} : vector<16x72xf32> to vector<16x8xf32>
    %26 = vector.extract_strided_slice %24 {offsets = [0, 16], sizes = [16, 8], strides = [1, 1]} : vector<16x72xf32> to vector<16x8xf32>
    %27 = vector.extract_strided_slice %24 {offsets = [0, 32], sizes = [16, 8], strides = [1, 1]} : vector<16x72xf32> to vector<16x8xf32>
    %28 = arith.truncf %25 : vector<16x8xf32> to vector<16x8xbf16>
    %29 = arith.truncf %26 : vector<16x8xf32> to vector<16x8xbf16>
    %30 = tpu.transpose %29, [1, 0] : vector<16x8xbf16> -> vector<8x16xbf16>
    %cst_11 = arith.constant dense<0.000000e+00> : vector<16x16xf32>
    %31 = tpu.matmul %28, %30, %cst_11 {dimension_numbers = #tpu.dot_dimension_numbers<[1], [0], [0], [1], [0, 0, 1, 1], [], []>} : vector<16x8xbf16>, vector<8x16xbf16>, vector<16x16xf32> -> vector<16x16xf32>
    %32 = vector.extract_strided_slice %24 {offsets = [0, 64], sizes = [16, 1], strides = [1, 1]} : vector<16x72xf32> to vector<16x1xf32>
    %33 = vector.broadcast %32 : vector<16x1xf32> to vector<16x16xf32>
    %34 = arith.mulf %33, %7 : vector<16x16xf32>
    %35 = arith.addf %31, %34 : vector<16x16xf32>
    %36 = vector.extract_strided_slice %24 {offsets = [0, 65], sizes = [16, 1], strides = [1, 1]} : vector<16x72xf32> to vector<16x1xf32>
    %37 = vector.broadcast %36 : vector<16x1xf32> to vector<16x16xf32>
    %38 = arith.mulf %37, %9 : vector<16x16xf32>
    %39 = arith.addf %35, %38 : vector<16x16xf32>
    %40 = vector.extract_strided_slice %24 {offsets = [0, 66], sizes = [16, 1], strides = [1, 1]} : vector<16x72xf32> to vector<16x1xf32>
    %41 = vector.broadcast %40 : vector<16x1xf32> to vector<16x16xf32>
    %42 = arith.mulf %41, %11 : vector<16x16xf32>
    %43 = arith.addf %39, %42 : vector<16x16xf32>
    %44 = vector.extract_strided_slice %24 {offsets = [0, 67], sizes = [16, 1], strides = [1, 1]} : vector<16x72xf32> to vector<16x1xf32>
    %45 = vector.broadcast %44 : vector<16x1xf32> to vector<16x16xf32>
    %46 = arith.mulf %45, %13 : vector<16x16xf32>
    %47 = arith.addf %43, %46 : vector<16x16xf32>
    %cst_12 = arith.constant 0.353553385 : f32
    %48 = vector.broadcast %cst_12 : f32 to vector<16x16xf32>
    %49 = arith.mulf %47, %48 : vector<16x16xf32>
    %50 = arith.addf %49, %3 : vector<16x16xf32>
    %cst_13 = arith.constant dense<0xFF800000> : vector<16xf32>
    %51 = vector.multi_reduction <maximumf>, %50, %cst_13 [1] : vector<16x16xf32> to vector<16xf32>
    %52 = vector.shape_cast %51 : vector<16xf32> to vector<16x1xf32>
    %53 = vector.broadcast %52 : vector<16x1xf32> to vector<16x16xf32>
    %54 = arith.subf %50, %53 : vector<16x16xf32>
    %55 = math.exp %54 : vector<16x16xf32>
    %cst_14 = arith.constant dense<0.000000e+00> : vector<16xf32>
    %56 = vector.multi_reduction <add>, %55, %cst_14 [1] : vector<16x16xf32> to vector<16xf32>
    %57 = vector.shape_cast %56 : vector<16xf32> to vector<16x1xf32>
    %58 = tpu.reciprocal %57 {approx = true} : vector<16x1xf32> -> vector<16x1xf32>
    %59 = vector.broadcast %58 : vector<16x1xf32> to vector<16x16xf32>
    %60 = arith.mulf %55, %59 : vector<16x16xf32>
    %61 = arith.truncf %60 : vector<16x16xf32> to vector<16x16xbf16>
    %62 = arith.truncf %27 : vector<16x8xf32> to vector<16x8xbf16>
    %cst_15 = arith.constant dense<0.000000e+00> : vector<16x8xf32>
    %63 = tpu.matmul %61, %62, %cst_15 {dimension_numbers = #tpu.dot_dimension_numbers<[1], [0], [0], [1], [0, 0, 1, 1], [], []>} : vector<16x16xbf16>, vector<16x8xbf16>, vector<16x8xf32> -> vector<16x8xf32>
    %64 = vector.extract_strided_slice %17 {offsets = [0, 0], sizes = [4, 8], strides = [1, 1]} : vector<4x16xf32> to vector<4x8xf32>
    %65 = arith.mulf %60, %7 : vector<16x16xf32>
    %cst_16 = arith.constant dense<0.000000e+00> : vector<16xf32>
    %66 = vector.multi_reduction <add>, %65, %cst_16 [1] : vector<16x16xf32> to vector<16xf32>
    %67 = vector.shape_cast %66 : vector<16xf32> to vector<16x1xf32>
    %68 = vector.extract_strided_slice %64 {offsets = [0, 0], sizes = [1, 8], strides = [1, 1]} : vector<4x8xf32> to vector<1x8xf32>
    %69 = vector.broadcast %67 : vector<16x1xf32> to vector<16x8xf32>
    %70 = vector.broadcast %68 : vector<1x8xf32> to vector<16x8xf32>
    %71 = arith.mulf %69, %70 : vector<16x8xf32>
    %72 = arith.addf %63, %71 : vector<16x8xf32>
    %73 = arith.mulf %60, %9 : vector<16x16xf32>
    %cst_17 = arith.constant dense<0.000000e+00> : vector<16xf32>
    %74 = vector.multi_reduction <add>, %73, %cst_17 [1] : vector<16x16xf32> to vector<16xf32>
    %75 = vector.shape_cast %74 : vector<16xf32> to vector<16x1xf32>
    %76 = vector.extract_strided_slice %64 {offsets = [1, 0], sizes = [1, 8], strides = [1, 1]} : vector<4x8xf32> to vector<1x8xf32>
    %77 = vector.broadcast %75 : vector<16x1xf32> to vector<16x8xf32>
    %78 = vector.broadcast %76 : vector<1x8xf32> to vector<16x8xf32>
    %79 = arith.mulf %77, %78 : vector<16x8xf32>
    %80 = arith.addf %72, %79 : vector<16x8xf32>
    %81 = arith.mulf %60, %11 : vector<16x16xf32>
    %cst_18 = arith.constant dense<0.000000e+00> : vector<16xf32>
    %82 = vector.multi_reduction <add>, %81, %cst_18 [1] : vector<16x16xf32> to vector<16xf32>
    %83 = vector.shape_cast %82 : vector<16xf32> to vector<16x1xf32>
    %84 = vector.extract_strided_slice %64 {offsets = [2, 0], sizes = [1, 8], strides = [1, 1]} : vector<4x8xf32> to vector<1x8xf32>
    %85 = vector.broadcast %83 : vector<16x1xf32> to vector<16x8xf32>
    %86 = vector.broadcast %84 : vector<1x8xf32> to vector<16x8xf32>
    %87 = arith.mulf %85, %86 : vector<16x8xf32>
    %88 = arith.addf %80, %87 : vector<16x8xf32>
    %89 = arith.mulf %60, %13 : vector<16x16xf32>
    %cst_19 = arith.constant dense<0.000000e+00> : vector<16xf32>
    %90 = vector.multi_reduction <add>, %89, %cst_19 [1] : vector<16x16xf32> to vector<16xf32>
    %91 = vector.shape_cast %90 : vector<16xf32> to vector<16x1xf32>
    %92 = vector.extract_strided_slice %64 {offsets = [3, 0], sizes = [1, 8], strides = [1, 1]} : vector<4x8xf32> to vector<1x8xf32>
    %93 = vector.broadcast %91 : vector<16x1xf32> to vector<16x8xf32>
    %94 = vector.broadcast %92 : vector<1x8xf32> to vector<16x8xf32>
    %95 = arith.mulf %93, %94 : vector<16x8xf32>
    %96 = arith.addf %88, %95 : vector<16x8xf32>
    %97 = vector.extract_strided_slice %24 {offsets = [0, 8], sizes = [16, 8], strides = [1, 1]} : vector<16x72xf32> to vector<16x8xf32>
    %98 = vector.extract_strided_slice %24 {offsets = [0, 24], sizes = [16, 8], strides = [1, 1]} : vector<16x72xf32> to vector<16x8xf32>
    %99 = vector.extract_strided_slice %24 {offsets = [0, 40], sizes = [16, 8], strides = [1, 1]} : vector<16x72xf32> to vector<16x8xf32>
    %100 = arith.truncf %97 : vector<16x8xf32> to vector<16x8xbf16>
    %101 = arith.truncf %98 : vector<16x8xf32> to vector<16x8xbf16>
    %102 = tpu.transpose %101, [1, 0] : vector<16x8xbf16> -> vector<8x16xbf16>
    %cst_20 = arith.constant dense<0.000000e+00> : vector<16x16xf32>
    %103 = tpu.matmul %100, %102, %cst_20 {dimension_numbers = #tpu.dot_dimension_numbers<[1], [0], [0], [1], [0, 0, 1, 1], [], []>} : vector<16x8xbf16>, vector<8x16xbf16>, vector<16x16xf32> -> vector<16x16xf32>
    %104 = vector.extract_strided_slice %24 {offsets = [0, 68], sizes = [16, 1], strides = [1, 1]} : vector<16x72xf32> to vector<16x1xf32>
    %105 = vector.broadcast %104 : vector<16x1xf32> to vector<16x16xf32>
    %106 = arith.mulf %105, %7 : vector<16x16xf32>
    %107 = arith.addf %103, %106 : vector<16x16xf32>
    %108 = vector.extract_strided_slice %24 {offsets = [0, 69], sizes = [16, 1], strides = [1, 1]} : vector<16x72xf32> to vector<16x1xf32>
    %109 = vector.broadcast %108 : vector<16x1xf32> to vector<16x16xf32>
    %110 = arith.mulf %109, %9 : vector<16x16xf32>
    %111 = arith.addf %107, %110 : vector<16x16xf32>
    %112 = vector.extract_strided_slice %24 {offsets = [0, 70], sizes = [16, 1], strides = [1, 1]} : vector<16x72xf32> to vector<16x1xf32>
    %113 = vector.broadcast %112 : vector<16x1xf32> to vector<16x16xf32>
    %114 = arith.mulf %113, %11 : vector<16x16xf32>
    %115 = arith.addf %111, %114 : vector<16x16xf32>
    %116 = vector.extract_strided_slice %24 {offsets = [0, 71], sizes = [16, 1], strides = [1, 1]} : vector<16x72xf32> to vector<16x1xf32>
    %117 = vector.broadcast %116 : vector<16x1xf32> to vector<16x16xf32>
    %118 = arith.mulf %117, %13 : vector<16x16xf32>
    %119 = arith.addf %115, %118 : vector<16x16xf32>
    %cst_21 = arith.constant 0.353553385 : f32
    %120 = vector.broadcast %cst_21 : f32 to vector<16x16xf32>
    %121 = arith.mulf %119, %120 : vector<16x16xf32>
    %122 = arith.addf %121, %3 : vector<16x16xf32>
    %cst_22 = arith.constant dense<0xFF800000> : vector<16xf32>
    %123 = vector.multi_reduction <maximumf>, %122, %cst_22 [1] : vector<16x16xf32> to vector<16xf32>
    %124 = vector.shape_cast %123 : vector<16xf32> to vector<16x1xf32>
    %125 = vector.broadcast %124 : vector<16x1xf32> to vector<16x16xf32>
    %126 = arith.subf %122, %125 : vector<16x16xf32>
    %127 = math.exp %126 : vector<16x16xf32>
    %cst_23 = arith.constant dense<0.000000e+00> : vector<16xf32>
    %128 = vector.multi_reduction <add>, %127, %cst_23 [1] : vector<16x16xf32> to vector<16xf32>
    %129 = vector.shape_cast %128 : vector<16xf32> to vector<16x1xf32>
    %130 = tpu.reciprocal %129 {approx = true} : vector<16x1xf32> -> vector<16x1xf32>
    %131 = vector.broadcast %130 : vector<16x1xf32> to vector<16x16xf32>
    %132 = arith.mulf %127, %131 : vector<16x16xf32>
    %133 = arith.truncf %132 : vector<16x16xf32> to vector<16x16xbf16>
    %134 = arith.truncf %99 : vector<16x8xf32> to vector<16x8xbf16>
    %cst_24 = arith.constant dense<0.000000e+00> : vector<16x8xf32>
    %135 = tpu.matmul %133, %134, %cst_24 {dimension_numbers = #tpu.dot_dimension_numbers<[1], [0], [0], [1], [0, 0, 1, 1], [], []>} : vector<16x16xbf16>, vector<16x8xbf16>, vector<16x8xf32> -> vector<16x8xf32>
    %136 = vector.extract_strided_slice %17 {offsets = [0, 8], sizes = [4, 8], strides = [1, 1]} : vector<4x16xf32> to vector<4x8xf32>
    %137 = arith.mulf %132, %7 : vector<16x16xf32>
    %cst_25 = arith.constant dense<0.000000e+00> : vector<16xf32>
    %138 = vector.multi_reduction <add>, %137, %cst_25 [1] : vector<16x16xf32> to vector<16xf32>
    %139 = vector.shape_cast %138 : vector<16xf32> to vector<16x1xf32>
    %140 = vector.extract_strided_slice %136 {offsets = [0, 0], sizes = [1, 8], strides = [1, 1]} : vector<4x8xf32> to vector<1x8xf32>
    %141 = vector.broadcast %139 : vector<16x1xf32> to vector<16x8xf32>
    %142 = vector.broadcast %140 : vector<1x8xf32> to vector<16x8xf32>
    %143 = arith.mulf %141, %142 : vector<16x8xf32>
    %144 = arith.addf %135, %143 : vector<16x8xf32>
    %145 = arith.mulf %132, %9 : vector<16x16xf32>
    %cst_26 = arith.constant dense<0.000000e+00> : vector<16xf32>
    %146 = vector.multi_reduction <add>, %145, %cst_26 [1] : vector<16x16xf32> to vector<16xf32>
    %147 = vector.shape_cast %146 : vector<16xf32> to vector<16x1xf32>
    %148 = vector.extract_strided_slice %136 {offsets = [1, 0], sizes = [1, 8], strides = [1, 1]} : vector<4x8xf32> to vector<1x8xf32>
    %149 = vector.broadcast %147 : vector<16x1xf32> to vector<16x8xf32>
    %150 = vector.broadcast %148 : vector<1x8xf32> to vector<16x8xf32>
    %151 = arith.mulf %149, %150 : vector<16x8xf32>
    %152 = arith.addf %144, %151 : vector<16x8xf32>
    %153 = arith.mulf %132, %11 : vector<16x16xf32>
    %cst_27 = arith.constant dense<0.000000e+00> : vector<16xf32>
    %154 = vector.multi_reduction <add>, %153, %cst_27 [1] : vector<16x16xf32> to vector<16xf32>
    %155 = vector.shape_cast %154 : vector<16xf32> to vector<16x1xf32>
    %156 = vector.extract_strided_slice %136 {offsets = [2, 0], sizes = [1, 8], strides = [1, 1]} : vector<4x8xf32> to vector<1x8xf32>
    %157 = vector.broadcast %155 : vector<16x1xf32> to vector<16x8xf32>
    %158 = vector.broadcast %156 : vector<1x8xf32> to vector<16x8xf32>
    %159 = arith.mulf %157, %158 : vector<16x8xf32>
    %160 = arith.addf %152, %159 : vector<16x8xf32>
    %161 = arith.mulf %132, %13 : vector<16x16xf32>
    %cst_28 = arith.constant dense<0.000000e+00> : vector<16xf32>
    %162 = vector.multi_reduction <add>, %161, %cst_28 [1] : vector<16x16xf32> to vector<16xf32>
    %163 = vector.shape_cast %162 : vector<16xf32> to vector<16x1xf32>
    %164 = vector.extract_strided_slice %136 {offsets = [3, 0], sizes = [1, 8], strides = [1, 1]} : vector<4x8xf32> to vector<1x8xf32>
    %165 = vector.broadcast %163 : vector<16x1xf32> to vector<16x8xf32>
    %166 = vector.broadcast %164 : vector<1x8xf32> to vector<16x8xf32>
    %167 = arith.mulf %165, %166 : vector<16x8xf32>
    %168 = arith.addf %160, %167 : vector<16x8xf32>
    %169 = tpu.concatenate %96, %168 in 1 : vector<16x8xf32>, vector<16x8xf32> -> vector<16x16xf32>
    %170 = vector.extract_strided_slice %24 {offsets = [0, 48], sizes = [16, 16], strides = [1, 1]} : vector<16x72xf32> to vector<16x16xf32>
    %171 = vector.broadcast %18 : vector<1x16xf32> to vector<16x16xf32>
    %172 = arith.mulf %169, %171 : vector<16x16xf32>
    %173 = vector.broadcast %19 : vector<1x16xf32> to vector<16x16xf32>
    %174 = arith.mulf %170, %173 : vector<16x16xf32>
    %175 = arith.addf %172, %174 : vector<16x16xf32>
    %cst_29 = arith.constant dense<0.000000e+00> : vector<16xf32>
    %176 = vector.multi_reduction <add>, %175, %cst_29 [1] : vector<16x16xf32> to vector<16xf32>
    %177 = vector.shape_cast %176 : vector<16xf32> to vector<16x1xf32>
    %178 = arith.negf %177 : vector<16x1xf32>
    %179 = math.exp %178 : vector<16x1xf32>
    %cst_30 = arith.constant 1.000000e+00 : f32
    %180 = vector.broadcast %cst_30 : f32 to vector<16x1xf32>
    %181 = arith.addf %180, %179 : vector<16x1xf32>
    %182 = arith.divf %180, %181 : vector<16x1xf32>
    %183 = vector.broadcast %182 : vector<16x1xf32> to vector<16x16xf32>
    %184 = arith.mulf %183, %170 : vector<16x16xf32>
    %cst_31 = arith.constant 1.000000e+00 : f32
    %185 = vector.broadcast %cst_31 : f32 to vector<16x1xf32>
    %186 = arith.subf %185, %182 : vector<16x1xf32>
    %187 = vector.broadcast %186 : vector<16x1xf32> to vector<16x16xf32>
    %188 = arith.mulf %187, %169 : vector<16x16xf32>
    %189 = arith.addf %184, %188 : vector<16x16xf32>
    %190 = vector.extract_strided_slice %14 {offsets = [15, 0], sizes = [1, 16], strides = [1, 1]} : vector<17x72xf32> to vector<1x16xf32>
    %191 = vector.extract_strided_slice %14 {offsets = [16, 0], sizes = [1, 16], strides = [1, 1]} : vector<17x72xf32> to vector<1x16xf32>
    %cst_32 = arith.constant dense<0.000000e+00> : vector<16xf32>
    %192 = vector.multi_reduction <add>, %189, %cst_32 [1] : vector<16x16xf32> to vector<16xf32>
    %193 = vector.shape_cast %192 : vector<16xf32> to vector<16x1xf32>
    %cst_33 = arith.constant 1.600000e+01 : f32
    %194 = vector.broadcast %cst_33 : f32 to vector<16x1xf32>
    %195 = arith.divf %193, %194 : vector<16x1xf32>
    %196 = vector.broadcast %195 : vector<16x1xf32> to vector<16x16xf32>
    %197 = arith.subf %189, %196 : vector<16x16xf32>
    %198 = vector.broadcast %195 : vector<16x1xf32> to vector<16x16xf32>
    %199 = arith.subf %189, %198 : vector<16x16xf32>
    %200 = arith.mulf %197, %199 : vector<16x16xf32>
    %cst_34 = arith.constant dense<0.000000e+00> : vector<16xf32>
    %201 = vector.multi_reduction <add>, %200, %cst_34 [1] : vector<16x16xf32> to vector<16xf32>
    %202 = vector.shape_cast %201 : vector<16xf32> to vector<16x1xf32>
    %cst_35 = arith.constant 1.600000e+01 : f32
    %203 = vector.broadcast %cst_35 : f32 to vector<16x1xf32>
    %204 = arith.divf %202, %203 : vector<16x1xf32>
    %205 = vector.broadcast %195 : vector<16x1xf32> to vector<16x16xf32>
    %206 = arith.subf %189, %205 : vector<16x16xf32>
    %cst_36 = arith.constant 9.99999974E-6 : f32
    %207 = vector.broadcast %cst_36 : f32 to vector<16x1xf32>
    %208 = arith.addf %204, %207 : vector<16x1xf32>
    %209 = math.rsqrt %208 : vector<16x1xf32>
    %210 = vector.broadcast %209 : vector<16x1xf32> to vector<16x16xf32>
    %211 = arith.mulf %206, %210 : vector<16x16xf32>
    %212 = vector.broadcast %190 : vector<1x16xf32> to vector<16x16xf32>
    %213 = arith.mulf %211, %212 : vector<16x16xf32>
    %214 = vector.broadcast %191 : vector<1x16xf32> to vector<16x16xf32>
    %215 = arith.addf %213, %214 : vector<16x16xf32>
    %c0_37 = arith.constant 0 : index
    %c0_38 = arith.constant 0 : index
    %216 = vector.load %arg5[%c0_37, %c0_38] : memref<27x76xf32, #tpu.memory_space<vmem>>, vector<27x76xf32>
    %217 = vector.extract_strided_slice %216 {offsets = [0, 0], sizes = [16, 76], strides = [1, 1]} : vector<27x76xf32> to vector<16x76xf32>
    %218 = vector.extract_strided_slice %216 {offsets = [16, 0], sizes = [1, 76], strides = [1, 1]} : vector<27x76xf32> to vector<1x76xf32>
    %219 = vector.extract_strided_slice %216 {offsets = [17, 0], sizes = [6, 16], strides = [1, 1]} : vector<27x76xf32> to vector<6x16xf32>
    %220 = vector.extract_strided_slice %216 {offsets = [23, 0], sizes = [1, 16], strides = [1, 1]} : vector<27x76xf32> to vector<1x16xf32>
    %221 = vector.extract_strided_slice %216 {offsets = [24, 0], sizes = [1, 16], strides = [1, 1]} : vector<27x76xf32> to vector<1x16xf32>
    %222 = arith.truncf %215 : vector<16x16xf32> to vector<16x16xbf16>
    %223 = arith.truncf %217 : vector<16x76xf32> to vector<16x76xbf16>
    %cst_39 = arith.constant dense<0.000000e+00> : vector<16x76xf32>
    %224 = tpu.matmul %222, %223, %cst_39 {dimension_numbers = #tpu.dot_dimension_numbers<[1], [0], [0], [1], [0, 0, 1, 1], [], []>} : vector<16x16xbf16>, vector<16x76xbf16>, vector<16x76xf32> -> vector<16x76xf32>
    %225 = vector.broadcast %218 : vector<1x76xf32> to vector<16x76xf32>
    %226 = arith.addf %224, %225 : vector<16x76xf32>
    %227 = vector.extract_strided_slice %226 {offsets = [0, 0], sizes = [16, 8], strides = [1, 1]} : vector<16x76xf32> to vector<16x8xf32>
    %228 = vector.extract_strided_slice %226 {offsets = [0, 16], sizes = [16, 8], strides = [1, 1]} : vector<16x76xf32> to vector<16x8xf32>
    %229 = vector.extract_strided_slice %226 {offsets = [0, 32], sizes = [16, 8], strides = [1, 1]} : vector<16x76xf32> to vector<16x8xf32>
    %230 = arith.truncf %227 : vector<16x8xf32> to vector<16x8xbf16>
    %231 = arith.truncf %228 : vector<16x8xf32> to vector<16x8xbf16>
    %232 = tpu.transpose %231, [1, 0] : vector<16x8xbf16> -> vector<8x16xbf16>
    %cst_40 = arith.constant dense<0.000000e+00> : vector<16x16xf32>
    %233 = tpu.matmul %230, %232, %cst_40 {dimension_numbers = #tpu.dot_dimension_numbers<[1], [0], [0], [1], [0, 0, 1, 1], [], []>} : vector<16x8xbf16>, vector<8x16xbf16>, vector<16x16xf32> -> vector<16x16xf32>
    %234 = vector.extract_strided_slice %226 {offsets = [0, 64], sizes = [16, 1], strides = [1, 1]} : vector<16x76xf32> to vector<16x1xf32>
    %235 = vector.broadcast %234 : vector<16x1xf32> to vector<16x16xf32>
    %236 = arith.mulf %235, %7 : vector<16x16xf32>
    %237 = arith.addf %233, %236 : vector<16x16xf32>
    %238 = vector.extract_strided_slice %226 {offsets = [0, 65], sizes = [16, 1], strides = [1, 1]} : vector<16x76xf32> to vector<16x1xf32>
    %239 = vector.broadcast %238 : vector<16x1xf32> to vector<16x16xf32>
    %240 = arith.mulf %239, %9 : vector<16x16xf32>
    %241 = arith.addf %237, %240 : vector<16x16xf32>
    %242 = vector.extract_strided_slice %226 {offsets = [0, 66], sizes = [16, 1], strides = [1, 1]} : vector<16x76xf32> to vector<16x1xf32>
    %243 = vector.broadcast %242 : vector<16x1xf32> to vector<16x16xf32>
    %244 = arith.mulf %243, %11 : vector<16x16xf32>
    %245 = arith.addf %241, %244 : vector<16x16xf32>
    %246 = vector.extract_strided_slice %226 {offsets = [0, 67], sizes = [16, 1], strides = [1, 1]} : vector<16x76xf32> to vector<16x1xf32>
    %247 = vector.broadcast %246 : vector<16x1xf32> to vector<16x16xf32>
    %248 = arith.mulf %247, %13 : vector<16x16xf32>
    %249 = arith.addf %245, %248 : vector<16x16xf32>
    %250 = vector.extract_strided_slice %226 {offsets = [0, 68], sizes = [16, 1], strides = [1, 1]} : vector<16x76xf32> to vector<16x1xf32>
    %251 = vector.broadcast %250 : vector<16x1xf32> to vector<16x16xf32>
    %252 = arith.mulf %251, %60 : vector<16x16xf32>
    %253 = arith.addf %249, %252 : vector<16x16xf32>
    %254 = vector.extract_strided_slice %226 {offsets = [0, 69], sizes = [16, 1], strides = [1, 1]} : vector<16x76xf32> to vector<16x1xf32>
    %255 = vector.broadcast %254 : vector<16x1xf32> to vector<16x16xf32>
    %256 = arith.mulf %255, %132 : vector<16x16xf32>
    %257 = arith.addf %253, %256 : vector<16x16xf32>
    %cst_41 = arith.constant 0.353553385 : f32
    %258 = vector.broadcast %cst_41 : f32 to vector<16x16xf32>
    %259 = arith.mulf %257, %258 : vector<16x16xf32>
    %260 = arith.addf %259, %3 : vector<16x16xf32>
    %cst_42 = arith.constant dense<0xFF800000> : vector<16xf32>
    %261 = vector.multi_reduction <maximumf>, %260, %cst_42 [1] : vector<16x16xf32> to vector<16xf32>
    %262 = vector.shape_cast %261 : vector<16xf32> to vector<16x1xf32>
    %263 = vector.broadcast %262 : vector<16x1xf32> to vector<16x16xf32>
    %264 = arith.subf %260, %263 : vector<16x16xf32>
    %265 = math.exp %264 : vector<16x16xf32>
    %cst_43 = arith.constant dense<0.000000e+00> : vector<16xf32>
    %266 = vector.multi_reduction <add>, %265, %cst_43 [1] : vector<16x16xf32> to vector<16xf32>
    %267 = vector.shape_cast %266 : vector<16xf32> to vector<16x1xf32>
    %268 = tpu.reciprocal %267 {approx = true} : vector<16x1xf32> -> vector<16x1xf32>
    %269 = vector.broadcast %268 : vector<16x1xf32> to vector<16x16xf32>
    %270 = arith.mulf %265, %269 : vector<16x16xf32>
    %271 = arith.truncf %270 : vector<16x16xf32> to vector<16x16xbf16>
    %272 = arith.truncf %229 : vector<16x8xf32> to vector<16x8xbf16>
    %cst_44 = arith.constant dense<0.000000e+00> : vector<16x8xf32>
    %273 = tpu.matmul %271, %272, %cst_44 {dimension_numbers = #tpu.dot_dimension_numbers<[1], [0], [0], [1], [0, 0, 1, 1], [], []>} : vector<16x16xbf16>, vector<16x8xbf16>, vector<16x8xf32> -> vector<16x8xf32>
    %274 = vector.extract_strided_slice %219 {offsets = [0, 0], sizes = [6, 8], strides = [1, 1]} : vector<6x16xf32> to vector<6x8xf32>
    %275 = arith.mulf %270, %7 : vector<16x16xf32>
    %cst_45 = arith.constant dense<0.000000e+00> : vector<16xf32>
    %276 = vector.multi_reduction <add>, %275, %cst_45 [1] : vector<16x16xf32> to vector<16xf32>
    %277 = vector.shape_cast %276 : vector<16xf32> to vector<16x1xf32>
    %278 = vector.extract_strided_slice %274 {offsets = [0, 0], sizes = [1, 8], strides = [1, 1]} : vector<6x8xf32> to vector<1x8xf32>
    %279 = vector.broadcast %277 : vector<16x1xf32> to vector<16x8xf32>
    %280 = vector.broadcast %278 : vector<1x8xf32> to vector<16x8xf32>
    %281 = arith.mulf %279, %280 : vector<16x8xf32>
    %282 = arith.addf %273, %281 : vector<16x8xf32>
    %283 = arith.mulf %270, %9 : vector<16x16xf32>
    %cst_46 = arith.constant dense<0.000000e+00> : vector<16xf32>
    %284 = vector.multi_reduction <add>, %283, %cst_46 [1] : vector<16x16xf32> to vector<16xf32>
    %285 = vector.shape_cast %284 : vector<16xf32> to vector<16x1xf32>
    %286 = vector.extract_strided_slice %274 {offsets = [1, 0], sizes = [1, 8], strides = [1, 1]} : vector<6x8xf32> to vector<1x8xf32>
    %287 = vector.broadcast %285 : vector<16x1xf32> to vector<16x8xf32>
    %288 = vector.broadcast %286 : vector<1x8xf32> to vector<16x8xf32>
    %289 = arith.mulf %287, %288 : vector<16x8xf32>
    %290 = arith.addf %282, %289 : vector<16x8xf32>
    %291 = arith.mulf %270, %11 : vector<16x16xf32>
    %cst_47 = arith.constant dense<0.000000e+00> : vector<16xf32>
    %292 = vector.multi_reduction <add>, %291, %cst_47 [1] : vector<16x16xf32> to vector<16xf32>
    %293 = vector.shape_cast %292 : vector<16xf32> to vector<16x1xf32>
    %294 = vector.extract_strided_slice %274 {offsets = [2, 0], sizes = [1, 8], strides = [1, 1]} : vector<6x8xf32> to vector<1x8xf32>
    %295 = vector.broadcast %293 : vector<16x1xf32> to vector<16x8xf32>
    %296 = vector.broadcast %294 : vector<1x8xf32> to vector<16x8xf32>
    %297 = arith.mulf %295, %296 : vector<16x8xf32>
    %298 = arith.addf %290, %297 : vector<16x8xf32>
    %299 = arith.mulf %270, %13 : vector<16x16xf32>
    %cst_48 = arith.constant dense<0.000000e+00> : vector<16xf32>
    %300 = vector.multi_reduction <add>, %299, %cst_48 [1] : vector<16x16xf32> to vector<16xf32>
    %301 = vector.shape_cast %300 : vector<16xf32> to vector<16x1xf32>
    %302 = vector.extract_strided_slice %274 {offsets = [3, 0], sizes = [1, 8], strides = [1, 1]} : vector<6x8xf32> to vector<1x8xf32>
    %303 = vector.broadcast %301 : vector<16x1xf32> to vector<16x8xf32>
    %304 = vector.broadcast %302 : vector<1x8xf32> to vector<16x8xf32>
    %305 = arith.mulf %303, %304 : vector<16x8xf32>
    %306 = arith.addf %298, %305 : vector<16x8xf32>
    %307 = arith.mulf %270, %60 : vector<16x16xf32>
    %cst_49 = arith.constant dense<0.000000e+00> : vector<16xf32>
    %308 = vector.multi_reduction <add>, %307, %cst_49 [1] : vector<16x16xf32> to vector<16xf32>
    %309 = vector.shape_cast %308 : vector<16xf32> to vector<16x1xf32>
    %310 = vector.extract_strided_slice %274 {offsets = [4, 0], sizes = [1, 8], strides = [1, 1]} : vector<6x8xf32> to vector<1x8xf32>
    %311 = vector.broadcast %309 : vector<16x1xf32> to vector<16x8xf32>
    %312 = vector.broadcast %310 : vector<1x8xf32> to vector<16x8xf32>
    %313 = arith.mulf %311, %312 : vector<16x8xf32>
    %314 = arith.addf %306, %313 : vector<16x8xf32>
    %315 = arith.mulf %270, %132 : vector<16x16xf32>
    %cst_50 = arith.constant dense<0.000000e+00> : vector<16xf32>
    %316 = vector.multi_reduction <add>, %315, %cst_50 [1] : vector<16x16xf32> to vector<16xf32>
    %317 = vector.shape_cast %316 : vector<16xf32> to vector<16x1xf32>
    %318 = vector.extract_strided_slice %274 {offsets = [5, 0], sizes = [1, 8], strides = [1, 1]} : vector<6x8xf32> to vector<1x8xf32>
    %319 = vector.broadcast %317 : vector<16x1xf32> to vector<16x8xf32>
    %320 = vector.broadcast %318 : vector<1x8xf32> to vector<16x8xf32>
    %321 = arith.mulf %319, %320 : vector<16x8xf32>
    %322 = arith.addf %314, %321 : vector<16x8xf32>
    %323 = vector.extract_strided_slice %226 {offsets = [0, 8], sizes = [16, 8], strides = [1, 1]} : vector<16x76xf32> to vector<16x8xf32>
    %324 = vector.extract_strided_slice %226 {offsets = [0, 24], sizes = [16, 8], strides = [1, 1]} : vector<16x76xf32> to vector<16x8xf32>
    %325 = vector.extract_strided_slice %226 {offsets = [0, 40], sizes = [16, 8], strides = [1, 1]} : vector<16x76xf32> to vector<16x8xf32>
    %326 = arith.truncf %323 : vector<16x8xf32> to vector<16x8xbf16>
    %327 = arith.truncf %324 : vector<16x8xf32> to vector<16x8xbf16>
    %328 = tpu.transpose %327, [1, 0] : vector<16x8xbf16> -> vector<8x16xbf16>
    %cst_51 = arith.constant dense<0.000000e+00> : vector<16x16xf32>
    %329 = tpu.matmul %326, %328, %cst_51 {dimension_numbers = #tpu.dot_dimension_numbers<[1], [0], [0], [1], [0, 0, 1, 1], [], []>} : vector<16x8xbf16>, vector<8x16xbf16>, vector<16x16xf32> -> vector<16x16xf32>
    %330 = vector.extract_strided_slice %226 {offsets = [0, 70], sizes = [16, 1], strides = [1, 1]} : vector<16x76xf32> to vector<16x1xf32>
    %331 = vector.broadcast %330 : vector<16x1xf32> to vector<16x16xf32>
    %332 = arith.mulf %331, %7 : vector<16x16xf32>
    %333 = arith.addf %329, %332 : vector<16x16xf32>
    %334 = vector.extract_strided_slice %226 {offsets = [0, 71], sizes = [16, 1], strides = [1, 1]} : vector<16x76xf32> to vector<16x1xf32>
    %335 = vector.broadcast %334 : vector<16x1xf32> to vector<16x16xf32>
    %336 = arith.mulf %335, %9 : vector<16x16xf32>
    %337 = arith.addf %333, %336 : vector<16x16xf32>
    %338 = vector.extract_strided_slice %226 {offsets = [0, 72], sizes = [16, 1], strides = [1, 1]} : vector<16x76xf32> to vector<16x1xf32>
    %339 = vector.broadcast %338 : vector<16x1xf32> to vector<16x16xf32>
    %340 = arith.mulf %339, %11 : vector<16x16xf32>
    %341 = arith.addf %337, %340 : vector<16x16xf32>
    %342 = vector.extract_strided_slice %226 {offsets = [0, 73], sizes = [16, 1], strides = [1, 1]} : vector<16x76xf32> to vector<16x1xf32>
    %343 = vector.broadcast %342 : vector<16x1xf32> to vector<16x16xf32>
    %344 = arith.mulf %343, %13 : vector<16x16xf32>
    %345 = arith.addf %341, %344 : vector<16x16xf32>
    %346 = vector.extract_strided_slice %226 {offsets = [0, 74], sizes = [16, 1], strides = [1, 1]} : vector<16x76xf32> to vector<16x1xf32>
    %347 = vector.broadcast %346 : vector<16x1xf32> to vector<16x16xf32>
    %348 = arith.mulf %347, %60 : vector<16x16xf32>
    %349 = arith.addf %345, %348 : vector<16x16xf32>
    %350 = vector.extract_strided_slice %226 {offsets = [0, 75], sizes = [16, 1], strides = [1, 1]} : vector<16x76xf32> to vector<16x1xf32>
    %351 = vector.broadcast %350 : vector<16x1xf32> to vector<16x16xf32>
    %352 = arith.mulf %351, %132 : vector<16x16xf32>
    %353 = arith.addf %349, %352 : vector<16x16xf32>
    %cst_52 = arith.constant 0.353553385 : f32
    %354 = vector.broadcast %cst_52 : f32 to vector<16x16xf32>
    %355 = arith.mulf %353, %354 : vector<16x16xf32>
    %356 = arith.addf %355, %3 : vector<16x16xf32>
    %cst_53 = arith.constant dense<0xFF800000> : vector<16xf32>
    %357 = vector.multi_reduction <maximumf>, %356, %cst_53 [1] : vector<16x16xf32> to vector<16xf32>
    %358 = vector.shape_cast %357 : vector<16xf32> to vector<16x1xf32>
    %359 = vector.broadcast %358 : vector<16x1xf32> to vector<16x16xf32>
    %360 = arith.subf %356, %359 : vector<16x16xf32>
    %361 = math.exp %360 : vector<16x16xf32>
    %cst_54 = arith.constant dense<0.000000e+00> : vector<16xf32>
    %362 = vector.multi_reduction <add>, %361, %cst_54 [1] : vector<16x16xf32> to vector<16xf32>
    %363 = vector.shape_cast %362 : vector<16xf32> to vector<16x1xf32>
    %364 = tpu.reciprocal %363 {approx = true} : vector<16x1xf32> -> vector<16x1xf32>
    %365 = vector.broadcast %364 : vector<16x1xf32> to vector<16x16xf32>
    %366 = arith.mulf %361, %365 : vector<16x16xf32>
    %367 = arith.truncf %366 : vector<16x16xf32> to vector<16x16xbf16>
    %368 = arith.truncf %325 : vector<16x8xf32> to vector<16x8xbf16>
    %cst_55 = arith.constant dense<0.000000e+00> : vector<16x8xf32>
    %369 = tpu.matmul %367, %368, %cst_55 {dimension_numbers = #tpu.dot_dimension_numbers<[1], [0], [0], [1], [0, 0, 1, 1], [], []>} : vector<16x16xbf16>, vector<16x8xbf16>, vector<16x8xf32> -> vector<16x8xf32>
    %370 = vector.extract_strided_slice %219 {offsets = [0, 8], sizes = [6, 8], strides = [1, 1]} : vector<6x16xf32> to vector<6x8xf32>
    %371 = arith.mulf %366, %7 : vector<16x16xf32>
    %cst_56 = arith.constant dense<0.000000e+00> : vector<16xf32>
    %372 = vector.multi_reduction <add>, %371, %cst_56 [1] : vector<16x16xf32> to vector<16xf32>
    %373 = vector.shape_cast %372 : vector<16xf32> to vector<16x1xf32>
    %374 = vector.extract_strided_slice %370 {offsets = [0, 0], sizes = [1, 8], strides = [1, 1]} : vector<6x8xf32> to vector<1x8xf32>
    %375 = vector.broadcast %373 : vector<16x1xf32> to vector<16x8xf32>
    %376 = vector.broadcast %374 : vector<1x8xf32> to vector<16x8xf32>
    %377 = arith.mulf %375, %376 : vector<16x8xf32>
    %378 = arith.addf %369, %377 : vector<16x8xf32>
    %379 = arith.mulf %366, %9 : vector<16x16xf32>
    %cst_57 = arith.constant dense<0.000000e+00> : vector<16xf32>
    %380 = vector.multi_reduction <add>, %379, %cst_57 [1] : vector<16x16xf32> to vector<16xf32>
    %381 = vector.shape_cast %380 : vector<16xf32> to vector<16x1xf32>
    %382 = vector.extract_strided_slice %370 {offsets = [1, 0], sizes = [1, 8], strides = [1, 1]} : vector<6x8xf32> to vector<1x8xf32>
    %383 = vector.broadcast %381 : vector<16x1xf32> to vector<16x8xf32>
    %384 = vector.broadcast %382 : vector<1x8xf32> to vector<16x8xf32>
    %385 = arith.mulf %383, %384 : vector<16x8xf32>
    %386 = arith.addf %378, %385 : vector<16x8xf32>
    %387 = arith.mulf %366, %11 : vector<16x16xf32>
    %cst_58 = arith.constant dense<0.000000e+00> : vector<16xf32>
    %388 = vector.multi_reduction <add>, %387, %cst_58 [1] : vector<16x16xf32> to vector<16xf32>
    %389 = vector.shape_cast %388 : vector<16xf32> to vector<16x1xf32>
    %390 = vector.extract_strided_slice %370 {offsets = [2, 0], sizes = [1, 8], strides = [1, 1]} : vector<6x8xf32> to vector<1x8xf32>
    %391 = vector.broadcast %389 : vector<16x1xf32> to vector<16x8xf32>
    %392 = vector.broadcast %390 : vector<1x8xf32> to vector<16x8xf32>
    %393 = arith.mulf %391, %392 : vector<16x8xf32>
    %394 = arith.addf %386, %393 : vector<16x8xf32>
    %395 = arith.mulf %366, %13 : vector<16x16xf32>
    %cst_59 = arith.constant dense<0.000000e+00> : vector<16xf32>
    %396 = vector.multi_reduction <add>, %395, %cst_59 [1] : vector<16x16xf32> to vector<16xf32>
    %397 = vector.shape_cast %396 : vector<16xf32> to vector<16x1xf32>
    %398 = vector.extract_strided_slice %370 {offsets = [3, 0], sizes = [1, 8], strides = [1, 1]} : vector<6x8xf32> to vector<1x8xf32>
    %399 = vector.broadcast %397 : vector<16x1xf32> to vector<16x8xf32>
    %400 = vector.broadcast %398 : vector<1x8xf32> to vector<16x8xf32>
    %401 = arith.mulf %399, %400 : vector<16x8xf32>
    %402 = arith.addf %394, %401 : vector<16x8xf32>
    %403 = arith.mulf %366, %60 : vector<16x16xf32>
    %cst_60 = arith.constant dense<0.000000e+00> : vector<16xf32>
    %404 = vector.multi_reduction <add>, %403, %cst_60 [1] : vector<16x16xf32> to vector<16xf32>
    %405 = vector.shape_cast %404 : vector<16xf32> to vector<16x1xf32>
    %406 = vector.extract_strided_slice %370 {offsets = [4, 0], sizes = [1, 8], strides = [1, 1]} : vector<6x8xf32> to vector<1x8xf32>
    %407 = vector.broadcast %405 : vector<16x1xf32> to vector<16x8xf32>
    %408 = vector.broadcast %406 : vector<1x8xf32> to vector<16x8xf32>
    %409 = arith.mulf %407, %408 : vector<16x8xf32>
    %410 = arith.addf %402, %409 : vector<16x8xf32>
    %411 = arith.mulf %366, %132 : vector<16x16xf32>
    %cst_61 = arith.constant dense<0.000000e+00> : vector<16xf32>
    %412 = vector.multi_reduction <add>, %411, %cst_61 [1] : vector<16x16xf32> to vector<16xf32>
    %413 = vector.shape_cast %412 : vector<16xf32> to vector<16x1xf32>
    %414 = vector.extract_strided_slice %370 {offsets = [5, 0], sizes = [1, 8], strides = [1, 1]} : vector<6x8xf32> to vector<1x8xf32>
    %415 = vector.broadcast %413 : vector<16x1xf32> to vector<16x8xf32>
    %416 = vector.broadcast %414 : vector<1x8xf32> to vector<16x8xf32>
    %417 = arith.mulf %415, %416 : vector<16x8xf32>
    %418 = arith.addf %410, %417 : vector<16x8xf32>
    %419 = tpu.concatenate %322, %418 in 1 : vector<16x8xf32>, vector<16x8xf32> -> vector<16x16xf32>
    %420 = vector.extract_strided_slice %226 {offsets = [0, 48], sizes = [16, 16], strides = [1, 1]} : vector<16x76xf32> to vector<16x16xf32>
    %421 = vector.broadcast %220 : vector<1x16xf32> to vector<16x16xf32>
    %422 = arith.mulf %419, %421 : vector<16x16xf32>
    %423 = vector.broadcast %221 : vector<1x16xf32> to vector<16x16xf32>
    %424 = arith.mulf %420, %423 : vector<16x16xf32>
    %425 = arith.addf %422, %424 : vector<16x16xf32>
    %cst_62 = arith.constant dense<0.000000e+00> : vector<16xf32>
    %426 = vector.multi_reduction <add>, %425, %cst_62 [1] : vector<16x16xf32> to vector<16xf32>
    %427 = vector.shape_cast %426 : vector<16xf32> to vector<16x1xf32>
    %428 = arith.negf %427 : vector<16x1xf32>
    %429 = math.exp %428 : vector<16x1xf32>
    %cst_63 = arith.constant 1.000000e+00 : f32
    %430 = vector.broadcast %cst_63 : f32 to vector<16x1xf32>
    %431 = arith.addf %430, %429 : vector<16x1xf32>
    %432 = arith.divf %430, %431 : vector<16x1xf32>
    %433 = vector.broadcast %432 : vector<16x1xf32> to vector<16x16xf32>
    %434 = arith.mulf %433, %420 : vector<16x16xf32>
    %cst_64 = arith.constant 1.000000e+00 : f32
    %435 = vector.broadcast %cst_64 : f32 to vector<16x1xf32>
    %436 = arith.subf %435, %432 : vector<16x1xf32>
    %437 = vector.broadcast %436 : vector<16x1xf32> to vector<16x16xf32>
    %438 = arith.mulf %437, %419 : vector<16x16xf32>
    %439 = arith.addf %434, %438 : vector<16x16xf32>
    %440 = vector.extract_strided_slice %216 {offsets = [25, 0], sizes = [1, 16], strides = [1, 1]} : vector<27x76xf32> to vector<1x16xf32>
    %441 = vector.extract_strided_slice %216 {offsets = [26, 0], sizes = [1, 16], strides = [1, 1]} : vector<27x76xf32> to vector<1x16xf32>
    %cst_65 = arith.constant dense<0.000000e+00> : vector<16xf32>
    %442 = vector.multi_reduction <add>, %439, %cst_65 [1] : vector<16x16xf32> to vector<16xf32>
    %443 = vector.shape_cast %442 : vector<16xf32> to vector<16x1xf32>
    %cst_66 = arith.constant 1.600000e+01 : f32
    %444 = vector.broadcast %cst_66 : f32 to vector<16x1xf32>
    %445 = arith.divf %443, %444 : vector<16x1xf32>
    %446 = vector.broadcast %445 : vector<16x1xf32> to vector<16x16xf32>
    %447 = arith.subf %439, %446 : vector<16x16xf32>
    %448 = vector.broadcast %445 : vector<16x1xf32> to vector<16x16xf32>
    %449 = arith.subf %439, %448 : vector<16x16xf32>
    %450 = arith.mulf %447, %449 : vector<16x16xf32>
    %cst_67 = arith.constant dense<0.000000e+00> : vector<16xf32>
    %451 = vector.multi_reduction <add>, %450, %cst_67 [1] : vector<16x16xf32> to vector<16xf32>
    %452 = vector.shape_cast %451 : vector<16xf32> to vector<16x1xf32>
    %cst_68 = arith.constant 1.600000e+01 : f32
    %453 = vector.broadcast %cst_68 : f32 to vector<16x1xf32>
    %454 = arith.divf %452, %453 : vector<16x1xf32>
    %455 = vector.broadcast %445 : vector<16x1xf32> to vector<16x16xf32>
    %456 = arith.subf %439, %455 : vector<16x16xf32>
    %cst_69 = arith.constant 9.99999974E-6 : f32
    %457 = vector.broadcast %cst_69 : f32 to vector<16x1xf32>
    %458 = arith.addf %454, %457 : vector<16x1xf32>
    %459 = math.rsqrt %458 : vector<16x1xf32>
    %460 = vector.broadcast %459 : vector<16x1xf32> to vector<16x16xf32>
    %461 = arith.mulf %456, %460 : vector<16x16xf32>
    %462 = vector.broadcast %440 : vector<1x16xf32> to vector<16x16xf32>
    %463 = arith.mulf %461, %462 : vector<16x16xf32>
    %464 = vector.broadcast %441 : vector<1x16xf32> to vector<16x16xf32>
    %465 = arith.addf %463, %464 : vector<16x16xf32>
    %c0_70 = arith.constant 0 : index
    %c0_71 = arith.constant 0 : index
    %466 = vector.load %arg6[%c0_70, %c0_71] : memref<25x19xf32, #tpu.memory_space<vmem>>, vector<25x19xf32>
    %467 = vector.extract_strided_slice %466 {offsets = [0, 0], sizes = [16, 19], strides = [1, 1]} : vector<25x19xf32> to vector<16x19xf32>
    %468 = vector.extract_strided_slice %466 {offsets = [16, 0], sizes = [1, 19], strides = [1, 1]} : vector<25x19xf32> to vector<1x19xf32>
    %469 = vector.extract_strided_slice %466 {offsets = [17, 0], sizes = [6, 2], strides = [1, 1]} : vector<25x19xf32> to vector<6x2xf32>
    %470 = vector.extract_strided_slice %466 {offsets = [23, 0], sizes = [1, 1], strides = [1, 1]} : vector<25x19xf32> to vector<1x1xf32>
    %471 = vector.extract_strided_slice %466 {offsets = [24, 0], sizes = [1, 1], strides = [1, 1]} : vector<25x19xf32> to vector<1x1xf32>
    %472 = arith.truncf %465 : vector<16x16xf32> to vector<16x16xbf16>
    %473 = arith.truncf %467 : vector<16x19xf32> to vector<16x19xbf16>
    %cst_72 = arith.constant dense<0.000000e+00> : vector<16x19xf32>
    %474 = tpu.matmul %472, %473, %cst_72 {dimension_numbers = #tpu.dot_dimension_numbers<[1], [0], [0], [1], [0, 0, 1, 1], [], []>} : vector<16x16xbf16>, vector<16x19xbf16>, vector<16x19xf32> -> vector<16x19xf32>
    %475 = vector.broadcast %468 : vector<1x19xf32> to vector<16x19xf32>
    %476 = arith.addf %474, %475 : vector<16x19xf32>
    %477 = vector.extract_strided_slice %476 {offsets = [0, 0], sizes = [16, 1], strides = [1, 1]} : vector<16x19xf32> to vector<16x1xf32>
    %478 = vector.extract_strided_slice %476 {offsets = [0, 2], sizes = [16, 1], strides = [1, 1]} : vector<16x19xf32> to vector<16x1xf32>
    %479 = vector.extract_strided_slice %476 {offsets = [0, 4], sizes = [16, 1], strides = [1, 1]} : vector<16x19xf32> to vector<16x1xf32>
    %480 = arith.truncf %477 : vector<16x1xf32> to vector<16x1xbf16>
    %481 = arith.truncf %478 : vector<16x1xf32> to vector<16x1xbf16>
    %482 = tpu.transpose %481, [1, 0] : vector<16x1xbf16> -> vector<1x16xbf16>
    %cst_73 = arith.constant dense<0.000000e+00> : vector<16x16xf32>
    %483 = tpu.matmul %480, %482, %cst_73 {dimension_numbers = #tpu.dot_dimension_numbers<[1], [0], [0], [1], [0, 0, 1, 1], [], []>} : vector<16x1xbf16>, vector<1x16xbf16>, vector<16x16xf32> -> vector<16x16xf32>
    %484 = vector.extract_strided_slice %476 {offsets = [0, 7], sizes = [16, 1], strides = [1, 1]} : vector<16x19xf32> to vector<16x1xf32>
    %485 = vector.broadcast %484 : vector<16x1xf32> to vector<16x16xf32>
    %486 = arith.mulf %485, %7 : vector<16x16xf32>
    %487 = arith.addf %483, %486 : vector<16x16xf32>
    %488 = vector.extract_strided_slice %476 {offsets = [0, 8], sizes = [16, 1], strides = [1, 1]} : vector<16x19xf32> to vector<16x1xf32>
    %489 = vector.broadcast %488 : vector<16x1xf32> to vector<16x16xf32>
    %490 = arith.mulf %489, %9 : vector<16x16xf32>
    %491 = arith.addf %487, %490 : vector<16x16xf32>
    %492 = vector.extract_strided_slice %476 {offsets = [0, 9], sizes = [16, 1], strides = [1, 1]} : vector<16x19xf32> to vector<16x1xf32>
    %493 = vector.broadcast %492 : vector<16x1xf32> to vector<16x16xf32>
    %494 = arith.mulf %493, %11 : vector<16x16xf32>
    %495 = arith.addf %491, %494 : vector<16x16xf32>
    %496 = vector.extract_strided_slice %476 {offsets = [0, 10], sizes = [16, 1], strides = [1, 1]} : vector<16x19xf32> to vector<16x1xf32>
    %497 = vector.broadcast %496 : vector<16x1xf32> to vector<16x16xf32>
    %498 = arith.mulf %497, %13 : vector<16x16xf32>
    %499 = arith.addf %495, %498 : vector<16x16xf32>
    %500 = vector.extract_strided_slice %476 {offsets = [0, 11], sizes = [16, 1], strides = [1, 1]} : vector<16x19xf32> to vector<16x1xf32>
    %501 = vector.broadcast %500 : vector<16x1xf32> to vector<16x16xf32>
    %502 = arith.mulf %501, %270 : vector<16x16xf32>
    %503 = arith.addf %499, %502 : vector<16x16xf32>
    %504 = vector.extract_strided_slice %476 {offsets = [0, 12], sizes = [16, 1], strides = [1, 1]} : vector<16x19xf32> to vector<16x1xf32>
    %505 = vector.broadcast %504 : vector<16x1xf32> to vector<16x16xf32>
    %506 = arith.mulf %505, %366 : vector<16x16xf32>
    %507 = arith.addf %503, %506 : vector<16x16xf32>
    %cst_74 = arith.constant 1.000000e+00 : f32
    %508 = vector.broadcast %cst_74 : f32 to vector<16x16xf32>
    %509 = arith.mulf %507, %508 : vector<16x16xf32>
    %510 = arith.addf %509, %3 : vector<16x16xf32>
    %cst_75 = arith.constant dense<0xFF800000> : vector<16xf32>
    %511 = vector.multi_reduction <maximumf>, %510, %cst_75 [1] : vector<16x16xf32> to vector<16xf32>
    %512 = vector.shape_cast %511 : vector<16xf32> to vector<16x1xf32>
    %513 = vector.broadcast %512 : vector<16x1xf32> to vector<16x16xf32>
    %514 = arith.subf %510, %513 : vector<16x16xf32>
    %515 = math.exp %514 : vector<16x16xf32>
    %cst_76 = arith.constant dense<0.000000e+00> : vector<16xf32>
    %516 = vector.multi_reduction <add>, %515, %cst_76 [1] : vector<16x16xf32> to vector<16xf32>
    %517 = vector.shape_cast %516 : vector<16xf32> to vector<16x1xf32>
    %518 = tpu.reciprocal %517 {approx = true} : vector<16x1xf32> -> vector<16x1xf32>
    %519 = vector.broadcast %518 : vector<16x1xf32> to vector<16x16xf32>
    %520 = arith.mulf %515, %519 : vector<16x16xf32>
    %521 = arith.truncf %520 : vector<16x16xf32> to vector<16x16xbf16>
    %522 = arith.truncf %479 : vector<16x1xf32> to vector<16x1xbf16>
    %cst_77 = arith.constant dense<0.000000e+00> : vector<16x1xf32>
    %523 = tpu.matmul %521, %522, %cst_77 {dimension_numbers = #tpu.dot_dimension_numbers<[1], [0], [0], [1], [0, 0, 1, 1], [], []>} : vector<16x16xbf16>, vector<16x1xbf16>, vector<16x1xf32> -> vector<16x1xf32>
    %524 = vector.extract_strided_slice %469 {offsets = [0, 0], sizes = [6, 1], strides = [1, 1]} : vector<6x2xf32> to vector<6x1xf32>
    %525 = arith.mulf %520, %7 : vector<16x16xf32>
    %cst_78 = arith.constant dense<0.000000e+00> : vector<16xf32>
    %526 = vector.multi_reduction <add>, %525, %cst_78 [1] : vector<16x16xf32> to vector<16xf32>
    %527 = vector.shape_cast %526 : vector<16xf32> to vector<16x1xf32>
    %528 = vector.extract_strided_slice %524 {offsets = [0, 0], sizes = [1, 1], strides = [1, 1]} : vector<6x1xf32> to vector<1x1xf32>
    %529 = vector.broadcast %528 : vector<1x1xf32> to vector<16x1xf32>
    %530 = arith.mulf %527, %529 : vector<16x1xf32>
    %531 = arith.addf %523, %530 : vector<16x1xf32>
    %532 = arith.mulf %520, %9 : vector<16x16xf32>
    %cst_79 = arith.constant dense<0.000000e+00> : vector<16xf32>
    %533 = vector.multi_reduction <add>, %532, %cst_79 [1] : vector<16x16xf32> to vector<16xf32>
    %534 = vector.shape_cast %533 : vector<16xf32> to vector<16x1xf32>
    %535 = vector.extract_strided_slice %524 {offsets = [1, 0], sizes = [1, 1], strides = [1, 1]} : vector<6x1xf32> to vector<1x1xf32>
    %536 = vector.broadcast %535 : vector<1x1xf32> to vector<16x1xf32>
    %537 = arith.mulf %534, %536 : vector<16x1xf32>
    %538 = arith.addf %531, %537 : vector<16x1xf32>
    %539 = arith.mulf %520, %11 : vector<16x16xf32>
    %cst_80 = arith.constant dense<0.000000e+00> : vector<16xf32>
    %540 = vector.multi_reduction <add>, %539, %cst_80 [1] : vector<16x16xf32> to vector<16xf32>
    %541 = vector.shape_cast %540 : vector<16xf32> to vector<16x1xf32>
    %542 = vector.extract_strided_slice %524 {offsets = [2, 0], sizes = [1, 1], strides = [1, 1]} : vector<6x1xf32> to vector<1x1xf32>
    %543 = vector.broadcast %542 : vector<1x1xf32> to vector<16x1xf32>
    %544 = arith.mulf %541, %543 : vector<16x1xf32>
    %545 = arith.addf %538, %544 : vector<16x1xf32>
    %546 = arith.mulf %520, %13 : vector<16x16xf32>
    %cst_81 = arith.constant dense<0.000000e+00> : vector<16xf32>
    %547 = vector.multi_reduction <add>, %546, %cst_81 [1] : vector<16x16xf32> to vector<16xf32>
    %548 = vector.shape_cast %547 : vector<16xf32> to vector<16x1xf32>
    %549 = vector.extract_strided_slice %524 {offsets = [3, 0], sizes = [1, 1], strides = [1, 1]} : vector<6x1xf32> to vector<1x1xf32>
    %550 = vector.broadcast %549 : vector<1x1xf32> to vector<16x1xf32>
    %551 = arith.mulf %548, %550 : vector<16x1xf32>
    %552 = arith.addf %545, %551 : vector<16x1xf32>
    %553 = arith.mulf %520, %270 : vector<16x16xf32>
    %cst_82 = arith.constant dense<0.000000e+00> : vector<16xf32>
    %554 = vector.multi_reduction <add>, %553, %cst_82 [1] : vector<16x16xf32> to vector<16xf32>
    %555 = vector.shape_cast %554 : vector<16xf32> to vector<16x1xf32>
    %556 = vector.extract_strided_slice %524 {offsets = [4, 0], sizes = [1, 1], strides = [1, 1]} : vector<6x1xf32> to vector<1x1xf32>
    %557 = vector.broadcast %556 : vector<1x1xf32> to vector<16x1xf32>
    %558 = arith.mulf %555, %557 : vector<16x1xf32>
    %559 = arith.addf %552, %558 : vector<16x1xf32>
    %560 = arith.mulf %520, %366 : vector<16x16xf32>
    %cst_83 = arith.constant dense<0.000000e+00> : vector<16xf32>
    %561 = vector.multi_reduction <add>, %560, %cst_83 [1] : vector<16x16xf32> to vector<16xf32>
    %562 = vector.shape_cast %561 : vector<16xf32> to vector<16x1xf32>
    %563 = vector.extract_strided_slice %524 {offsets = [5, 0], sizes = [1, 1], strides = [1, 1]} : vector<6x1xf32> to vector<1x1xf32>
    %564 = vector.broadcast %563 : vector<1x1xf32> to vector<16x1xf32>
    %565 = arith.mulf %562, %564 : vector<16x1xf32>
    %566 = arith.addf %559, %565 : vector<16x1xf32>
    %567 = vector.extract_strided_slice %476 {offsets = [0, 1], sizes = [16, 1], strides = [1, 1]} : vector<16x19xf32> to vector<16x1xf32>
    %568 = vector.extract_strided_slice %476 {offsets = [0, 3], sizes = [16, 1], strides = [1, 1]} : vector<16x19xf32> to vector<16x1xf32>
    %569 = vector.extract_strided_slice %476 {offsets = [0, 5], sizes = [16, 1], strides = [1, 1]} : vector<16x19xf32> to vector<16x1xf32>
    %570 = arith.truncf %567 : vector<16x1xf32> to vector<16x1xbf16>
    %571 = arith.truncf %568 : vector<16x1xf32> to vector<16x1xbf16>
    %572 = tpu.transpose %571, [1, 0] : vector<16x1xbf16> -> vector<1x16xbf16>
    %cst_84 = arith.constant dense<0.000000e+00> : vector<16x16xf32>
    %573 = tpu.matmul %570, %572, %cst_84 {dimension_numbers = #tpu.dot_dimension_numbers<[1], [0], [0], [1], [0, 0, 1, 1], [], []>} : vector<16x1xbf16>, vector<1x16xbf16>, vector<16x16xf32> -> vector<16x16xf32>
    %574 = vector.extract_strided_slice %476 {offsets = [0, 13], sizes = [16, 1], strides = [1, 1]} : vector<16x19xf32> to vector<16x1xf32>
    %575 = vector.broadcast %574 : vector<16x1xf32> to vector<16x16xf32>
    %576 = arith.mulf %575, %7 : vector<16x16xf32>
    %577 = arith.addf %573, %576 : vector<16x16xf32>
    %578 = vector.extract_strided_slice %476 {offsets = [0, 14], sizes = [16, 1], strides = [1, 1]} : vector<16x19xf32> to vector<16x1xf32>
    %579 = vector.broadcast %578 : vector<16x1xf32> to vector<16x16xf32>
    %580 = arith.mulf %579, %9 : vector<16x16xf32>
    %581 = arith.addf %577, %580 : vector<16x16xf32>
    %582 = vector.extract_strided_slice %476 {offsets = [0, 15], sizes = [16, 1], strides = [1, 1]} : vector<16x19xf32> to vector<16x1xf32>
    %583 = vector.broadcast %582 : vector<16x1xf32> to vector<16x16xf32>
    %584 = arith.mulf %583, %11 : vector<16x16xf32>
    %585 = arith.addf %581, %584 : vector<16x16xf32>
    %586 = vector.extract_strided_slice %476 {offsets = [0, 16], sizes = [16, 1], strides = [1, 1]} : vector<16x19xf32> to vector<16x1xf32>
    %587 = vector.broadcast %586 : vector<16x1xf32> to vector<16x16xf32>
    %588 = arith.mulf %587, %13 : vector<16x16xf32>
    %589 = arith.addf %585, %588 : vector<16x16xf32>
    %590 = vector.extract_strided_slice %476 {offsets = [0, 17], sizes = [16, 1], strides = [1, 1]} : vector<16x19xf32> to vector<16x1xf32>
    %591 = vector.broadcast %590 : vector<16x1xf32> to vector<16x16xf32>
    %592 = arith.mulf %591, %270 : vector<16x16xf32>
    %593 = arith.addf %589, %592 : vector<16x16xf32>
    %594 = vector.extract_strided_slice %476 {offsets = [0, 18], sizes = [16, 1], strides = [1, 1]} : vector<16x19xf32> to vector<16x1xf32>
    %595 = vector.broadcast %594 : vector<16x1xf32> to vector<16x16xf32>
    %596 = arith.mulf %595, %366 : vector<16x16xf32>
    %597 = arith.addf %593, %596 : vector<16x16xf32>
    %cst_85 = arith.constant 1.000000e+00 : f32
    %598 = vector.broadcast %cst_85 : f32 to vector<16x16xf32>
    %599 = arith.mulf %597, %598 : vector<16x16xf32>
    %600 = arith.addf %599, %3 : vector<16x16xf32>
    %cst_86 = arith.constant dense<0xFF800000> : vector<16xf32>
    %601 = vector.multi_reduction <maximumf>, %600, %cst_86 [1] : vector<16x16xf32> to vector<16xf32>
    %602 = vector.shape_cast %601 : vector<16xf32> to vector<16x1xf32>
    %603 = vector.broadcast %602 : vector<16x1xf32> to vector<16x16xf32>
    %604 = arith.subf %600, %603 : vector<16x16xf32>
    %605 = math.exp %604 : vector<16x16xf32>
    %cst_87 = arith.constant dense<0.000000e+00> : vector<16xf32>
    %606 = vector.multi_reduction <add>, %605, %cst_87 [1] : vector<16x16xf32> to vector<16xf32>
    %607 = vector.shape_cast %606 : vector<16xf32> to vector<16x1xf32>
    %608 = tpu.reciprocal %607 {approx = true} : vector<16x1xf32> -> vector<16x1xf32>
    %609 = vector.broadcast %608 : vector<16x1xf32> to vector<16x16xf32>
    %610 = arith.mulf %605, %609 : vector<16x16xf32>
    %611 = arith.truncf %610 : vector<16x16xf32> to vector<16x16xbf16>
    %612 = arith.truncf %569 : vector<16x1xf32> to vector<16x1xbf16>
    %cst_88 = arith.constant dense<0.000000e+00> : vector<16x1xf32>
    %613 = tpu.matmul %611, %612, %cst_88 {dimension_numbers = #tpu.dot_dimension_numbers<[1], [0], [0], [1], [0, 0, 1, 1], [], []>} : vector<16x16xbf16>, vector<16x1xbf16>, vector<16x1xf32> -> vector<16x1xf32>
    %614 = vector.extract_strided_slice %469 {offsets = [0, 1], sizes = [6, 1], strides = [1, 1]} : vector<6x2xf32> to vector<6x1xf32>
    %615 = arith.mulf %610, %7 : vector<16x16xf32>
    %cst_89 = arith.constant dense<0.000000e+00> : vector<16xf32>
    %616 = vector.multi_reduction <add>, %615, %cst_89 [1] : vector<16x16xf32> to vector<16xf32>
    %617 = vector.shape_cast %616 : vector<16xf32> to vector<16x1xf32>
    %618 = vector.extract_strided_slice %614 {offsets = [0, 0], sizes = [1, 1], strides = [1, 1]} : vector<6x1xf32> to vector<1x1xf32>
    %619 = vector.broadcast %618 : vector<1x1xf32> to vector<16x1xf32>
    %620 = arith.mulf %617, %619 : vector<16x1xf32>
    %621 = arith.addf %613, %620 : vector<16x1xf32>
    %622 = arith.mulf %610, %9 : vector<16x16xf32>
    %cst_90 = arith.constant dense<0.000000e+00> : vector<16xf32>
    %623 = vector.multi_reduction <add>, %622, %cst_90 [1] : vector<16x16xf32> to vector<16xf32>
    %624 = vector.shape_cast %623 : vector<16xf32> to vector<16x1xf32>
    %625 = vector.extract_strided_slice %614 {offsets = [1, 0], sizes = [1, 1], strides = [1, 1]} : vector<6x1xf32> to vector<1x1xf32>
    %626 = vector.broadcast %625 : vector<1x1xf32> to vector<16x1xf32>
    %627 = arith.mulf %624, %626 : vector<16x1xf32>
    %628 = arith.addf %621, %627 : vector<16x1xf32>
    %629 = arith.mulf %610, %11 : vector<16x16xf32>
    %cst_91 = arith.constant dense<0.000000e+00> : vector<16xf32>
    %630 = vector.multi_reduction <add>, %629, %cst_91 [1] : vector<16x16xf32> to vector<16xf32>
    %631 = vector.shape_cast %630 : vector<16xf32> to vector<16x1xf32>
    %632 = vector.extract_strided_slice %614 {offsets = [2, 0], sizes = [1, 1], strides = [1, 1]} : vector<6x1xf32> to vector<1x1xf32>
    %633 = vector.broadcast %632 : vector<1x1xf32> to vector<16x1xf32>
    %634 = arith.mulf %631, %633 : vector<16x1xf32>
    %635 = arith.addf %628, %634 : vector<16x1xf32>
    %636 = arith.mulf %610, %13 : vector<16x16xf32>
    %cst_92 = arith.constant dense<0.000000e+00> : vector<16xf32>
    %637 = vector.multi_reduction <add>, %636, %cst_92 [1] : vector<16x16xf32> to vector<16xf32>
    %638 = vector.shape_cast %637 : vector<16xf32> to vector<16x1xf32>
    %639 = vector.extract_strided_slice %614 {offsets = [3, 0], sizes = [1, 1], strides = [1, 1]} : vector<6x1xf32> to vector<1x1xf32>
    %640 = vector.broadcast %639 : vector<1x1xf32> to vector<16x1xf32>
    %641 = arith.mulf %638, %640 : vector<16x1xf32>
    %642 = arith.addf %635, %641 : vector<16x1xf32>
    %643 = arith.mulf %610, %270 : vector<16x16xf32>
    %cst_93 = arith.constant dense<0.000000e+00> : vector<16xf32>
    %644 = vector.multi_reduction <add>, %643, %cst_93 [1] : vector<16x16xf32> to vector<16xf32>
    %645 = vector.shape_cast %644 : vector<16xf32> to vector<16x1xf32>
    %646 = vector.extract_strided_slice %614 {offsets = [4, 0], sizes = [1, 1], strides = [1, 1]} : vector<6x1xf32> to vector<1x1xf32>
    %647 = vector.broadcast %646 : vector<1x1xf32> to vector<16x1xf32>
    %648 = arith.mulf %645, %647 : vector<16x1xf32>
    %649 = arith.addf %642, %648 : vector<16x1xf32>
    %650 = arith.mulf %610, %366 : vector<16x16xf32>
    %cst_94 = arith.constant dense<0.000000e+00> : vector<16xf32>
    %651 = vector.multi_reduction <add>, %650, %cst_94 [1] : vector<16x16xf32> to vector<16xf32>
    %652 = vector.shape_cast %651 : vector<16xf32> to vector<16x1xf32>
    %653 = vector.extract_strided_slice %614 {offsets = [5, 0], sizes = [1, 1], strides = [1, 1]} : vector<6x1xf32> to vector<1x1xf32>
    %654 = vector.broadcast %653 : vector<1x1xf32> to vector<16x1xf32>
    %655 = arith.mulf %652, %654 : vector<16x1xf32>
    %656 = arith.addf %649, %655 : vector<16x1xf32>
    %657 = arith.addf %566, %656 : vector<16x1xf32>
    %cst_95 = arith.constant 5.000000e-01 : f32
    %658 = vector.broadcast %cst_95 : f32 to vector<16x1xf32>
    %659 = arith.mulf %657, %658 : vector<16x1xf32>
    %660 = vector.extract_strided_slice %476 {offsets = [0, 6], sizes = [16, 1], strides = [1, 1]} : vector<16x19xf32> to vector<16x1xf32>
    %661 = vector.broadcast %470 : vector<1x1xf32> to vector<16x1xf32>
    %662 = arith.mulf %659, %661 : vector<16x1xf32>
    %663 = vector.broadcast %471 : vector<1x1xf32> to vector<16x1xf32>
    %664 = arith.mulf %660, %663 : vector<16x1xf32>
    %665 = arith.addf %662, %664 : vector<16x1xf32>
    %cst_96 = arith.constant dense<0.000000e+00> : vector<16xf32>
    %666 = vector.multi_reduction <add>, %665, %cst_96 [1] : vector<16x1xf32> to vector<16xf32>
    %667 = vector.shape_cast %666 : vector<16xf32> to vector<16x1xf32>
    %668 = arith.negf %667 : vector<16x1xf32>
    %669 = math.exp %668 : vector<16x1xf32>
    %cst_97 = arith.constant 1.000000e+00 : f32
    %670 = vector.broadcast %cst_97 : f32 to vector<16x1xf32>
    %671 = arith.addf %670, %669 : vector<16x1xf32>
    %672 = arith.divf %670, %671 : vector<16x1xf32>
    %673 = arith.mulf %672, %660 : vector<16x1xf32>
    %cst_98 = arith.constant 1.000000e+00 : f32
    %674 = vector.broadcast %cst_98 : f32 to vector<16x1xf32>
    %675 = arith.subf %674, %672 : vector<16x1xf32>
    %676 = arith.mulf %675, %659 : vector<16x1xf32>
    %677 = arith.addf %673, %676 : vector<16x1xf32>
    %678 = arith.negf %677 : vector<16x1xf32>
    %679 = math.exp %678 : vector<16x1xf32>
    %cst_99 = arith.constant 1.000000e+00 : f32
    %680 = vector.broadcast %cst_99 : f32 to vector<16x1xf32>
    %681 = arith.addf %680, %679 : vector<16x1xf32>
    %682 = arith.divf %680, %681 : vector<16x1xf32>
    %c0_100 = arith.constant 0 : index
    %c0_101 = arith.constant 0 : index
    %c0_102 = arith.constant 0 : index
    %683 = vector.load %arg7[%c0_100, %c0_101, %c0_102] : memref<1x16x1xf32, #tpu.memory_space<vmem>>, vector<1x16x1xf32>
    %684 = vector.shape_cast %683 : vector<1x16x1xf32> to vector<16x1xf32>
    %685 = vector.shape_cast %682 : vector<16x1xf32> to vector<1x16x1xf32>
    tpu.vector_store %arg7[%c0_100, %c0_101, %c0_102], %685 {strides = array<i32>} : memref<1x16x1xf32, #tpu.memory_space<vmem>>, vector<1x16x1xf32>,
    return
  }
  func.func @transform_0(%arg0: i32) -> (i32, i32, i32) {
    %c0_i32 = arith.constant 0 : i32
    %c0_i32_0 = arith.constant 0 : i32
    %c0_i32_1 = arith.constant 0 : i32
    return %arg0, %c0_i32, %c0_i32_0 : i32, i32, i32
  }
  func.func @transform_1(%arg0: i32) -> (i32, i32, i32) {
    %c0_i32 = arith.constant 0 : i32
    %c0_i32_0 = arith.constant 0 : i32
    %c0_i32_1 = arith.constant 0 : i32
    return %arg0, %c0_i32, %c0_i32_0 : i32, i32, i32
  }
  func.func @transform_2(%arg0: i32) -> (i32, i32, i32, i32) {
    %c0_i32 = arith.constant 0 : i32
    %c0_i32_0 = arith.constant 0 : i32
    %c0_i32_1 = arith.constant 0 : i32
    %c0_i32_2 = arith.constant 0 : i32
    return %arg0, %c0_i32, %c0_i32_0, %c0_i32_1 : i32, i32, i32, i32
  }
  func.func @transform_3(%arg0: i32) -> (i32, i32) {
    %c0_i32 = arith.constant 0 : i32
    %c0_i32_0 = arith.constant 0 : i32
    %c0_i32_1 = arith.constant 0 : i32
    return %c0_i32, %c0_i32_0 : i32, i32
  }
  func.func @transform_4(%arg0: i32) -> (i32, i32) {
    %c0_i32 = arith.constant 0 : i32
    %c0_i32_0 = arith.constant 0 : i32
    %c0_i32_1 = arith.constant 0 : i32
    return %c0_i32, %c0_i32_0 : i32, i32
  }
  func.func @transform_5(%arg0: i32) -> (i32, i32) {
    %c0_i32 = arith.constant 0 : i32
    %c0_i32_0 = arith.constant 0 : i32
    %c0_i32_1 = arith.constant 0 : i32
    return %c0_i32, %c0_i32_0 : i32, i32
  }
  func.func @transform_6(%arg0: i32) -> (i32, i32, i32) {
    %c0_i32 = arith.constant 0 : i32
    %c0_i32_0 = arith.constant 0 : i32
    %c0_i32_1 = arith.constant 0 : i32
    return %arg0, %c0_i32, %c0_i32_0 : i32, i32, i32
  }
}

</mosaic_0001>

<llo_original>
// kernel: _lambda_.1
$region0: #{_lambda_.1}
  #allocation0 [shape = 'u32[]', space=smem, size = 0x4, offset = 0x4, fixed_abs, tag = 'smem constant byte address 0x4 - core index']
  #allocation1 [shape = 'u32[144,128]{1,0:T(1,128)}', space=vmem, size = 0x12000, scoped, tag = 'internal scratch']
  %s0 = inlined_call_operand.vmem [shape: f32[4,16,8], index: 0, kind: input, shape index: {}]
  %s1 = inlined_call_operand.vmem [shape: f32[4,16,16], index: 1, kind: input, shape index: {}]
  %s2 = inlined_call_operand.vmem [shape: f32[4,4,16,16], index: 2, kind: input, shape index: {}]
  %s3 = inlined_call_operand.vmem [shape: f32[17,72], index: 3, kind: input, shape index: {}]
  %s4 = inlined_call_operand.vmem [shape: f32[27,76], index: 4, kind: input, shape index: {}]
  %s5 = inlined_call_operand.vmem [shape: f32[25,19], index: 5, kind: input, shape index: {}]
  %s6 = inlined_call_operand.vmem [shape: f32[4,16,1], index: 6, kind: output, shape index: {}]
  %s7 = sld [smem:[#allocation0]]
  $region57: #{_lambda_.1} parent=0
    _
  %s9 = ssub.s32 1, %s7
  %s10 = scalar_select 0, %s9, %s7
  loop: start=0, step=1, limit=6
  $region2: #{_lambda_.1} parent=0 // loop_pre_header
    _
  $region3: #{_lambda_.1} parent=0 // loop_header
    %s12 = sphi 0, %s16
    %p13 = scmp.ge.s32.totalorder %s12, 6
    %s22 = sphi 0, %s24
    %s25 = sphi 0, %s22
    %s26 = sphi 0, %s25
    %s42 = sphi 0, %s26
    %s48 = sphi 0, %s50
    %s51 = sphi 0, %s48
    %s52 = sphi 0, %s51
    %s68 = sphi 0, %s52
    %s74 = sphi 0, %s76
    %s77 = sphi 0, %s74
    %s78 = sphi 0, %s77
    %s94 = sphi 0, %s78
    %s98 = sphi 0, %s98
    %s100 = sphi 0, %s98
    %s101 = sphi 0, %s100
    %s115 = sphi 0, %s101
    %s119 = sphi 0, %s119
    %s121 = sphi 0, %s119
    %s122 = sphi 0, %s121
    %s136 = sphi 0, %s122
    %s140 = sphi 0, %s140
    %s142 = sphi 0, %s140
    %s143 = sphi 0, %s142
    %s157 = sphi 0, %s143
    %s163 = sphi 0, %s165
    %s166 = sphi 0, %s163
    %s167 = sphi 0, %s166
    %s183 = sphi 0, %s167
  $region4: #{_lambda_.1} parent=0 // loop_header_branch
    %15 = sbr.rel (%p13) target = $region8
  $region5: #{_lambda_.1} parent=0 // loop_body
    %s17 = ssub.s32 %s12, 1
    %s18 = ssub.s32 %s12, 2
    %s19 = sadd.s32 %s12, 1
    %s20 = ssub.s32 %s12, %s19
    %p21 = scmp.eq.s32.totalorder %s20, 0
    %s23 = sadd.s32 %s22, 1
    %s24 = scalar_select %p21, %s22, %s23
    %p27 = pneg %p21
    %p28 = scmp.eq.s32.totalorder %s12, 3
    %p29 = por %p27, %p28
    %p30 = scmp.ne.s32.totalorder %s22, %s25
    %p31 = scmp.eq.s32.totalorder %s12, 0
    %p32 = por %p30, %p31
    %p33 = scmp.ne.s32.totalorder %s22, %s25
    %p34 = scmp.eq.s32.totalorder %s17, 3
    %p35 = por %p33, %p34
    %p36 = scmp.ne.s32.totalorder %s25, %s26
    %p37 = scmp.eq.s32.totalorder %s17, 0
    %p38 = por %p36, %p37
    %p39 = scmp.ne.s32.totalorder %s25, %s26
    %p40 = scmp.eq.s32.totalorder %s18, 3
    %p41 = por %p39, %p40
    %p43 = scmp.ne.s32.totalorder %s26, %s42
    %p44 = scmp.eq.s32.totalorder %s18, 0
    %p45 = por %p43, %p44
    %s46 = ssub.s32 %s12, %s19
    %p47 = scmp.eq.s32.totalorder %s46, 0
    %s49 = sadd.s32 %s48, 1
    %s50 = scalar_select %p47, %s48, %s49
    %p53 = pneg %p47
    %p54 = scmp.eq.s32.totalorder %s12, 3
    %p55 = por %p53, %p54
    %p56 = scmp.ne.s32.totalorder %s48, %s51
    %p57 = scmp.eq.s32.totalorder %s12, 0
    %p58 = por %p56, %p57
    %p59 = scmp.ne.s32.totalorder %s48, %s51
    %p60 = scmp.eq.s32.totalorder %s17, 3
    %p61 = por %p59, %p60
    %p62 = scmp.ne.s32.totalorder %s51, %s52
    %p63 = scmp.eq.s32.totalorder %s17, 0
    %p64 = por %p62, %p63
    %p65 = scmp.ne.s32.totalorder %s51, %s52
    %p66 = scmp.eq.s32.totalorder %s18, 3
    %p67 = por %p65, %p66
    %p69 = scmp.ne.s32.totalorder %s52, %s68
    %p70 = scmp.eq.s32.totalorder %s18, 0
    %p71 = por %p69, %p70
    %s72 = ssub.s32 %s12, %s19
    %p73 = scmp.eq.s32.totalorder %s72, 0
    %s75 = sadd.s32 %s74, 1
    %s76 = scalar_select %p73, %s74, %s75
    %p79 = pneg %p73
    %p80 = scmp.eq.s32.totalorder %s12, 3
    %p81 = por %p79, %p80
    %p82 = scmp.ne.s32.totalorder %s74, %s77
    %p83 = scmp.eq.s32.totalorder %s12, 0
    %p84 = por %p82, %p83
    %p85 = scmp.ne.s32.totalorder %s74, %s77
    %p86 = scmp.eq.s32.totalorder %s17, 3
    %p87 = por %p85, %p86
    %p88 = scmp.ne.s32.totalorder %s77, %s78
    %p89 = scmp.eq.s32.totalorder %s17, 0
    %p90 = por %p88, %p89
    %p91 = scmp.ne.s32.totalorder %s77, %s78
    %p92 = scmp.eq.s32.totalorder %s18, 3
    %p93 = por %p91, %p92
    %p95 = scmp.ne.s32.totalorder %s78, %s94
    %p96 = scmp.eq.s32.totalorder %s18, 0
    %p97 = por %p95, %p96
    %s99 = sadd.s32 %s98, 1
    %p102 = scmp.eq.s32.totalorder %s12, 3
    %p103 = scmp.ne.s32.totalorder %s98, %s100
    %p104 = scmp.eq.s32.totalorder %s12, 0
    %p105 = por %p103, %p104
    %p106 = scmp.ne.s32.totalorder %s98, %s100
    %p107 = scmp.eq.s32.totalorder %s17, 3
    %p108 = por %p106, %p107
    %p109 = scmp.ne.s32.totalorder %s100, %s101
    %p110 = scmp.eq.s32.totalorder %s17, 0
    %p111 = por %p109, %p110
    %p112 = scmp.ne.s32.totalorder %s100, %s101
    %p113 = scmp.eq.s32.totalorder %s18, 3
    %p114 = por %p112, %p113
    %p116 = scmp.ne.s32.totalorder %s101, %s115
    %p117 = scmp.eq.s32.totalorder %s18, 0
    %p118 = por %p116, %p117
    %s120 = sadd.s32 %s119, 1
    %p123 = scmp.eq.s32.totalorder %s12, 3
    %p124 = scmp.ne.s32.totalorder %s119, %s121
    %p125 = scmp.eq.s32.totalorder %s12, 0
    %p126 = por %p124, %p125
    %p127 = scmp.ne.s32.totalorder %s119, %s121
    %p128 = scmp.eq.s32.totalorder %s17, 3
    %p129 = por %p127, %p128
    %p130 = scmp.ne.s32.totalorder %s121, %s122
    %p131 = scmp.eq.s32.totalorder %s17, 0
    %p132 = por %p130, %p131
    %p133 = scmp.ne.s32.totalorder %s121, %s122
    %p134 = scmp.eq.s32.totalorder %s18, 3
    %p135 = por %p133, %p134
    %p137 = scmp.ne.s32.totalorder %s122, %s136
    %p138 = scmp.eq.s32.totalorder %s18, 0
    %p139 = por %p137, %p138
    %s141 = sadd.s32 %s140, 1
    %p144 = scmp.eq.s32.totalorder %s12, 3
    %p145 = scmp.ne.s32.totalorder %s140, %s142
    %p146 = scmp.eq.s32.totalorder %s12, 0
    %p147 = por %p145, %p146
    %p148 = scmp.ne.s32.totalorder %s140, %s142
    %p149 = scmp.eq.s32.totalorder %s17, 3
    %p150 = por %p148, %p149
    %p151 = scmp.ne.s32.totalorder %s142, %s143
    %p152 = scmp.eq.s32.totalorder %s17, 0
    %p153 = por %p151, %p152
    %p154 = scmp.ne.s32.totalorder %s142, %s143
    %p155 = scmp.eq.s32.totalorder %s18, 3
    %p156 = por %p154, %p155
    %p158 = scmp.ne.s32.totalorder %s143, %s157
    %p159 = scmp.eq.s32.totalorder %s18, 0
    %p160 = por %p158, %p159
    %s161 = ssub.s32 %s12, %s19
    %p162 = scmp.eq.s32.totalorder %s161, 0
    %s164 = sadd.s32 %s163, 1
    %s165 = scalar_select %p162, %s163, %s164
    %p168 = pneg %p162
    %p169 = scmp.eq.s32.totalorder %s12, 3
    %p170 = por %p168, %p169
    %p171 = scmp.ne.s32.totalorder %s163, %s166
    %p172 = scmp.eq.s32.totalorder %s12, 0
    %p173 = por %p171, %p172
    %p174 = scmp.ne.s32.totalorder %s163, %s166
    %p175 = scmp.eq.s32.totalorder %s17, 3
    %p176 = por %p174, %p175
    %p177 = scmp.ne.s32.totalorder %s166, %s167
    %p178 = scmp.eq.s32.totalorder %s17, 0
    %p179 = por %p177, %p178
    %p180 = scmp.ne.s32.totalorder %s166, %s167
    %p181 = scmp.eq.s32.totalorder %s18, 3
    %p182 = por %p180, %p181
    %p184 = scmp.ne.s32.totalorder %s167, %s183
    %p185 = scmp.eq.s32.totalorder %s18, 0
    %p186 = por %p184, %p185
    %p187 = scmp.le.s32.totalorder 1, %s12
    %p188 = scmp.lt.s32.totalorder %s12, 5
    %p189 = pnand %p187, %p188
    %p190 = pneg %p189
    // Predicated region
    $region9: #{_lambda_.1} parent=5 // pred_check
      _
    $region10: #{_lambda_.1} parent=5 // pred_check_branch
      %192 = sbr.rel (%p189) target = $region12
    $region11: #{_lambda_.1} parent=5 // pred_region
      %s193 = ssub.s32 %s12, 1
      // Predicated region
      $region13: #{_lambda_.1} parent=11 // pred_check
        %p194 = pneg %p111
      $region14: #{_lambda_.1} parent=11 // pred_check_branch
        %196 = sbr.rel (%p194) target = $region16
      $region15: #{_lambda_.1} parent=11 // pred_region
        _
      $region16: #{_lambda_.1} parent=11 // pred_fallthru
        _
      // Predicated region
      $region17: #{_lambda_.1} parent=11 // pred_check
        %p197 = pneg %p132
      $region18: #{_lambda_.1} parent=11 // pred_check_branch
        %199 = sbr.rel (%p197) target = $region20
      $region19: #{_lambda_.1} parent=11 // pred_region
        _
      $region20: #{_lambda_.1} parent=11 // pred_fallthru
        _
      // Predicated region
      $region21: #{_lambda_.1} parent=11 // pred_check
        %p200 = pneg %p153
      $region22: #{_lambda_.1} parent=11 // pred_check_branch
        %202 = sbr.rel (%p200) target = $region24
      $region23: #{_lambda_.1} parent=11 // pred_region
        _
      $region24: #{_lambda_.1} parent=11 // pred_fallthru
        _
    $region12: #{_lambda_.1} parent=5 // pred_fallthru
      _
    %p203 = scmp.lt.s32.totalorder %s12, 4
    // Predicated region
    $region25: #{_lambda_.1} parent=5 // pred_check
      %p204 = pneg %p203
    $region26: #{_lambda_.1} parent=5 // pred_check_branch
      %206 = sbr.rel (%p204) target = $region28
    $region27: #{_lambda_.1} parent=5 // pred_region
      // Predicated region
      $region29: #{_lambda_.1} parent=27 // pred_check
        %p207 = pneg %p32
      $region30: #{_lambda_.1} parent=27 // pred_check_branch
        %209 = sbr.rel (%p207) target = $region32
      $region31: #{_lambda_.1} parent=27 // pred_region
        %p210 = scmp.lt.s32.totalorder %s12, 3
        %s211 = scalar_select %p210, %s12, 3
        %s212 = smul.addr %s211, 2
        %s213 = smul.addr %s212, 8
        %s214 = scalar_lea.vmem %s0, %s213
      $region32: #{_lambda_.1} parent=27 // pred_fallthru
        _
      // Predicated region
      $region33: #{_lambda_.1} parent=27 // pred_check
        %p215 = pneg %p58
      $region34: #{_lambda_.1} parent=27 // pred_check_branch
        %217 = sbr.rel (%p215) target = $region36
      $region35: #{_lambda_.1} parent=27 // pred_region
        %p218 = scmp.lt.s32.totalorder %s12, 3
        %s219 = scalar_select %p218, %s12, 3
        %s220 = smul.addr %s219, 2
        %s221 = smul.addr %s220, 8
        %s222 = scalar_lea.vmem %s1, %s221
      $region36: #{_lambda_.1} parent=27 // pred_fallthru
        _
      // Predicated region
      $region37: #{_lambda_.1} parent=27 // pred_check
        %p223 = pneg %p84
      $region38: #{_lambda_.1} parent=27 // pred_check_branch
        %225 = sbr.rel (%p223) target = $region40
      $region39: #{_lambda_.1} parent=27 // pred_region
        %p226 = scmp.lt.s32.totalorder %s12, 3
        %s227 = scalar_select %p226, %s12, 3
        %s228 = smul.addr %s227, 8
        %s229 = smul.addr %s228, 8
        %s230 = scalar_lea.vmem %s2, %s229
      $region40: #{_lambda_.1} parent=27 // pred_fallthru
        _
    $region28: #{_lambda_.1} parent=5 // pred_fallthru
      _
    %p231 = scmp.le.s32.totalorder 1, %s12
    %p232 = scmp.lt.s32.totalorder %s12, 5
    %p233 = pnand %p231, %p232
    %p234 = pneg %p233
    // Predicated region
    $region41: #{_lambda_.1} parent=5 // pred_check
      _
    $region42: #{_lambda_.1} parent=5 // pred_check_branch
      %236 = sbr.rel (%p233) target = $region44
    $region43: #{_lambda_.1} parent=5 // pred_region
      %s237 = ssub.s32 %s12, 1
      %p238 = scmp.lt.s32.totalorder %s17, 3
      %s239 = scalar_select %p238, %s17, 3
      %s240 = smul.addr %s239, 2
      %s241 = smul.addr %s240, 8
      %s242 = scalar_lea.vmem %s0, %s241
      %p243 = pneg %p38
      %p244 = pneg %p35
      %p245 = scmp.lt.s32.totalorder %s17, 3
      %s246 = scalar_select %p245, %s17, 3
      %s247 = smul.addr %s246, 2
      %s248 = smul.addr %s247, 8
      %s249 = scalar_lea.vmem %s1, %s248
      %p250 = pneg %p64
      %p251 = pneg %p61
      %p252 = scmp.lt.s32.totalorder %s17, 3
      %s253 = scalar_select %p252, %s17, 3
      %s254 = smul.addr %s253, 8
      %s255 = smul.addr %s254, 8
      %s256 = scalar_lea.vmem %s2, %s255
      %p257 = pneg %p90
      %p258 = pneg %p87
      %p259 = pneg %p111
      %p260 = pneg %p108
      %p261 = pneg %p132
      %p262 = pneg %p129
      %p263 = pneg %p153
      %p264 = pneg %p150
      %p265 = pneg %p179
      %p266 = pneg %p176
      %p267 = scmp.lt.s32.totalorder %s17, 3
      %s268 = scalar_select %p267, %s17, 3
      %s269 = smul.addr %s268, 2
      %s270 = smul.addr %s269, 8
      %s271 = scalar_lea.vmem %s6, %s270
      %p272 = scmp.lt.s32.totalorder %s17, 3
      %s273 = scalar_select %p272, %s17, 3
      %s274 = smul.addr %s273, 2
      %s275 = smul.addr %s274, 8
      %s276 = scalar_lea.vmem %s0, %s275
      %p277 = scmp.lt.s32.totalorder %s17, 3
      %s278 = scalar_select %p277, %s17, 3
      %s279 = smul.addr %s278, 2
      %s280 = smul.addr %s279, 8
      %s281 = scalar_lea.vmem %s1, %s280
      %p282 = scmp.lt.s32.totalorder %s17, 3
      %s283 = scalar_select %p282, %s17, 3
      %s284 = smul.addr %s283, 8
      %s285 = smul.addr %s284, 8
      %s286 = scalar_lea.vmem %s2, %s285
      %p287 = scmp.lt.s32.totalorder %s17, 3
      %s288 = scalar_select %p287, %s17, 3
      %s289 = smul.addr %s288, 2
      %s290 = smul.addr %s289, 8
      %s291 = scalar_lea.vmem %s6, %s290
      %v293 = vld [vmem:[%s276] sm:$0xff]
      %v294 = vld [vmem:[%s276 + $0x8] sm:$0xff]
      %v295 = vld [vmem:[%s281] sm:$0xff]
      %v296 = vld [vmem:[%s281 + $0x8] sm:$0xff]
      %v297 = vld [vmem:[%s286] sm:$0xff]
      %v298 = vld [vmem:[%s286 + $0x8] sm:$0xff]
      %v299 = vld [vmem:[%s286 + $0x10] sm:$0xff]
      %v300 = vld [vmem:[%s286 + $0x18] sm:$0xff]
      %v301 = vld [vmem:[%s286 + $0x20] sm:$0xff]
      %v302 = vld [vmem:[%s286 + $0x28] sm:$0xff]
      %v303 = vld [vmem:[%s286 + $0x30] sm:$0xff]
      %v304 = vld [vmem:[%s286 + $0x38] sm:$0xff]
      %v305 = vld [vmem:[%s3] sm:$0xff]
      %v306 = vld [vmem:[%s3 + $0x8] sm:$0xff]
      %v307 = vld [vmem:[%s3 + $0x10] sm:$0x1]
      %v308 = vpack.c.bf16 %v294, %v293
      %v309 = vpack.c.bf16 %v305, %v305
      %v310 = vlaneseq
      %v311 = vshrl.u32 %v310, 7
      %v312 = vsub.s32 0, %v311
      %v313 = vrot.slane %v306, %v312
      %vm314 = vcmask 64512
      %v316 = vsel %vm314, %v308, 0
      %vm318 = vcmask 1043456
      %v320 = vsel %vm318, %v309, 0
      %322 = vmatprep.subr.bf16.mxu0 0
      %323 = vmatpush1.bf16.msra.mxu0 %v320
      %324 = vmatprep.subr.bf16.mxu0 0
      %325 = vmatpush1.bf16.msra.mxu0 0
      %326 = vmatprep.subr.bf16.mxu0 0
      %327 = vmatpush1.bf16.msra.mxu0 0
      %328 = vmatprep.subr.bf16.mxu0 0
      %329 = vmatpush1.bf16.msra.mxu0 0
      %330 = vmatprep.subr.bf16.mxu0 0
      %331 = vmatpush1.bf16.msra.mxu0 0
      %332 = vmatprep.subr.bf16.mxu0 0
      %333 = vmatpush1.bf16.msra.mxu0 0
      %334 = vmatprep.subr.bf16.mxu0 0
      %335 = vmatpush1.bf16.msra.mxu0 0
      %336 = vmatprep.subr.bf16.mxu0 0
      %337 = vmatpush1.bf16.msra.mxu0 0
      %338 = vmatprep.subr.bf16.mxu0 0
      %339 = vmatpush1.bf16.msra.mxu0 0
      %340 = vmatprep.subr.bf16.mxu0 0
      %341 = vmatpush1.bf16.msra.mxu0 0
      %342 = vmatprep.subr.bf16.mxu0 0
      %343 = vmatpush1.bf16.msra.mxu0 0
      %344 = vmatprep.subr.bf16.mxu0 0
      %345 = vmatpush1.bf16.msra.mxu0 0
      %346 = vmatprep.subr.bf16.mxu0 0
      %347 = vmatpush1.bf16.msra.mxu0 0
      %348 = vmatprep.subr.bf16.mxu0 0
      %349 = vmatpush1.bf16.msra.mxu0 0
      %350 = vmatprep.subr.bf16.mxu0 0
      %351 = vmatpush1.bf16.msra.mxu0 0
      %352 = vmatprep.subr.bf16.mxu0 0
      %353 = vmatpush1.bf16.msra.mxu0 0
      %354 = vmatprep.mubr.bf16.mxu0 0
      %355 = vmatmul.mubr.bf16.gmra.mrb[0].mxu0 %v316
      %v356 = vpop.f32.mrb[0].mxu0
      %v357 = vadd.f32 %v313, %v356
      %v358 = vpop.f32.mrb[0].mxu0
      %v359 = vpop.f32.mrb[0].mxu0
      %v360 = vadd.f32 %v313, %v359
      %v361 = vpop.f32.mrb[0].mxu0
      %362 = vdwg.mxu0
      %v363 = vpack.c.bf16 %v360, %v357
      %365 = vset.pattern.permute.xlu0 64
      %366 = vperm.xlu0 %365, %v357
      %v367 = vpop.permute.xlu0 %366
      %370 = vset.pattern.permute.xlu0 64
      %371 = vperm.xlu0 %370, %v360
      %v372 = vpop.permute.xlu0 %371
      %v374 = vmul.f32 %v367, %v297
      %v375 = vmul.f32 %v372, %v298
      %377 = vrot.lane.b32.xlu0 %v363, 112
      %v378 = vpop.permute.xlu0 %377
      %v380 = vsel %vm314, %v363, 0
      %v383 = vsel %vm314, %v378, 0
      %385 = vmatprep.subr.bf16.mxu0 0
      %386 = vmatpush1.bf16.xpose.msra.mxu0 %v383
      %387 = vmatprep.subr.bf16.mxu0 0
      %388 = vmatpush1.bf16.xpose.msra.mxu0 0
      %389 = vmatprep.subr.bf16.mxu0 0
      %390 = vmatpush1.bf16.xpose.msra.mxu0 0
      %391 = vmatprep.subr.bf16.mxu0 0
      %392 = vmatpush1.bf16.xpose.msra.mxu0 0
      %393 = vmatprep.subr.bf16.mxu0 0
      %394 = vmatpush1.bf16.xpose.msra.mxu0 0
      %395 = vmatprep.subr.bf16.mxu0 0
      %396 = vmatpush1.bf16.xpose.msra.mxu0 0
      %397 = vmatprep.subr.bf16.mxu0 0
      %398 = vmatpush1.bf16.xpose.msra.mxu0 0
      %399 = vmatprep.subr.bf16.mxu0 0
      %400 = vmatpush1.bf16.xpose.msra.mxu0 0
      %401 = vmatprep.subr.bf16.mxu0 0
      %402 = vmatpush1.bf16.xpose.msra.mxu0 0
      %403 = vmatprep.subr.bf16.mxu0 0
      %404 = vmatpush1.bf16.xpose.msra.mxu0 0
      %405 = vmatprep.subr.bf16.mxu0 0
      %406 = vmatpush1.bf16.xpose.msra.mxu0 0
      %407 = vmatprep.subr.bf16.mxu0 0
      %408 = vmatpush1.bf16.xpose.msra.mxu0 0
      %409 = vmatprep.subr.bf16.mxu0 0
      %410 = vmatpush1.bf16.xpose.msra.mxu0 0
      %411 = vmatprep.subr.bf16.mxu0 0
      %412 = vmatpush1.bf16.xpose.msra.mxu0 0
      %413 = vmatprep.subr.bf16.mxu0 0
      %414 = vmatpush1.bf16.xpose.msra.mxu0 0
      %415 = vmatprep.subr.bf16.mxu0 0
      %416 = vmatpush1.bf16.xpose.msra.mxu0 0
      %417 = vmatprep.mubr.bf16.mxu0 0
      %418 = vmatmul.mubr.bf16.gmra.mrb[0].mxu0 %v380
      %v419 = vpop.f32.mrb[0].mxu0
      %v420 = vadd.f32 %v374, %v419
      %v421 = vpop.f32.mrb[0].mxu0
      %v422 = vpop.f32.mrb[0].mxu0
      %v423 = vadd.f32 %v375, %v422
      %v424 = vpop.f32.mrb[0].mxu0
      %425 = vdwg.mxu0
      %426 = vset.pattern.permute.xlu0 65
      %427 = vperm.xlu0 %426, %v357
      %v428 = vpop.permute.xlu0 %427
      %430 = vset.pattern.permute.xlu0 65
      %431 = vperm.xlu0 %430, %v360
      %v432 = vpop.permute.xlu0 %431
      %v434 = vmul.f32 %v428, %v299
      %v435 = vmul.f32 %v432, %v300
      %v436 = vadd.f32 %v420, %v434
      %v437 = vadd.f32 %v423, %v435
      %438 = vset.pattern.permute.xlu0 66
      %439 = vperm.xlu0 %438, %v357
      %v440 = vpop.permute.xlu0 %439
      %442 = vset.pattern.permute.xlu0 66
      %443 = vperm.xlu0 %442, %v360
      %v444 = vpop.permute.xlu0 %443
      %v446 = vmul.f32 %v440, %v301
      %v447 = vmul.f32 %v444, %v302
      %v448 = vadd.f32 %v436, %v446
      %v449 = vadd.f32 %v437, %v447
      %450 = vset.pattern.permute.xlu0 67
      %451 = vperm.xlu0 %450, %v357
      %v452 = vpop.permute.xlu0 %451
      %454 = vset.pattern.permute.xlu0 67
      %455 = vperm.xlu0 %454, %v360
      %v456 = vpop.permute.xlu0 %455
      %v458 = vmul.f32 %v452, %v303
      %v459 = vmul.f32 %v456, %v304
      %v460 = vadd.f32 %v448, %v458
      %v461 = vadd.f32 %v449, %v459
      %v462 = vmul.f32 %v460, 0.35355338
      %v463 = vmul.f32 %v461, 0.35355338
      %v464 = vadd.f32 %v462, %v295
      %v465 = vadd.f32 %v463, %v296
      %vm466 = vcmask 130048
      %v467 = vsel %vm466, %v464, -inf
      %468 = vmax.xlane.f32.xlu0 %v467
      %v469 = vpop.xlane.xlu0 %468
      %v470 = vsel %vm466, %v465, -inf
      %471 = vmax.xlane.f32.xlu0 %v470
      %v472 = vpop.xlane.xlu0 %471
      %v473 = vsub.f32 %v464, %v469
      %v474 = vsub.f32 %v465, %v472
      %v475 = vmul.f32 %v473, 1.442695
      %v476 = vpow.pop %v475
      %v477 = vmul.f32 %v474, 1.442695
      %v478 = vpow.pop %v477
      %v479 = vsel %vm466, %v476, 0.0
      %480 = vadd.xlane.f32.xlu0 %v479
      %v481 = vpop.xlane.xlu0 %480
      %v482 = vsel %vm466, %v478, 0.0
      %483 = vadd.xlane.f32.xlu0 %v482
      %v484 = vpop.xlane.xlu0 %483
      %v485 = vrcp.pop %v481
      %v486 = vrcp.pop %v484
      %v487 = vmul.f32 %v476, %v485
      %v488 = vmul.f32 %v478, %v486
      %v489 = vpack.c.bf16 %v488, %v487
      %v490 = vmul.f32 %v487, %v297
      %v491 = vmul.f32 %v488, %v298
      %v492 = vsel %vm466, %v490, 0.0
      %493 = vadd.xlane.f32.xlu0 %v492
      %v494 = vpop.xlane.xlu0 %493
      %v495 = vsel %vm466, %v491, 0.0
      %496 = vadd.xlane.f32.xlu0 %v495
      %v497 = vpop.xlane.xlu0 %496
      %v498 = vlaneseq
      %v499 = vshrl.u32 %v498, 7
      %v500 = vsub.s32 1, %v499
      %v501 = vrot.slane %v306, %v500
      %v502 = vmul.f32 %v494, %v501
      %v503 = vmul.f32 %v497, %v501
      %504 = vrot.lane.b32.xlu0 %v363, 96
      %v505 = vpop.permute.xlu0 %504
      %v508 = vsel %vm466, %v489, 0
      %510 = vmatprep.subr.bf16.mxu0 0
      %511 = vmatpush1.bf16.msra.mxu0 %v505
      %512 = vmatprep.subr.bf16.mxu0 0
      %513 = vmatpush1.bf16.msra.mxu0 0
      %514 = vmatprep.subr.bf16.mxu0 0
      %515 = vmatpush1.bf16.msra.mxu0 0
      %516 = vmatprep.subr.bf16.mxu0 0
      %517 = vmatpush1.bf16.msra.mxu0 0
      %518 = vmatprep.subr.bf16.mxu0 0
      %519 = vmatpush1.bf16.msra.mxu0 0
      %520 = vmatprep.subr.bf16.mxu0 0
      %521 = vmatpush1.bf16.msra.mxu0 0
      %522 = vmatprep.subr.bf16.mxu0 0
      %523 = vmatpush1.bf16.msra.mxu0 0
      %524 = vmatprep.subr.bf16.mxu0 0
      %525 = vmatpush1.bf16.msra.mxu0 0
      %526 = vmatprep.subr.bf16.mxu0 0
      %527 = vmatpush1.bf16.msra.mxu0 0
      %528 = vmatprep.subr.bf16.mxu0 0
      %529 = vmatpush1.bf16.msra.mxu0 0
      %530 = vmatprep.subr.bf16.mxu0 0
      %531 = vmatpush1.bf16.msra.mxu0 0
      %532 = vmatprep.subr.bf16.mxu0 0
      %533 = vmatpush1.bf16.msra.mxu0 0
      %534 = vmatprep.subr.bf16.mxu0 0
      %535 = vmatpush1.bf16.msra.mxu0 0
      %536 = vmatprep.subr.bf16.mxu0 0
      %537 = vmatpush1.bf16.msra.mxu0 0
      %538 = vmatprep.subr.bf16.mxu0 0
      %539 = vmatpush1.bf16.msra.mxu0 0
      %540 = vmatprep.subr.bf16.mxu0 0
      %541 = vmatpush1.bf16.msra.mxu0 0
      %542 = vmatprep.mubr.bf16.mxu0 0
      %543 = vmatmul.mubr.bf16.gmra.mrb[0].mxu0 %v508
      %v544 = vpop.f32.mrb[0].mxu0
      %v545 = vadd.f32 %v502, %v544
      %v546 = vpop.f32.mrb[0].mxu0
      %v547 = vpop.f32.mrb[0].mxu0
      %v548 = vadd.f32 %v503, %v547
      %v549 = vpop.f32.mrb[0].mxu0
      %550 = vdwg.mxu0
      %v551 = vmul.f32 %v487, %v299
      %v552 = vmul.f32 %v488, %v300
      %v553 = vsel %vm466, %v551, 0.0
      %554 = vadd.xlane.f32.xlu0 %v553
      %v555 = vpop.xlane.xlu0 %554
      %v556 = vsel %vm466, %v552, 0.0
      %557 = vadd.xlane.f32.xlu0 %v556
      %v558 = vpop.xlane.xlu0 %557
      %v559 = vlaneseq
      %v560 = vshrl.u32 %v559, 7
      %v561 = vsub.s32 2, %v560
      %v562 = vrot.slane %v306, %v561
      %v563 = vmul.f32 %v555, %v562
      %v564 = vmul.f32 %v558, %v562
      %v565 = vadd.f32 %v545, %v563
      %v566 = vadd.f32 %v548, %v564
      %v567 = vmul.f32 %v487, %v301
      %v568 = vmul.f32 %v488, %v302
      %v569 = vsel %vm466, %v567, 0.0
      %570 = vadd.xlane.f32.xlu0 %v569
      %v571 = vpop.xlane.xlu0 %570
      %v572 = vsel %vm466, %v568, 0.0
      %573 = vadd.xlane.f32.xlu0 %v572
      %v574 = vpop.xlane.xlu0 %573
      %v575 = vlaneseq
      %v576 = vshrl.u32 %v575, 7
      %v577 = vsub.s32 3, %v576
      %v578 = vrot.slane %v306, %v577
      %v579 = vmul.f32 %v571, %v578
      %v580 = vmul.f32 %v574, %v578
      %v581 = vadd.f32 %v565, %v579
      %v582 = vadd.f32 %v566, %v580
      %v583 = vmul.f32 %v487, %v303
      %v584 = vmul.f32 %v488, %v304
      %v585 = vsel %vm466, %v583, 0.0
      %586 = vadd.xlane.f32.xlu0 %v585
      %v587 = vpop.xlane.xlu0 %586
      %v588 = vsel %vm466, %v584, 0.0
      %589 = vadd.xlane.f32.xlu0 %v588
      %v590 = vpop.xlane.xlu0 %589
      %v591 = vlaneseq
      %v592 = vshrl.u32 %v591, 7
      %v593 = vsub.s32 4, %v592
      %v594 = vrot.slane %v306, %v593
      %v595 = vmul.f32 %v587, %v594
      %v596 = vmul.f32 %v590, %v594
      %v597 = vadd.f32 %v581, %v595
      %v598 = vadd.f32 %v582, %v596
      %599 = vset.pattern.permute.xlu0 68
      %600 = vperm.xlu0 %599, %v357
      %v601 = vpop.permute.xlu0 %600
      %603 = vset.pattern.permute.xlu0 68
      %604 = vperm.xlu0 %603, %v360
      %v605 = vpop.permute.xlu0 %604
      %v607 = vmul.f32 %v601, %v297
      %v608 = vmul.f32 %v605, %v298
      %609 = vrot.lane.b32.xlu0 %v363, 120
      %v610 = vpop.permute.xlu0 %609
      %611 = vrot.lane.b32.xlu0 %v363, 104
      %v612 = vpop.permute.xlu0 %611
      %v614 = vsel %vm314, %v610, 0
      %v617 = vsel %vm314, %v612, 0
      %619 = vmatprep.subr.bf16.mxu0 0
      %620 = vmatpush1.bf16.xpose.msra.mxu0 %v617
      %621 = vmatprep.subr.bf16.mxu0 0
      %622 = vmatpush1.bf16.xpose.msra.mxu0 0
      %623 = vmatprep.subr.bf16.mxu0 0
      %624 = vmatpush1.bf16.xpose.msra.mxu0 0
      %625 = vmatprep.subr.bf16.mxu0 0
      %626 = vmatpush1.bf16.xpose.msra.mxu0 0
      %627 = vmatprep.subr.bf16.mxu0 0
      %628 = vmatpush1.bf16.xpose.msra.mxu0 0
      %629 = vmatprep.subr.bf16.mxu0 0
      %630 = vmatpush1.bf16.xpose.msra.mxu0 0
      %631 = vmatprep.subr.bf16.mxu0 0
      %632 = vmatpush1.bf16.xpose.msra.mxu0 0
      %633 = vmatprep.subr.bf16.mxu0 0
      %634 = vmatpush1.bf16.xpose.msra.mxu0 0
      %635 = vmatprep.subr.bf16.mxu0 0
      %636 = vmatpush1.bf16.xpose.msra.mxu0 0
      %637 = vmatprep.subr.bf16.mxu0 0
      %638 = vmatpush1.bf16.xpose.msra.mxu0 0
      %639 = vmatprep.subr.bf16.mxu0 0
      %640 = vmatpush1.bf16.xpose.msra.mxu0 0
      %641 = vmatprep.subr.bf16.mxu0 0
      %642 = vmatpush1.bf16.xpose.msra.mxu0 0
      %643 = vmatprep.subr.bf16.mxu0 0
      %644 = vmatpush1.bf16.xpose.msra.mxu0 0
      %645 = vmatprep.subr.bf16.mxu0 0
      %646 = vmatpush1.bf16.xpose.msra.mxu0 0
      %647 = vmatprep.subr.bf16.mxu0 0
      %648 = vmatpush1.bf16.xpose.msra.mxu0 0
      %649 = vmatprep.subr.bf16.mxu0 0
      %650 = vmatpush1.bf16.xpose.msra.mxu0 0
      %651 = vmatprep.mubr.bf16.mxu0 0
      %652 = vmatmul.mubr.bf16.gmra.mrb[0].mxu0 %v614
      %v653 = vpop.f32.mrb[0].mxu0
      %v654 = vadd.f32 %v607, %v653
      %v655 = vpop.f32.mrb[0].mxu0
      %v656 = vpop.f32.mrb[0].mxu0
      %v657 = vadd.f32 %v608, %v656
      %v658 = vpop.f32.mrb[0].mxu0
      %659 = vdwg.mxu0
      %660 = vset.pattern.permute.xlu0 69
      %661 = vperm.xlu0 %660, %v357
      %v662 = vpop.permute.xlu0 %661
      %664 = vset.pattern.permute.xlu0 69
      %665 = vperm.xlu0 %664, %v360
      %v666 = vpop.permute.xlu0 %665
      %v668 = vmul.f32 %v662, %v299
      %v669 = vmul.f32 %v666, %v300
      %v670 = vadd.f32 %v654, %v668
      %v671 = vadd.f32 %v657, %v669
      %672 = vset.pattern.permute.xlu0 70
      %673 = vperm.xlu0 %672, %v357
      %v674 = vpop.permute.xlu0 %673
      %676 = vset.pattern.permute.xlu0 70
      %677 = vperm.xlu0 %676, %v360
      %v678 = vpop.permute.xlu0 %677
      %v680 = vmul.f32 %v674, %v301
      %v681 = vmul.f32 %v678, %v302
      %v682 = vadd.f32 %v670, %v680
      %v683 = vadd.f32 %v671, %v681
      %684 = vset.pattern.permute.xlu0 71
      %685 = vperm.xlu0 %684, %v357
      %v686 = vpop.permute.xlu0 %685
      %688 = vset.pattern.permute.xlu0 71
      %689 = vperm.xlu0 %688, %v360
      %v690 = vpop.permute.xlu0 %689
      %v692 = vmul.f32 %v686, %v303
      %v693 = vmul.f32 %v690, %v304
      %v694 = vadd.f32 %v682, %v692
      %v695 = vadd.f32 %v683, %v693
      %v696 = vmul.f32 %v694, 0.35355338
      %v697 = vmul.f32 %v695, 0.35355338
      %v698 = vadd.f32 %v696, %v295
      %v699 = vadd.f32 %v697, %v296
      %v700 = vsel %vm466, %v698, -inf
      %701 = vmax.xlane.f32.xlu0 %v700
      %v702 = vpop.xlane.xlu0 %701
      %v703 = vsel %vm466, %v699, -inf
      %704 = vmax.xlane.f32.xlu0 %v703
      %v705 = vpop.xlane.xlu0 %704
      %v706 = vsub.f32 %v698, %v702
      %v707 = vsub.f32 %v699, %v705
      %v708 = vmul.f32 %v706, 1.442695
      %v709 = vpow.pop %v708
      %v710 = vmul.f32 %v707, 1.442695
      %v711 = vpow.pop %v710
      %v712 = vsel %vm466, %v709, 0.0
      %713 = vadd.xlane.f32.xlu0 %v712
      %v714 = vpop.xlane.xlu0 %713
      %v715 = vsel %vm466, %v711, 0.0
      %716 = vadd.xlane.f32.xlu0 %v715
      %v717 = vpop.xlane.xlu0 %716
      %v718 = vrcp.pop %v714
      %v719 = vrcp.pop %v717
      %v720 = vmul.f32 %v709, %v718
      %v721 = vmul.f32 %v711, %v719
      %v722 = vpack.c.bf16 %v721, %v720
      %v723 = vmul.f32 %v720, %v297
      %v724 = vmul.f32 %v721, %v298
      %v725 = vsel %vm466, %v723, 0.0
      %726 = vadd.xlane.f32.xlu0 %v725
      %v727 = vpop.xlane.xlu0 %726
      %v728 = vsel %vm466, %v724, 0.0
      %729 = vadd.xlane.f32.xlu0 %v728
      %v730 = vpop.xlane.xlu0 %729
      %v731 = vmul.f32 %v727, %v501
      %v732 = vmul.f32 %v730, %v501
      %733 = vrot.lane.b32.xlu0 %v363, 88
      %v734 = vpop.permute.xlu0 %733
      %738 = vrot.lane.b32.xlu0 %v731, 120
      %v739 = vpop.permute.xlu0 %738
      %740 = vrot.lane.b32.xlu0 %v732, 120
      %v741 = vpop.permute.xlu0 %740
      %v745 = vsel %vm466, %v722, 0
      %747 = vmatprep.subr.bf16.mxu0 0
      %748 = vmatpush1.bf16.msra.mxu0 %v734
      %749 = vmatprep.subr.bf16.mxu0 0
      %750 = vmatpush1.bf16.msra.mxu0 0
      %751 = vmatprep.subr.bf16.mxu0 0
      %752 = vmatpush1.bf16.msra.mxu0 0
      %753 = vmatprep.subr.bf16.mxu0 0
      %754 = vmatpush1.bf16.msra.mxu0 0
      %755 = vmatprep.subr.bf16.mxu0 0
      %756 = vmatpush1.bf16.msra.mxu0 0
      %757 = vmatprep.subr.bf16.mxu0 0
      %758 = vmatpush1.bf16.msra.mxu0 0
      %759 = vmatprep.subr.bf16.mxu0 0
      %760 = vmatpush1.bf16.msra.mxu0 0
      %761 = vmatprep.subr.bf16.mxu0 0
      %762 = vmatpush1.bf16.msra.mxu0 0
      %763 = vmatprep.subr.bf16.mxu0 0
      %764 = vmatpush1.bf16.msra.mxu0 0
      %765 = vmatprep.subr.bf16.mxu0 0
      %766 = vmatpush1.bf16.msra.mxu0 0
      %767 = vmatprep.subr.bf16.mxu0 0
      %768 = vmatpush1.bf16.msra.mxu0 0
      %769 = vmatprep.subr.bf16.mxu0 0
      %770 = vmatpush1.bf16.msra.mxu0 0
      %771 = vmatprep.subr.bf16.mxu0 0
      %772 = vmatpush1.bf16.msra.mxu0 0
      %773 = vmatprep.subr.bf16.mxu0 0
      %774 = vmatpush1.bf16.msra.mxu0 0
      %775 = vmatprep.subr.bf16.mxu0 0
      %776 = vmatpush1.bf16.msra.mxu0 0
      %777 = vmatprep.subr.bf16.mxu0 0
      %778 = vmatpush1.bf16.msra.mxu0 0
      %779 = vmatprep.mubr.bf16.mxu0 0
      %780 = vmatmul.mubr.bf16.gmra.mrb[0].mxu0 %v745
      %v781 = vpop.f32.mrb[0].mxu0
      %v782 = vadd.f32 %v739, %v781
      %v783 = vpop.f32.mrb[0].mxu0
      %v784 = vpop.f32.mrb[0].mxu0
      %v785 = vadd.f32 %v741, %v784
      %v786 = vpop.f32.mrb[0].mxu0
      %787 = vdwg.mxu0
      %v788 = vmul.f32 %v720, %v299
      %v789 = vmul.f32 %v721, %v300
      %v790 = vsel %vm466, %v788, 0.0
      %791 = vadd.xlane.f32.xlu0 %v790
      %v792 = vpop.xlane.xlu0 %791
      %v793 = vsel %vm466, %v789, 0.0
      %794 = vadd.xlane.f32.xlu0 %v793
      %v795 = vpop.xlane.xlu0 %794
      %v796 = vmul.f32 %v792, %v562
      %v797 = vmul.f32 %v795, %v562
      %800 = vrot.lane.b32.xlu0 %v796, 120
      %v801 = vpop.permute.xlu0 %800
      %802 = vrot.lane.b32.xlu0 %v797, 120
      %v803 = vpop.permute.xlu0 %802
      %v806 = vadd.f32 %v782, %v801
      %v807 = vadd.f32 %v785, %v803
      %v808 = vmul.f32 %v720, %v301
      %v809 = vmul.f32 %v721, %v302
      %v810 = vsel %vm466, %v808, 0.0
      %811 = vadd.xlane.f32.xlu0 %v810
      %v812 = vpop.xlane.xlu0 %811
      %v813 = vsel %vm466, %v809, 0.0
      %814 = vadd.xlane.f32.xlu0 %v813
      %v815 = vpop.xlane.xlu0 %814
      %v816 = vmul.f32 %v812, %v578
      %v817 = vmul.f32 %v815, %v578
      %820 = vrot.lane.b32.xlu0 %v816, 120
      %v821 = vpop.permute.xlu0 %820
      %822 = vrot.lane.b32.xlu0 %v817, 120
      %v823 = vpop.permute.xlu0 %822
      %v826 = vadd.f32 %v806, %v821
      %v827 = vadd.f32 %v807, %v823
      %v828 = vmul.f32 %v720, %v303
      %v829 = vmul.f32 %v721, %v304
      %v830 = vsel %vm466, %v828, 0.0
      %831 = vadd.xlane.f32.xlu0 %v830
      %v832 = vpop.xlane.xlu0 %831
      %v833 = vsel %vm466, %v829, 0.0
      %834 = vadd.xlane.f32.xlu0 %v833
      %v835 = vpop.xlane.xlu0 %834
      %v836 = vmul.f32 %v832, %v594
      %v837 = vmul.f32 %v835, %v594
      %840 = vrot.lane.b32.xlu0 %v836, 120
      %v841 = vpop.permute.xlu0 %840
      %842 = vrot.lane.b32.xlu0 %v837, 120
      %v843 = vpop.permute.xlu0 %842
      %v846 = vadd.f32 %v826, %v841
      %v847 = vadd.f32 %v827, %v843
      %850 = vrot.lane.b32.xlu0 %v846, 8
      %v851 = vpop.permute.xlu0 %850
      %852 = vrot.lane.b32.xlu0 %v847, 8
      %v853 = vpop.permute.xlu0 %852
      %v856 = vsel %vm314, %v597, %v851
      %v857 = vsel %vm314, %v598, %v853
      %v858 = vlaneseq
      %v859 = vshrl.u32 %v858, 7
      %v860 = vsub.s32 5, %v859
      %v861 = vrot.slane %v306, %v860
      %v862 = vmul.f32 %v856, %v861
      %v863 = vmul.f32 %v857, %v861
      %v864 = vlaneseq
      %v865 = vshrl.u32 %v864, 7
      %v866 = vsub.s32 6, %v865
      %v867 = vrot.slane %v306, %v866
      %869 = vrot.lane.b32.xlu0 %v867, 48
      %v870 = vpop.permute.xlu0 %869
      %v872 = vmul.f32 %v357, %v870
      %v873 = vmul.f32 %v360, %v870
      %876 = vrot.lane.b32.xlu0 %v872, 80
      %v877 = vpop.permute.xlu0 %876
      %878 = vrot.lane.b32.xlu0 %v873, 80
      %v879 = vpop.permute.xlu0 %878
      %v882 = vadd.f32 %v862, %v877
      %v883 = vadd.f32 %v863, %v879
      %v884 = vsel %vm466, %v882, 0.0
      %885 = vadd.xlane.f32.xlu0 %v884
      %v886 = vpop.xlane.xlu0 %885
      %v887 = vsel %vm466, %v883, 0.0
      %888 = vadd.xlane.f32.xlu0 %v887
      %v889 = vpop.xlane.xlu0 %888
      %v890 = vxor.u32 %v886, 2147483648
      %v891 = vxor.u32 %v889, 2147483648
      %v892 = vmul.f32 %v890, 1.442695
      %v893 = vpow.pop %v892
      %v894 = vmul.f32 %v891, 1.442695
      %v895 = vpow.pop %v894
      %v896 = vadd.f32 %v893, 1.0
      %v897 = vadd.f32 %v895, 1.0
      %v898 = vrcp.pop %v896
      %v899 = vmul.f32 1.0, %v898
      %v900 = vrcp.pop %v897
      %v901 = vmul.f32 1.0, %v900
      %v902 = vmul.f32 %v899, %v357
      %v903 = vmul.f32 %v901, %v360
      %v904 = vsub.f32 1.0, %v899
      %v905 = vsub.f32 1.0, %v901
      %v906 = vmul.f32 %v904, %v856
      %v907 = vmul.f32 %v905, %v857
      %910 = vrot.lane.b32.xlu0 %v906, 48
      %v911 = vpop.permute.xlu0 %910
      %912 = vrot.lane.b32.xlu0 %v907, 48
      %v913 = vpop.permute.xlu0 %912
      %v916 = vadd.f32 %v902, %v911
      %v917 = vadd.f32 %v903, %v913
      %920 = vrot.lane.b32.xlu0 %v916, 80
      %v921 = vpop.permute.xlu0 %920
      %922 = vrot.lane.b32.xlu0 %v917, 80
      %v923 = vpop.permute.xlu0 %922
      %v926 = vsel %vm466, %v921, 0.0
      %927 = vadd.xlane.f32.xlu0 %v926
      %v928 = vpop.xlane.xlu0 %927
      %v929 = vsel %vm466, %v923, 0.0
      %930 = vadd.xlane.f32.xlu0 %v929
      %v931 = vpop.xlane.xlu0 %930
      %v932 = vrcp.pop 16.0
      %v933 = vmul.f32 %v928, %v932
      %v934 = vmul.f32 %v931, %v932
      %v935 = vsub.f32 %v916, %v933
      %v936 = vsub.f32 %v917, %v934
      %v937 = vmul.f32 %v935, %v935
      %v938 = vmul.f32 %v936, %v936
      %941 = vrot.lane.b32.xlu0 %v937, 80
      %v942 = vpop.permute.xlu0 %941
      %943 = vrot.lane.b32.xlu0 %v938, 80
      %v944 = vpop.permute.xlu0 %943
      %v947 = vsel %vm466, %v942, 0.0
      %948 = vadd.xlane.f32.xlu0 %v947
      %v949 = vpop.xlane.xlu0 %948
      %v950 = vsel %vm466, %v944, 0.0
      %951 = vadd.xlane.f32.xlu0 %v950
      %v952 = vpop.xlane.xlu0 %951
      %v953 = vmul.f32 %v949, %v932
      %v954 = vmul.f32 %v952, %v932
      %v955 = vadd.f32 %v953, 1e-05
      %v956 = vadd.f32 %v954, 1e-05
      %v957 = vrsqrt.pop %v955
      %v958 = vrsqrt.pop %v956
      %v959 = vmul.f32 %v935, %v957
      %v960 = vmul.f32 %v936, %v958
      %v961 = vlaneseq
      %v962 = vshrl.u32 %v961, 7
      %v963 = vsub.s32 7, %v962
      %v964 = vrot.slane %v306, %v963
      %966 = vrot.lane.b32.xlu0 %v964, 48
      %v967 = vpop.permute.xlu0 %966
      %v969 = vmul.f32 %v959, %v967
      %v970 = vmul.f32 %v960, %v967
      %v971 = vlaneseq
      %v972 = vshrl.u32 %v971, 7
      %v973 = vsub.s32 0, %v972
      %v974 = vrot.slane %v307, %v973
      %976 = vrot.lane.b32.xlu0 %v974, 48
      %v977 = vpop.permute.xlu0 %976
      %v979 = vadd.f32 %v969, %v977
      %v980 = vadd.f32 %v970, %v977
      %v981 = vld [vmem:[%s4] sm:$0xff]
      %v982 = vld [vmem:[%s4 + $0x8] sm:$0xff]
      %v983 = vld [vmem:[%s4 + $0x10] sm:$0xff]
      %v984 = vld [vmem:[%s4 + $0x18] sm:$0x7]
      %v985 = vpack.c.bf16 %v980, %v979
      %v986 = vpack.c.bf16 %v982, %v981
      %v987 = vlaneseq
      %v988 = vshrl.u32 %v987, 7
      %v989 = vsub.s32 0, %v988
      %v990 = vrot.slane %v983, %v989
      %992 = vrot.lane.b32.xlu0 %v985, 80
      %v993 = vpop.permute.xlu0 %992
      %v995 = vsel %vm466, %v993, 0
      %997 = vmatprep.subr.bf16.mxu0 0
      %998 = vmatpush1.bf16.msra.mxu0 %v986
      %999 = vmatprep.subr.bf16.mxu0 0
      %1000 = vmatpush1.bf16.msra.mxu0 0
      %1001 = vmatprep.subr.bf16.mxu0 0
      %1002 = vmatpush1.bf16.msra.mxu0 0
      %1003 = vmatprep.subr.bf16.mxu0 0
      %1004 = vmatpush1.bf16.msra.mxu0 0
      %1005 = vmatprep.subr.bf16.mxu0 0
      %1006 = vmatpush1.bf16.msra.mxu0 0
      %1007 = vmatprep.subr.bf16.mxu0 0
      %1008 = vmatpush1.bf16.msra.mxu0 0
      %1009 = vmatprep.subr.bf16.mxu0 0
      %1010 = vmatpush1.bf16.msra.mxu0 0
      %1011 = vmatprep.subr.bf16.mxu0 0
      %1012 = vmatpush1.bf16.msra.mxu0 0
      %1013 = vmatprep.subr.bf16.mxu0 0
      %1014 = vmatpush1.bf16.msra.mxu0 0
      %1015 = vmatprep.subr.bf16.mxu0 0
      %1016 = vmatpush1.bf16.msra.mxu0 0
      %1017 = vmatprep.subr.bf16.mxu0 0
      %1018 = vmatpush1.bf16.msra.mxu0 0
      %1019 = vmatprep.subr.bf16.mxu0 0
      %1020 = vmatpush1.bf16.msra.mxu0 0
      %1021 = vmatprep.subr.bf16.mxu0 0
      %1022 = vmatpush1.bf16.msra.mxu0 0
      %1023 = vmatprep.subr.bf16.mxu0 0
      %1024 = vmatpush1.bf16.msra.mxu0 0
      %1025 = vmatprep.subr.bf16.mxu0 0
      %1026 = vmatpush1.bf16.msra.mxu0 0
      %1027 = vmatprep.subr.bf16.mxu0 0
      %1028 = vmatpush1.bf16.msra.mxu0 0
      %1029 = vmatprep.mubr.bf16.mxu0 0
      %1030 = vmatmul.mubr.bf16.gmra.mrb[0].mxu0 %v995
      %v1031 = vpop.f32.mrb[0].mxu0
      %v1032 = vadd.f32 %v990, %v1031
      %v1033 = vpop.f32.mrb[0].mxu0
      %v1034 = vpop.f32.mrb[0].mxu0
      %v1035 = vadd.f32 %v990, %v1034
      %v1036 = vpop.f32.mrb[0].mxu0
      %1037 = vdwg.mxu0
      %v1038 = vpack.c.bf16 %v1035, %v1032
      %1040 = vset.pattern.permute.xlu0 64
      %1041 = vperm.xlu0 %1040, %v1032
      %v1042 = vpop.permute.xlu0 %1041
      %1045 = vset.pattern.permute.xlu0 64
      %1046 = vperm.xlu0 %1045, %v1035
      %v1047 = vpop.permute.xlu0 %1046
      %v1049 = vmul.f32 %v1042, %v297
      %v1050 = vmul.f32 %v1047, %v298
      %1052 = vrot.lane.b32.xlu0 %v1038, 112
      %v1053 = vpop.permute.xlu0 %1052
      %v1055 = vsel %vm314, %v1038, 0
      %v1058 = vsel %vm314, %v1053, 0
      %1060 = vmatprep.subr.bf16.mxu0 0
      %1061 = vmatpush1.bf16.xpose.msra.mxu0 %v1058
      %1062 = vmatprep.subr.bf16.mxu0 0
      %1063 = vmatpush1.bf16.xpose.msra.mxu0 0
      %1064 = vmatprep.subr.bf16.mxu0 0
      %1065 = vmatpush1.bf16.xpose.msra.mxu0 0
      %1066 = vmatprep.subr.bf16.mxu0 0
      %1067 = vmatpush1.bf16.xpose.msra.mxu0 0
      %1068 = vmatprep.subr.bf16.mxu0 0
      %1069 = vmatpush1.bf16.xpose.msra.mxu0 0
      %1070 = vmatprep.subr.bf16.mxu0 0
      %1071 = vmatpush1.bf16.xpose.msra.mxu0 0
      %1072 = vmatprep.subr.bf16.mxu0 0
      %1073 = vmatpush1.bf16.xpose.msra.mxu0 0
      %1074 = vmatprep.subr.bf16.mxu0 0
      %1075 = vmatpush1.bf16.xpose.msra.mxu0 0
      %1076 = vmatprep.subr.bf16.mxu0 0
      %1077 = vmatpush1.bf16.xpose.msra.mxu0 0
      %1078 = vmatprep.subr.bf16.mxu0 0
      %1079 = vmatpush1.bf16.xpose.msra.mxu0 0
      %1080 = vmatprep.subr.bf16.mxu0 0
      %1081 = vmatpush1.bf16.xpose.msra.mxu0 0
      %1082 = vmatprep.subr.bf16.mxu0 0
      %1083 = vmatpush1.bf16.xpose.msra.mxu0 0
      %1084 = vmatprep.subr.bf16.mxu0 0
      %1085 = vmatpush1.bf16.xpose.msra.mxu0 0
      %1086 = vmatprep.subr.bf16.mxu0 0
      %1087 = vmatpush1.bf16.xpose.msra.mxu0 0
      %1088 = vmatprep.subr.bf16.mxu0 0
      %1089 = vmatpush1.bf16.xpose.msra.mxu0 0
      %1090 = vmatprep.subr.bf16.mxu0 0
      %1091 = vmatpush1.bf16.xpose.msra.mxu0 0
      %1092 = vmatprep.mubr.bf16.mxu0 0
      %1093 = vmatmul.mubr.bf16.gmra.mrb[0].mxu0 %v1055
      %v1094 = vpop.f32.mrb[0].mxu0
      %v1095 = vadd.f32 %v1049, %v1094
      %v1096 = vpop.f32.mrb[0].mxu0
      %v1097 = vpop.f32.mrb[0].mxu0
      %v1098 = vadd.f32 %v1050, %v1097
      %v1099 = vpop.f32.mrb[0].mxu0
      %1100 = vdwg.mxu0
      %1101 = vset.pattern.permute.xlu0 65
      %1102 = vperm.xlu0 %1101, %v1032
      %v1103 = vpop.permute.xlu0 %1102
      %1105 = vset.pattern.permute.xlu0 65
      %1106 = vperm.xlu0 %1105, %v1035
      %v1107 = vpop.permute.xlu0 %1106
      %v1109 = vmul.f32 %v1103, %v299
      %v1110 = vmul.f32 %v1107, %v300
      %v1111 = vadd.f32 %v1095, %v1109
      %v1112 = vadd.f32 %v1098, %v1110
      %1113 = vset.pattern.permute.xlu0 66
      %1114 = vperm.xlu0 %1113, %v1032
      %v1115 = vpop.permute.xlu0 %1114
      %1117 = vset.pattern.permute.xlu0 66
      %1118 = vperm.xlu0 %1117, %v1035
      %v1119 = vpop.permute.xlu0 %1118
      %v1121 = vmul.f32 %v1115, %v301
      %v1122 = vmul.f32 %v1119, %v302
      %v1123 = vadd.f32 %v1111, %v1121
      %v1124 = vadd.f32 %v1112, %v1122
      %1125 = vset.pattern.permute.xlu0 67
      %1126 = vperm.xlu0 %1125, %v1032
      %v1127 = vpop.permute.xlu0 %1126
      %1129 = vset.pattern.permute.xlu0 67
      %1130 = vperm.xlu0 %1129, %v1035
      %v1131 = vpop.permute.xlu0 %1130
      %v1133 = vmul.f32 %v1127, %v303
      %v1134 = vmul.f32 %v1131, %v304
      %v1135 = vadd.f32 %v1123, %v1133
      %v1136 = vadd.f32 %v1124, %v1134
      %1137 = vset.pattern.permute.xlu0 68
      %1138 = vperm.xlu0 %1137, %v1032
      %v1139 = vpop.permute.xlu0 %1138
      %1141 = vset.pattern.permute.xlu0 68
      %1142 = vperm.xlu0 %1141, %v1035
      %v1143 = vpop.permute.xlu0 %1142
      %v1145 = vmul.f32 %v1139, %v487
      %v1146 = vmul.f32 %v1143, %v488
      %v1147 = vadd.f32 %v1135, %v1145
      %v1148 = vadd.f32 %v1136, %v1146
      %1149 = vset.pattern.permute.xlu0 69
      %1150 = vperm.xlu0 %1149, %v1032
      %v1151 = vpop.permute.xlu0 %1150
      %1153 = vset.pattern.permute.xlu0 69
      %1154 = vperm.xlu0 %1153, %v1035
      %v1155 = vpop.permute.xlu0 %1154
      %v1157 = vmul.f32 %v1151, %v720
      %v1158 = vmul.f32 %v1155, %v721
      %v1159 = vadd.f32 %v1147, %v1157
      %v1160 = vadd.f32 %v1148, %v1158
      %v1161 = vmul.f32 %v1159, 0.35355338
      %v1162 = vmul.f32 %v1160, 0.35355338
      %v1163 = vadd.f32 %v1161, %v295
      %v1164 = vadd.f32 %v1162, %v296
      %v1165 = vsel %vm466, %v1163, -inf
      %1166 = vmax.xlane.f32.xlu0 %v1165
      %v1167 = vpop.xlane.xlu0 %1166
      %v1168 = vsel %vm466, %v1164, -inf
      %1169 = vmax.xlane.f32.xlu0 %v1168
      %v1170 = vpop.xlane.xlu0 %1169
      %v1171 = vsub.f32 %v1163, %v1167
      %v1172 = vsub.f32 %v1164, %v1170
      %v1173 = vmul.f32 %v1171, 1.442695
      %v1174 = vpow.pop %v1173
      %v1175 = vmul.f32 %v1172, 1.442695
      %v1176 = vpow.pop %v1175
      %v1177 = vsel %vm466, %v1174, 0.0
      %1178 = vadd.xlane.f32.xlu0 %v1177
      %v1179 = vpop.xlane.xlu0 %1178
      %v1180 = vsel %vm466, %v1176, 0.0
      %1181 = vadd.xlane.f32.xlu0 %v1180
      %v1182 = vpop.xlane.xlu0 %1181
      %v1183 = vrcp.pop %v1179
      %v1184 = vrcp.pop %v1182
      %v1185 = vmul.f32 %v1174, %v1183
      %v1186 = vmul.f32 %v1176, %v1184
      %v1187 = vpack.c.bf16 %v1186, %v1185
      %v1188 = vmul.f32 %v1185, %v297
      %v1189 = vmul.f32 %v1186, %v298
      %v1190 = vsel %vm466, %v1188, 0.0
      %1191 = vadd.xlane.f32.xlu0 %v1190
      %v1192 = vpop.xlane.xlu0 %1191
      %v1193 = vsel %vm466, %v1189, 0.0
      %1194 = vadd.xlane.f32.xlu0 %v1193
      %v1195 = vpop.xlane.xlu0 %1194
      %v1196 = vlaneseq
      %v1197 = vshrl.u32 %v1196, 7
      %v1198 = vsub.s32 1, %v1197
      %v1199 = vrot.slane %v983, %v1198
      %v1200 = vmul.f32 %v1192, %v1199
      %v1201 = vmul.f32 %v1195, %v1199
      %1202 = vrot.lane.b32.xlu0 %v1038, 96
      %v1203 = vpop.permute.xlu0 %1202
      %v1206 = vsel %vm466, %v1187, 0
      %1208 = vmatprep.subr.bf16.mxu0 0
      %1209 = vmatpush1.bf16.msra.mxu0 %v1203
      %1210 = vmatprep.subr.bf16.mxu0 0
      %1211 = vmatpush1.bf16.msra.mxu0 0
      %1212 = vmatprep.subr.bf16.mxu0 0
      %1213 = vmatpush1.bf16.msra.mxu0 0
      %1214 = vmatprep.subr.bf16.mxu0 0
      %1215 = vmatpush1.bf16.msra.mxu0 0
      %1216 = vmatprep.subr.bf16.mxu0 0
      %1217 = vmatpush1.bf16.msra.mxu0 0
      %1218 = vmatprep.subr.bf16.mxu0 0
      %1219 = vmatpush1.bf16.msra.mxu0 0
      %1220 = vmatprep.subr.bf16.mxu0 0
      %1221 = vmatpush1.bf16.msra.mxu0 0
      %1222 = vmatprep.subr.bf16.mxu0 0
      %1223 = vmatpush1.bf16.msra.mxu0 0
      %1224 = vmatprep.subr.bf16.mxu0 0
      %1225 = vmatpush1.bf16.msra.mxu0 0
      %1226 = vmatprep.subr.bf16.mxu0 0
      %1227 = vmatpush1.bf16.msra.mxu0 0
      %1228 = vmatprep.subr.bf16.mxu0 0
      %1229 = vmatpush1.bf16.msra.mxu0 0
      %1230 = vmatprep.subr.bf16.mxu0 0
      %1231 = vmatpush1.bf16.msra.mxu0 0
      %1232 = vmatprep.subr.bf16.mxu0 0
      %1233 = vmatpush1.bf16.msra.mxu0 0
      %1234 = vmatprep.subr.bf16.mxu0 0
      %1235 = vmatpush1.bf16.msra.mxu0 0
      %1236 = vmatprep.subr.bf16.mxu0 0
      %1237 = vmatpush1.bf16.msra.mxu0 0
      %1238 = vmatprep.subr.bf16.mxu0 0
      %1239 = vmatpush1.bf16.msra.mxu0 0
      %1240 = vmatprep.mubr.bf16.mxu0 0
      %1241 = vmatmul.mubr.bf16.gmra.mrb[0].mxu0 %v1206
      %v1242 = vpop.f32.mrb[0].mxu0
      %v1243 = vadd.f32 %v1200, %v1242
      %v1244 = vpop.f32.mrb[0].mxu0
      %v1245 = vpop.f32.mrb[0].mxu0
      %v1246 = vadd.f32 %v1201, %v1245
      %v1247 = vpop.f32.mrb[0].mxu0
      %1248 = vdwg.mxu0
      %v1249 = vmul.f32 %v1185, %v299
      %v1250 = vmul.f32 %v1186, %v300
      %v1251 = vsel %vm466, %v1249, 0.0
      %1252 = vadd.xlane.f32.xlu0 %v1251
      %v1253 = vpop.xlane.xlu0 %1252
      %v1254 = vsel %vm466, %v1250, 0.0
      %1255 = vadd.xlane.f32.xlu0 %v1254
      %v1256 = vpop.xlane.xlu0 %1255
      %v1257 = vlaneseq
      %v1258 = vshrl.u32 %v1257, 7
      %v1259 = vsub.s32 2, %v1258
      %v1260 = vrot.slane %v983, %v1259
      %v1261 = vmul.f32 %v1253, %v1260
      %v1262 = vmul.f32 %v1256, %v1260
      %v1263 = vadd.f32 %v1243, %v1261
      %v1264 = vadd.f32 %v1246, %v1262
      %v1265 = vmul.f32 %v1185, %v301
      %v1266 = vmul.f32 %v1186, %v302
      %v1267 = vsel %vm466, %v1265, 0.0
      %1268 = vadd.xlane.f32.xlu0 %v1267
      %v1269 = vpop.xlane.xlu0 %1268
      %v1270 = vsel %vm466, %v1266, 0.0
      %1271 = vadd.xlane.f32.xlu0 %v1270
      %v1272 = vpop.xlane.xlu0 %1271
      %v1273 = vlaneseq
      %v1274 = vshrl.u32 %v1273, 7
      %v1275 = vsub.s32 3, %v1274
      %v1276 = vrot.slane %v983, %v1275
      %v1277 = vmul.f32 %v1269, %v1276
      %v1278 = vmul.f32 %v1272, %v1276
      %v1279 = vadd.f32 %v1263, %v1277
      %v1280 = vadd.f32 %v1264, %v1278
      %v1281 = vmul.f32 %v1185, %v303
      %v1282 = vmul.f32 %v1186, %v304
      %v1283 = vsel %vm466, %v1281, 0.0
      %1284 = vadd.xlane.f32.xlu0 %v1283
      %v1285 = vpop.xlane.xlu0 %1284
      %v1286 = vsel %vm466, %v1282, 0.0
      %1287 = vadd.xlane.f32.xlu0 %v1286
      %v1288 = vpop.xlane.xlu0 %1287
      %v1289 = vlaneseq
      %v1290 = vshrl.u32 %v1289, 7
      %v1291 = vsub.s32 4, %v1290
      %v1292 = vrot.slane %v983, %v1291
      %v1293 = vmul.f32 %v1285, %v1292
      %v1294 = vmul.f32 %v1288, %v1292
      %v1295 = vadd.f32 %v1279, %v1293
      %v1296 = vadd.f32 %v1280, %v1294
      %v1297 = vmul.f32 %v1185, %v487
      %v1298 = vmul.f32 %v1186, %v488
      %v1299 = vsel %vm466, %v1297, 0.0
      %1300 = vadd.xlane.f32.xlu0 %v1299
      %v1301 = vpop.xlane.xlu0 %1300
      %v1302 = vsel %vm466, %v1298, 0.0
      %1303 = vadd.xlane.f32.xlu0 %v1302
      %v1304 = vpop.xlane.xlu0 %1303
      %v1305 = vlaneseq
      %v1306 = vshrl.u32 %v1305, 7
      %v1307 = vsub.s32 5, %v1306
      %v1308 = vrot.slane %v983, %v1307
      %v1309 = vmul.f32 %v1301, %v1308
      %v1310 = vmul.f32 %v1304, %v1308
      %v1311 = vadd.f32 %v1295, %v1309
      %v1312 = vadd.f32 %v1296, %v1310
      %v1313 = vmul.f32 %v1185, %v720
      %v1314 = vmul.f32 %v1186, %v721
      %v1315 = vsel %vm466, %v1313, 0.0
      %1316 = vadd.xlane.f32.xlu0 %v1315
      %v1317 = vpop.xlane.xlu0 %1316
      %v1318 = vsel %vm466, %v1314, 0.0
      %1319 = vadd.xlane.f32.xlu0 %v1318
      %v1320 = vpop.xlane.xlu0 %1319
      %v1321 = vlaneseq
      %v1322 = vshrl.u32 %v1321, 7
      %v1323 = vsub.s32 6, %v1322
      %v1324 = vrot.slane %v983, %v1323
      %v1325 = vmul.f32 %v1317, %v1324
      %v1326 = vmul.f32 %v1320, %v1324
      %v1327 = vadd.f32 %v1311, %v1325
      %v1328 = vadd.f32 %v1312, %v1326
      %1329 = vset.pattern.permute.xlu0 70
      %1330 = vperm.xlu0 %1329, %v1032
      %v1331 = vpop.permute.xlu0 %1330
      %1333 = vset.pattern.permute.xlu0 70
      %1334 = vperm.xlu0 %1333, %v1035
      %v1335 = vpop.permute.xlu0 %1334
      %v1337 = vmul.f32 %v1331, %v297
      %v1338 = vmul.f32 %v1335, %v298
      %1339 = vrot.lane.b32.xlu0 %v1038, 120
      %v1340 = vpop.permute.xlu0 %1339
      %1341 = vrot.lane.b32.xlu0 %v1038, 104
      %v1342 = vpop.permute.xlu0 %1341
      %v1344 = vsel %vm314, %v1340, 0
      %v1347 = vsel %vm314, %v1342, 0
      %1349 = vmatprep.subr.bf16.mxu0 0
      %1350 = vmatpush1.bf16.xpose.msra.mxu0 %v1347
      %1351 = vmatprep.subr.bf16.mxu0 0
      %1352 = vmatpush1.bf16.xpose.msra.mxu0 0
      %1353 = vmatprep.subr.bf16.mxu0 0
      %1354 = vmatpush1.bf16.xpose.msra.mxu0 0
      %1355 = vmatprep.subr.bf16.mxu0 0
      %1356 = vmatpush1.bf16.xpose.msra.mxu0 0
      %1357 = vmatprep.subr.bf16.mxu0 0
      %1358 = vmatpush1.bf16.xpose.msra.mxu0 0
      %1359 = vmatprep.subr.bf16.mxu0 0
      %1360 = vmatpush1.bf16.xpose.msra.mxu0 0
      %1361 = vmatprep.subr.bf16.mxu0 0
      %1362 = vmatpush1.bf16.xpose.msra.mxu0 0
      %1363 = vmatprep.subr.bf16.mxu0 0
      %1364 = vmatpush1.bf16.xpose.msra.mxu0 0
      %1365 = vmatprep.subr.bf16.mxu0 0
      %1366 = vmatpush1.bf16.xpose.msra.mxu0 0
      %1367 = vmatprep.subr.bf16.mxu0 0
      %1368 = vmatpush1.bf16.xpose.msra.mxu0 0
      %1369 = vmatprep.subr.bf16.mxu0 0
      %1370 = vmatpush1.bf16.xpose.msra.mxu0 0
      %1371 = vmatprep.subr.bf16.mxu0 0
      %1372 = vmatpush1.bf16.xpose.msra.mxu0 0
      %1373 = vmatprep.subr.bf16.mxu0 0
      %1374 = vmatpush1.bf16.xpose.msra.mxu0 0
      %1375 = vmatprep.subr.bf16.mxu0 0
      %1376 = vmatpush1.bf16.xpose.msra.mxu0 0
      %1377 = vmatprep.subr.bf16.mxu0 0
      %1378 = vmatpush1.bf16.xpose.msra.mxu0 0
      %1379 = vmatprep.subr.bf16.mxu0 0
      %1380 = vmatpush1.bf16.xpose.msra.mxu0 0
      %1381 = vmatprep.mubr.bf16.mxu0 0
      %1382 = vmatmul.mubr.bf16.gmra.mrb[0].mxu0 %v1344
      %v1383 = vpop.f32.mrb[0].mxu0
      %v1384 = vadd.f32 %v1337, %v1383
      %v1385 = vpop.f32.mrb[0].mxu0
      %v1386 = vpop.f32.mrb[0].mxu0
      %v1387 = vadd.f32 %v1338, %v1386
      %v1388 = vpop.f32.mrb[0].mxu0
      %1389 = vdwg.mxu0
      %1390 = vset.pattern.permute.xlu0 71
      %1391 = vperm.xlu0 %1390, %v1032
      %v1392 = vpop.permute.xlu0 %1391
      %1394 = vset.pattern.permute.xlu0 71
      %1395 = vperm.xlu0 %1394, %v1035
      %v1396 = vpop.permute.xlu0 %1395
      %v1398 = vmul.f32 %v1392, %v299
      %v1399 = vmul.f32 %v1396, %v300
      %v1400 = vadd.f32 %v1384, %v1398
      %v1401 = vadd.f32 %v1387, %v1399
      %1402 = vset.pattern.permute.xlu0 72
      %1403 = vperm.xlu0 %1402, %v1032
      %v1404 = vpop.permute.xlu0 %1403
      %1406 = vset.pattern.permute.xlu0 72
      %1407 = vperm.xlu0 %1406, %v1035
      %v1408 = vpop.permute.xlu0 %1407
      %v1410 = vmul.f32 %v1404, %v301
      %v1411 = vmul.f32 %v1408, %v302
      %v1412 = vadd.f32 %v1400, %v1410
      %v1413 = vadd.f32 %v1401, %v1411
      %1414 = vset.pattern.permute.xlu0 73
      %1415 = vperm.xlu0 %1414, %v1032
      %v1416 = vpop.permute.xlu0 %1415
      %1418 = vset.pattern.permute.xlu0 73
      %1419 = vperm.xlu0 %1418, %v1035
      %v1420 = vpop.permute.xlu0 %1419
      %v1422 = vmul.f32 %v1416, %v303
      %v1423 = vmul.f32 %v1420, %v304
      %v1424 = vadd.f32 %v1412, %v1422
      %v1425 = vadd.f32 %v1413, %v1423
      %1426 = vset.pattern.permute.xlu0 74
      %1427 = vperm.xlu0 %1426, %v1032
      %v1428 = vpop.permute.xlu0 %1427
      %1430 = vset.pattern.permute.xlu0 74
      %1431 = vperm.xlu0 %1430, %v1035
      %v1432 = vpop.permute.xlu0 %1431
      %v1434 = vmul.f32 %v1428, %v487
      %v1435 = vmul.f32 %v1432, %v488
      %v1436 = vadd.f32 %v1424, %v1434
      %v1437 = vadd.f32 %v1425, %v1435
      %1438 = vset.pattern.permute.xlu0 75
      %1439 = vperm.xlu0 %1438, %v1032
      %v1440 = vpop.permute.xlu0 %1439
      %1442 = vset.pattern.permute.xlu0 75
      %1443 = vperm.xlu0 %1442, %v1035
      %v1444 = vpop.permute.xlu0 %1443
      %v1446 = vmul.f32 %v1440, %v720
      %v1447 = vmul.f32 %v1444, %v721
      %v1448 = vadd.f32 %v1436, %v1446
      %v1449 = vadd.f32 %v1437, %v1447
      %v1450 = vmul.f32 %v1448, 0.35355338
      %v1451 = vmul.f32 %v1449, 0.35355338
      %v1452 = vadd.f32 %v1450, %v295
      %v1453 = vadd.f32 %v1451, %v296
      %v1454 = vsel %vm466, %v1452, -inf
      %1455 = vmax.xlane.f32.xlu0 %v1454
      %v1456 = vpop.xlane.xlu0 %1455
      %v1457 = vsel %vm466, %v1453, -inf
      %1458 = vmax.xlane.f32.xlu0 %v1457
      %v1459 = vpop.xlane.xlu0 %1458
      %v1460 = vsub.f32 %v1452, %v1456
      %v1461 = vsub.f32 %v1453, %v1459
      %v1462 = vmul.f32 %v1460, 1.442695
      %v1463 = vpow.pop %v1462
      %v1464 = vmul.f32 %v1461, 1.442695
      %v1465 = vpow.pop %v1464
      %v1466 = vsel %vm466, %v1463, 0.0
      %1467 = vadd.xlane.f32.xlu0 %v1466
      %v1468 = vpop.xlane.xlu0 %1467
      %v1469 = vsel %vm466, %v1465, 0.0
      %1470 = vadd.xlane.f32.xlu0 %v1469
      %v1471 = vpop.xlane.xlu0 %1470
      %v1472 = vrcp.pop %v1468
      %v1473 = vrcp.pop %v1471
      %v1474 = vmul.f32 %v1463, %v1472
      %v1475 = vmul.f32 %v1465, %v1473
      %v1476 = vpack.c.bf16 %v1475, %v1474
      %v1477 = vmul.f32 %v1474, %v297
      %v1478 = vmul.f32 %v1475, %v298
      %v1479 = vsel %vm466, %v1477, 0.0
      %1480 = vadd.xlane.f32.xlu0 %v1479
      %v1481 = vpop.xlane.xlu0 %1480
      %v1482 = vsel %vm466, %v1478, 0.0
      %1483 = vadd.xlane.f32.xlu0 %v1482
      %v1484 = vpop.xlane.xlu0 %1483
      %v1485 = vmul.f32 %v1481, %v1199
      %v1486 = vmul.f32 %v1484, %v1199
      %1487 = vrot.lane.b32.xlu0 %v1038, 88
      %v1488 = vpop.permute.xlu0 %1487
      %1492 = vrot.lane.b32.xlu0 %v1485, 120
      %v1493 = vpop.permute.xlu0 %1492
      %1494 = vrot.lane.b32.xlu0 %v1486, 120
      %v1495 = vpop.permute.xlu0 %1494
      %v1499 = vsel %vm466, %v1476, 0
      %1501 = vmatprep.subr.bf16.mxu0 0
      %1502 = vmatpush1.bf16.msra.mxu0 %v1488
      %1503 = vmatprep.subr.bf16.mxu0 0
      %1504 = vmatpush1.bf16.msra.mxu0 0
      %1505 = vmatprep.subr.bf16.mxu0 0
      %1506 = vmatpush1.bf16.msra.mxu0 0
      %1507 = vmatprep.subr.bf16.mxu0 0
      %1508 = vmatpush1.bf16.msra.mxu0 0
      %1509 = vmatprep.subr.bf16.mxu0 0
      %1510 = vmatpush1.bf16.msra.mxu0 0
      %1511 = vmatprep.subr.bf16.mxu0 0
      %1512 = vmatpush1.bf16.msra.mxu0 0
      %1513 = vmatprep.subr.bf16.mxu0 0
      %1514 = vmatpush1.bf16.msra.mxu0 0
      %1515 = vmatprep.subr.bf16.mxu0 0
      %1516 = vmatpush1.bf16.msra.mxu0 0
      %1517 = vmatprep.subr.bf16.mxu0 0
      %1518 = vmatpush1.bf16.msra.mxu0 0
      %1519 = vmatprep.subr.bf16.mxu0 0
      %1520 = vmatpush1.bf16.msra.mxu0 0
      %1521 = vmatprep.subr.bf16.mxu0 0
      %1522 = vmatpush1.bf16.msra.mxu0 0
      %1523 = vmatprep.subr.bf16.mxu0 0
      %1524 = vmatpush1.bf16.msra.mxu0 0
      %1525 = vmatprep.subr.bf16.mxu0 0
      %1526 = vmatpush1.bf16.msra.mxu0 0
      %1527 = vmatprep.subr.bf16.mxu0 0
      %1528 = vmatpush1.bf16.msra.mxu0 0
      %1529 = vmatprep.subr.bf16.mxu0 0
      %1530 = vmatpush1.bf16.msra.mxu0 0
      %1531 = vmatprep.subr.bf16.mxu0 0
      %1532 = vmatpush1.bf16.msra.mxu0 0
      %1533 = vmatprep.mubr.bf16.mxu0 0
      %1534 = vmatmul.mubr.bf16.gmra.mrb[0].mxu0 %v1499
      %v1535 = vpop.f32.mrb[0].mxu0
      %v1536 = vadd.f32 %v1493, %v1535
      %v1537 = vpop.f32.mrb[0].mxu0
      %v1538 = vpop.f32.mrb[0].mxu0
      %v1539 = vadd.f32 %v1495, %v1538
      %v1540 = vpop.f32.mrb[0].mxu0
      %1541 = vdwg.mxu0
      %v1542 = vmul.f32 %v1474, %v299
      %v1543 = vmul.f32 %v1475, %v300
      %v1544 = vsel %vm466, %v1542, 0.0
      %1545 = vadd.xlane.f32.xlu0 %v1544
      %v1546 = vpop.xlane.xlu0 %1545
      %v1547 = vsel %vm466, %v1543, 0.0
      %1548 = vadd.xlane.f32.xlu0 %v1547
      %v1549 = vpop.xlane.xlu0 %1548
      %v1550 = vmul.f32 %v1546, %v1260
      %v1551 = vmul.f32 %v1549, %v1260
      %1554 = vrot.lane.b32.xlu0 %v1550, 120
      %v1555 = vpop.permute.xlu0 %1554
      %1556 = vrot.lane.b32.xlu0 %v1551, 120
      %v1557 = vpop.permute.xlu0 %1556
      %v1560 = vadd.f32 %v1536, %v1555
      %v1561 = vadd.f32 %v1539, %v1557
      %v1562 = vmul.f32 %v1474, %v301
      %v1563 = vmul.f32 %v1475, %v302
      %v1564 = vsel %vm466, %v1562, 0.0
      %1565 = vadd.xlane.f32.xlu0 %v1564
      %v1566 = vpop.xlane.xlu0 %1565
      %v1567 = vsel %vm466, %v1563, 0.0
      %1568 = vadd.xlane.f32.xlu0 %v1567
      %v1569 = vpop.xlane.xlu0 %1568
      %v1570 = vmul.f32 %v1566, %v1276
      %v1571 = vmul.f32 %v1569, %v1276
      %1574 = vrot.lane.b32.xlu0 %v1570, 120
      %v1575 = vpop.permute.xlu0 %1574
      %1576 = vrot.lane.b32.xlu0 %v1571, 120
      %v1577 = vpop.permute.xlu0 %1576
      %v1580 = vadd.f32 %v1560, %v1575
      %v1581 = vadd.f32 %v1561, %v1577
      %v1582 = vmul.f32 %v1474, %v303
      %v1583 = vmul.f32 %v1475, %v304
      %v1584 = vsel %vm466, %v1582, 0.0
      %1585 = vadd.xlane.f32.xlu0 %v1584
      %v1586 = vpop.xlane.xlu0 %1585
      %v1587 = vsel %vm466, %v1583, 0.0
      %1588 = vadd.xlane.f32.xlu0 %v1587
      %v1589 = vpop.xlane.xlu0 %1588
      %v1590 = vmul.f32 %v1586, %v1292
      %v1591 = vmul.f32 %v1589, %v1292
      %1594 = vrot.lane.b32.xlu0 %v1590, 120
      %v1595 = vpop.permute.xlu0 %1594
      %1596 = vrot.lane.b32.xlu0 %v1591, 120
      %v1597 = vpop.permute.xlu0 %1596
      %v1600 = vadd.f32 %v1580, %v1595
      %v1601 = vadd.f32 %v1581, %v1597
      %v1602 = vmul.f32 %v1474, %v487
      %v1603 = vmul.f32 %v1475, %v488
      %v1604 = vsel %vm466, %v1602, 0.0
      %1605 = vadd.xlane.f32.xlu0 %v1604
      %v1606 = vpop.xlane.xlu0 %1605
      %v1607 = vsel %vm466, %v1603, 0.0
      %1608 = vadd.xlane.f32.xlu0 %v1607
      %v1609 = vpop.xlane.xlu0 %1608
      %v1610 = vmul.f32 %v1606, %v1308
      %v1611 = vmul.f32 %v1609, %v1308
      %1614 = vrot.lane.b32.xlu0 %v1610, 120
      %v1615 = vpop.permute.xlu0 %1614
      %1616 = vrot.lane.b32.xlu0 %v1611, 120
      %v1617 = vpop.permute.xlu0 %1616
      %v1620 = vadd.f32 %v1600, %v1615
      %v1621 = vadd.f32 %v1601, %v1617
      %v1622 = vmul.f32 %v1474, %v720
      %v1623 = vmul.f32 %v1475, %v721
      %v1624 = vsel %vm466, %v1622, 0.0
      %1625 = vadd.xlane.f32.xlu0 %v1624
      %v1626 = vpop.xlane.xlu0 %1625
      %v1627 = vsel %vm466, %v1623, 0.0
      %1628 = vadd.xlane.f32.xlu0 %v1627
      %v1629 = vpop.xlane.xlu0 %1628
      %v1630 = vmul.f32 %v1626, %v1324
      %v1631 = vmul.f32 %v1629, %v1324
      %1634 = vrot.lane.b32.xlu0 %v1630, 120
      %v1635 = vpop.permute.xlu0 %1634
      %1636 = vrot.lane.b32.xlu0 %v1631, 120
      %v1637 = vpop.permute.xlu0 %1636
      %v1640 = vadd.f32 %v1620, %v1635
      %v1641 = vadd.f32 %v1621, %v1637
      %1644 = vrot.lane.b32.xlu0 %v1640, 8
      %v1645 = vpop.permute.xlu0 %1644
      %1646 = vrot.lane.b32.xlu0 %v1641, 8
      %v1647 = vpop.permute.xlu0 %1646
      %v1650 = vsel %vm314, %v1327, %v1645
      %v1651 = vsel %vm314, %v1328, %v1647
      %v1652 = vlaneseq
      %v1653 = vshrl.u32 %v1652, 7
      %v1654 = vsub.s32 7, %v1653
      %v1655 = vrot.slane %v983, %v1654
      %v1656 = vmul.f32 %v1650, %v1655
      %v1657 = vmul.f32 %v1651, %v1655
      %v1658 = vlaneseq
      %v1659 = vshrl.u32 %v1658, 7
      %v1660 = vsub.s32 0, %v1659
      %v1661 = vrot.slane %v984, %v1660
      %1663 = vrot.lane.b32.xlu0 %v1661, 48
      %v1664 = vpop.permute.xlu0 %1663
      %v1666 = vmul.f32 %v1032, %v1664
      %v1667 = vmul.f32 %v1035, %v1664
      %1670 = vrot.lane.b32.xlu0 %v1666, 80
      %v1671 = vpop.permute.xlu0 %1670
      %1672 = vrot.lane.b32.xlu0 %v1667, 80
      %v1673 = vpop.permute.xlu0 %1672
      %v1676 = vadd.f32 %v1656, %v1671
      %v1677 = vadd.f32 %v1657, %v1673
      %v1678 = vsel %vm466, %v1676, 0.0
      %1679 = vadd.xlane.f32.xlu0 %v1678
      %v1680 = vpop.xlane.xlu0 %1679
      %v1681 = vsel %vm466, %v1677, 0.0
      %1682 = vadd.xlane.f32.xlu0 %v1681
      %v1683 = vpop.xlane.xlu0 %1682
      %v1684 = vxor.u32 %v1680, 2147483648
      %v1685 = vxor.u32 %v1683, 2147483648
      %v1686 = vmul.f32 %v1684, 1.442695
      %v1687 = vpow.pop %v1686
      %v1688 = vmul.f32 %v1685, 1.442695
      %v1689 = vpow.pop %v1688
      %v1690 = vadd.f32 %v1687, 1.0
      %v1691 = vadd.f32 %v1689, 1.0
      %v1692 = vrcp.pop %v1690
      %v1693 = vmul.f32 1.0, %v1692
      %v1694 = vrcp.pop %v1691
      %v1695 = vmul.f32 1.0, %v1694
      %v1696 = vmul.f32 %v1693, %v1032
      %v1697 = vmul.f32 %v1695, %v1035
      %v1698 = vsub.f32 1.0, %v1693
      %v1699 = vsub.f32 1.0, %v1695
      %v1700 = vmul.f32 %v1698, %v1650
      %v1701 = vmul.f32 %v1699, %v1651
      %1704 = vrot.lane.b32.xlu0 %v1700, 48
      %v1705 = vpop.permute.xlu0 %1704
      %1706 = vrot.lane.b32.xlu0 %v1701, 48
      %v1707 = vpop.permute.xlu0 %1706
      %v1710 = vadd.f32 %v1696, %v1705
      %v1711 = vadd.f32 %v1697, %v1707
      %1714 = vrot.lane.b32.xlu0 %v1710, 80
      %v1715 = vpop.permute.xlu0 %1714
      %1716 = vrot.lane.b32.xlu0 %v1711, 80
      %v1717 = vpop.permute.xlu0 %1716
      %v1720 = vsel %vm466, %v1715, 0.0
      %1721 = vadd.xlane.f32.xlu0 %v1720
      %v1722 = vpop.xlane.xlu0 %1721
      %v1723 = vsel %vm466, %v1717, 0.0
      %1724 = vadd.xlane.f32.xlu0 %v1723
      %v1725 = vpop.xlane.xlu0 %1724
      %v1726 = vmul.f32 %v1722, %v932
      %v1727 = vmul.f32 %v1725, %v932
      %v1728 = vsub.f32 %v1710, %v1726
      %v1729 = vsub.f32 %v1711, %v1727
      %v1730 = vmul.f32 %v1728, %v1728
      %v1731 = vmul.f32 %v1729, %v1729
      %1734 = vrot.lane.b32.xlu0 %v1730, 80
      %v1735 = vpop.permute.xlu0 %1734
      %1736 = vrot.lane.b32.xlu0 %v1731, 80
      %v1737 = vpop.permute.xlu0 %1736
      %v1740 = vsel %vm466, %v1735, 0.0
      %1741 = vadd.xlane.f32.xlu0 %v1740
      %v1742 = vpop.xlane.xlu0 %1741
      %v1743 = vsel %vm466, %v1737, 0.0
      %1744 = vadd.xlane.f32.xlu0 %v1743
      %v1745 = vpop.xlane.xlu0 %1744
      %v1746 = vmul.f32 %v1742, %v932
      %v1747 = vmul.f32 %v1745, %v932
      %v1748 = vadd.f32 %v1746, 1e-05
      %v1749 = vadd.f32 %v1747, 1e-05
      %v1750 = vrsqrt.pop %v1748
      %v1751 = vrsqrt.pop %v1749
      %v1752 = vmul.f32 %v1728, %v1750
      %v1753 = vmul.f32 %v1729, %v1751
      %v1754 = vlaneseq
      %v1755 = vshrl.u32 %v1754, 7
      %v1756 = vsub.s32 1, %v1755
      %v1757 = vrot.slane %v984, %v1756
      %1759 = vrot.lane.b32.xlu0 %v1757, 48
      %v1760 = vpop.permute.xlu0 %1759
      %v1762 = vmul.f32 %v1752, %v1760
      %v1763 = vmul.f32 %v1753, %v1760
      %v1764 = vlaneseq
      %v1765 = vshrl.u32 %v1764, 7
      %v1766 = vsub.s32 2, %v1765
      %v1767 = vrot.slane %v984, %v1766
      %1769 = vrot.lane.b32.xlu0 %v1767, 48
      %v1770 = vpop.permute.xlu0 %1769
      %v1772 = vadd.f32 %v1762, %v1770
      %v1773 = vadd.f32 %v1763, %v1770
      %v1774 = vld [vmem:[%s5] sm:$0xff]
      %v1775 = vld [vmem:[%s5 + $0x8] sm:$0xff]
      %v1776 = vld [vmem:[%s5 + $0x10] sm:$0xff]
      %v1777 = vld [vmem:[%s5 + $0x18] sm:$0x1]
      %v1778 = vpack.c.bf16 %v1773, %v1772
      %v1779 = vpack.c.bf16 %v1775, %v1774
      %v1780 = vlaneseq
      %v1781 = vshrl.u32 %v1780, 7
      %v1782 = vsub.s32 0, %v1781
      %v1783 = vrot.slane %v1776, %v1782
      %1785 = vrot.lane.b32.xlu0 %v1778, 80
      %v1786 = vpop.permute.xlu0 %1785
      %v1788 = vsel %vm466, %v1786, 0
      %1790 = vmatprep.subr.bf16.mxu0 0
      %1791 = vmatpush1.bf16.msra.mxu0 %v1779
      %1792 = vmatprep.subr.bf16.mxu0 0
      %1793 = vmatpush1.bf16.msra.mxu0 0
      %1794 = vmatprep.subr.bf16.mxu0 0
      %1795 = vmatpush1.bf16.msra.mxu0 0
      %1796 = vmatprep.subr.bf16.mxu0 0
      %1797 = vmatpush1.bf16.msra.mxu0 0
      %1798 = vmatprep.subr.bf16.mxu0 0
      %1799 = vmatpush1.bf16.msra.mxu0 0
      %1800 = vmatprep.subr.bf16.mxu0 0
      %1801 = vmatpush1.bf16.msra.mxu0 0
      %1802 = vmatprep.subr.bf16.mxu0 0
      %1803 = vmatpush1.bf16.msra.mxu0 0
      %1804 = vmatprep.subr.bf16.mxu0 0
      %1805 = vmatpush1.bf16.msra.mxu0 0
      %1806 = vmatprep.subr.bf16.mxu0 0
      %1807 = vmatpush1.bf16.msra.mxu0 0
      %1808 = vmatprep.subr.bf16.mxu0 0
      %1809 = vmatpush1.bf16.msra.mxu0 0
      %1810 = vmatprep.subr.bf16.mxu0 0
      %1811 = vmatpush1.bf16.msra.mxu0 0
      %1812 = vmatprep.subr.bf16.mxu0 0
      %1813 = vmatpush1.bf16.msra.mxu0 0
      %1814 = vmatprep.subr.bf16.mxu0 0
      %1815 = vmatpush1.bf16.msra.mxu0 0
      %1816 = vmatprep.subr.bf16.mxu0 0
      %1817 = vmatpush1.bf16.msra.mxu0 0
      %1818 = vmatprep.subr.bf16.mxu0 0
      %1819 = vmatpush1.bf16.msra.mxu0 0
      %1820 = vmatprep.subr.bf16.mxu0 0
      %1821 = vmatpush1.bf16.msra.mxu0 0
      %1822 = vmatprep.mubr.bf16.mxu0 0
      %1823 = vmatmul.mubr.bf16.gmra.mrb[0].mxu0 %v1788
      %v1824 = vpop.f32.mrb[0].mxu0
      %v1825 = vadd.f32 %v1783, %v1824
      %v1826 = vpop.f32.mrb[0].mxu0
      %v1827 = vpop.f32.mrb[0].mxu0
      %v1828 = vadd.f32 %v1783, %v1827
      %v1829 = vpop.f32.mrb[0].mxu0
      %1830 = vdwg.mxu0
      %v1831 = vpack.c.bf16 %v1828, %v1825
      %1833 = vset.pattern.permute.xlu0 7
      %1834 = vperm.xlu0 %1833, %v1825
      %v1835 = vpop.permute.xlu0 %1834
      %1838 = vset.pattern.permute.xlu0 7
      %1839 = vperm.xlu0 %1838, %v1828
      %v1840 = vpop.permute.xlu0 %1839
      %v1842 = vmul.f32 %v1835, %v297
      %v1843 = vmul.f32 %v1840, %v298
      %1845 = vrot.lane.b32.xlu0 %v1831, 126
      %v1846 = vpop.permute.xlu0 %1845
      %vm1847 = vcmask 7168
      %v1849 = vsel %vm1847, %v1831, 0
      %v1852 = vsel %vm1847, %v1846, 0
      %1854 = vmatprep.subr.bf16.mxu0 0
      %1855 = vmatpush1.bf16.xpose.msra.mxu0 %v1852
      %1856 = vmatprep.subr.bf16.mxu0 0
      %1857 = vmatpush1.bf16.xpose.msra.mxu0 0
      %1858 = vmatprep.subr.bf16.mxu0 0
      %1859 = vmatpush1.bf16.xpose.msra.mxu0 0
      %1860 = vmatprep.subr.bf16.mxu0 0
      %1861 = vmatpush1.bf16.xpose.msra.mxu0 0
      %1862 = vmatprep.subr.bf16.mxu0 0
      %1863 = vmatpush1.bf16.xpose.msra.mxu0 0
      %1864 = vmatprep.subr.bf16.mxu0 0
      %1865 = vmatpush1.bf16.xpose.msra.mxu0 0
      %1866 = vmatprep.subr.bf16.mxu0 0
      %1867 = vmatpush1.bf16.xpose.msra.mxu0 0
      %1868 = vmatprep.subr.bf16.mxu0 0
      %1869 = vmatpush1.bf16.xpose.msra.mxu0 0
      %1870 = vmatprep.subr.bf16.mxu0 0
      %1871 = vmatpush1.bf16.xpose.msra.mxu0 0
      %1872 = vmatprep.subr.bf16.mxu0 0
      %1873 = vmatpush1.bf16.xpose.msra.mxu0 0
      %1874 = vmatprep.subr.bf16.mxu0 0
      %1875 = vmatpush1.bf16.xpose.msra.mxu0 0
      %1876 = vmatprep.subr.bf16.mxu0 0
      %1877 = vmatpush1.bf16.xpose.msra.mxu0 0
      %1878 = vmatprep.subr.bf16.mxu0 0
      %1879 = vmatpush1.bf16.xpose.msra.mxu0 0
      %1880 = vmatprep.subr.bf16.mxu0 0
      %1881 = vmatpush1.bf16.xpose.msra.mxu0 0
      %1882 = vmatprep.subr.bf16.mxu0 0
      %1883 = vmatpush1.bf16.xpose.msra.mxu0 0
      %1884 = vmatprep.subr.bf16.mxu0 0
      %1885 = vmatpush1.bf16.xpose.msra.mxu0 0
      %1886 = vmatprep.mubr.bf16.mxu0 0
      %1887 = vmatmul.mubr.bf16.gmra.mrb[0].mxu0 %v1849
      %v1888 = vpop.f32.mrb[0].mxu0
      %v1889 = vadd.f32 %v1842, %v1888
      %v1890 = vpop.f32.mrb[0].mxu0
      %v1891 = vpop.f32.mrb[0].mxu0
      %v1892 = vadd.f32 %v1843, %v1891
      %v1893 = vpop.f32.mrb[0].mxu0
      %1894 = vdwg.mxu0
      %1895 = vset.pattern.permute.xlu0 8
      %1896 = vperm.xlu0 %1895, %v1825
      %v1897 = vpop.permute.xlu0 %1896
      %1899 = vset.pattern.permute.xlu0 8
      %1900 = vperm.xlu0 %1899, %v1828
      %v1901 = vpop.permute.xlu0 %1900
      %v1903 = vmul.f32 %v1897, %v299
      %v1904 = vmul.f32 %v1901, %v300
      %v1905 = vadd.f32 %v1889, %v1903
      %v1906 = vadd.f32 %v1892, %v1904
      %1907 = vset.pattern.permute.xlu0 9
      %1908 = vperm.xlu0 %1907, %v1825
      %v1909 = vpop.permute.xlu0 %1908
      %1911 = vset.pattern.permute.xlu0 9
      %1912 = vperm.xlu0 %1911, %v1828
      %v1913 = vpop.permute.xlu0 %1912
      %v1915 = vmul.f32 %v1909, %v301
      %v1916 = vmul.f32 %v1913, %v302
      %v1917 = vadd.f32 %v1905, %v1915
      %v1918 = vadd.f32 %v1906, %v1916
      %1919 = vset.pattern.permute.xlu0 10
      %1920 = vperm.xlu0 %1919, %v1825
      %v1921 = vpop.permute.xlu0 %1920
      %1923 = vset.pattern.permute.xlu0 10
      %1924 = vperm.xlu0 %1923, %v1828
      %v1925 = vpop.permute.xlu0 %1924
      %v1927 = vmul.f32 %v1921, %v303
      %v1928 = vmul.f32 %v1925, %v304
      %v1929 = vadd.f32 %v1917, %v1927
      %v1930 = vadd.f32 %v1918, %v1928
      %1931 = vset.pattern.permute.xlu0 11
      %1932 = vperm.xlu0 %1931, %v1825
      %v1933 = vpop.permute.xlu0 %1932
      %1935 = vset.pattern.permute.xlu0 11
      %1936 = vperm.xlu0 %1935, %v1828
      %v1937 = vpop.permute.xlu0 %1936
      %v1939 = vmul.f32 %v1933, %v1185
      %v1940 = vmul.f32 %v1937, %v1186
      %v1941 = vadd.f32 %v1929, %v1939
      %v1942 = vadd.f32 %v1930, %v1940
      %1943 = vset.pattern.permute.xlu0 12
      %1944 = vperm.xlu0 %1943, %v1825
      %v1945 = vpop.permute.xlu0 %1944
      %1947 = vset.pattern.permute.xlu0 12
      %1948 = vperm.xlu0 %1947, %v1828
      %v1949 = vpop.permute.xlu0 %1948
      %v1951 = vmul.f32 %v1945, %v1474
      %v1952 = vmul.f32 %v1949, %v1475
      %v1953 = vadd.f32 %v1941, %v1951
      %v1954 = vadd.f32 %v1942, %v1952
      %v1955 = vadd.f32 %v1953, %v295
      %v1956 = vadd.f32 %v1954, %v296
      %v1957 = vsel %vm466, %v1955, -inf
      %1958 = vmax.xlane.f32.xlu0 %v1957
      %v1959 = vpop.xlane.xlu0 %1958
      %v1960 = vsel %vm466, %v1956, -inf
      %1961 = vmax.xlane.f32.xlu0 %v1960
      %v1962 = vpop.xlane.xlu0 %1961
      %v1963 = vsub.f32 %v1955, %v1959
      %v1964 = vsub.f32 %v1956, %v1962
      %v1965 = vmul.f32 %v1963, 1.442695
      %v1966 = vpow.pop %v1965
      %v1967 = vmul.f32 %v1964, 1.442695
      %v1968 = vpow.pop %v1967
      %v1969 = vsel %vm466, %v1966, 0.0
      %1970 = vadd.xlane.f32.xlu0 %v1969
      %v1971 = vpop.xlane.xlu0 %1970
      %v1972 = vsel %vm466, %v1968, 0.0
      %1973 = vadd.xlane.f32.xlu0 %v1972
      %v1974 = vpop.xlane.xlu0 %1973
      %v1975 = vrcp.pop %v1971
      %v1976 = vrcp.pop %v1974
      %v1977 = vmul.f32 %v1966, %v1975
      %v1978 = vmul.f32 %v1968, %v1976
      %v1979 = vpack.c.bf16 %v1978, %v1977
      %v1980 = vmul.f32 %v1977, %v297
      %v1981 = vmul.f32 %v1978, %v298
      %v1982 = vsel %vm466, %v1980, 0.0
      %1983 = vadd.xlane.f32.xlu0 %v1982
      %v1984 = vpop.xlane.xlu0 %1983
      %v1985 = vsel %vm466, %v1981, 0.0
      %1986 = vadd.xlane.f32.xlu0 %v1985
      %v1987 = vpop.xlane.xlu0 %1986
      %v1988 = vlaneseq
      %v1989 = vshrl.u32 %v1988, 7
      %v1990 = vsub.s32 1, %v1989
      %v1991 = vrot.slane %v1776, %v1990
      %v1992 = vmul.f32 %v1984, %v1991
      %v1993 = vmul.f32 %v1987, %v1991
      %1994 = vrot.lane.b32.xlu0 %v1831, 124
      %v1995 = vpop.permute.xlu0 %1994
      %v1998 = vsel %vm466, %v1979, 0
      %2000 = vmatprep.subr.bf16.mxu0 0
      %2001 = vmatpush1.bf16.msra.mxu0 %v1995
      %2002 = vmatprep.subr.bf16.mxu0 0
      %2003 = vmatpush1.bf16.msra.mxu0 0
      %2004 = vmatprep.subr.bf16.mxu0 0
      %2005 = vmatpush1.bf16.msra.mxu0 0
      %2006 = vmatprep.subr.bf16.mxu0 0
      %2007 = vmatpush1.bf16.msra.mxu0 0
      %2008 = vmatprep.subr.bf16.mxu0 0
      %2009 = vmatpush1.bf16.msra.mxu0 0
      %2010 = vmatprep.subr.bf16.mxu0 0
      %2011 = vmatpush1.bf16.msra.mxu0 0
      %2012 = vmatprep.subr.bf16.mxu0 0
      %2013 = vmatpush1.bf16.msra.mxu0 0
      %2014 = vmatprep.subr.bf16.mxu0 0
      %2015 = vmatpush1.bf16.msra.mxu0 0
      %2016 = vmatprep.subr.bf16.mxu0 0
      %2017 = vmatpush1.bf16.msra.mxu0 0
      %2018 = vmatprep.subr.bf16.mxu0 0
      %2019 = vmatpush1.bf16.msra.mxu0 0
      %2020 = vmatprep.subr.bf16.mxu0 0
      %2021 = vmatpush1.bf16.msra.mxu0 0
      %2022 = vmatprep.subr.bf16.mxu0 0
      %2023 = vmatpush1.bf16.msra.mxu0 0
      %2024 = vmatprep.subr.bf16.mxu0 0
      %2025 = vmatpush1.bf16.msra.mxu0 0
      %2026 = vmatprep.subr.bf16.mxu0 0
      %2027 = vmatpush1.bf16.msra.mxu0 0
      %2028 = vmatprep.subr.bf16.mxu0 0
      %2029 = vmatpush1.bf16.msra.mxu0 0
      %2030 = vmatprep.subr.bf16.mxu0 0
      %2031 = vmatpush1.bf16.msra.mxu0 0
      %2032 = vmatprep.mubr.bf16.mxu0 0
      %2033 = vmatmul.mubr.bf16.gmra.mrb[0].mxu0 %v1998
      %v2034 = vpop.f32.mrb[0].mxu0
      %v2035 = vadd.f32 %v1992, %v2034
      %v2036 = vpop.f32.mrb[0].mxu0
      %v2037 = vpop.f32.mrb[0].mxu0
      %v2038 = vadd.f32 %v1993, %v2037
      %v2039 = vpop.f32.mrb[0].mxu0
      %2040 = vdwg.mxu0
      %v2041 = vmul.f32 %v1977, %v299
      %v2042 = vmul.f32 %v1978, %v300
      %v2043 = vsel %vm466, %v2041, 0.0
      %2044 = vadd.xlane.f32.xlu0 %v2043
      %v2045 = vpop.xlane.xlu0 %2044
      %v2046 = vsel %vm466, %v2042, 0.0
      %2047 = vadd.xlane.f32.xlu0 %v2046
      %v2048 = vpop.xlane.xlu0 %2047
      %v2049 = vlaneseq
      %v2050 = vshrl.u32 %v2049, 7
      %v2051 = vsub.s32 2, %v2050
      %v2052 = vrot.slane %v1776, %v2051
      %v2053 = vmul.f32 %v2045, %v2052
      %v2054 = vmul.f32 %v2048, %v2052
      %v2055 = vadd.f32 %v2035, %v2053
      %v2056 = vadd.f32 %v2038, %v2054
      %v2057 = vmul.f32 %v1977, %v301
      %v2058 = vmul.f32 %v1978, %v302
      %v2059 = vsel %vm466, %v2057, 0.0
      %2060 = vadd.xlane.f32.xlu0 %v2059
      %v2061 = vpop.xlane.xlu0 %2060
      %v2062 = vsel %vm466, %v2058, 0.0
      %2063 = vadd.xlane.f32.xlu0 %v2062
      %v2064 = vpop.xlane.xlu0 %2063
      %v2065 = vlaneseq
      %v2066 = vshrl.u32 %v2065, 7
      %v2067 = vsub.s32 3, %v2066
      %v2068 = vrot.slane %v1776, %v2067
      %v2069 = vmul.f32 %v2061, %v2068
      %v2070 = vmul.f32 %v2064, %v2068
      %v2071 = vadd.f32 %v2055, %v2069
      %v2072 = vadd.f32 %v2056, %v2070
      %v2073 = vmul.f32 %v1977, %v303
      %v2074 = vmul.f32 %v1978, %v304
      %v2075 = vsel %vm466, %v2073, 0.0
      %2076 = vadd.xlane.f32.xlu0 %v2075
      %v2077 = vpop.xlane.xlu0 %2076
      %v2078 = vsel %vm466, %v2074, 0.0
      %2079 = vadd.xlane.f32.xlu0 %v2078
      %v2080 = vpop.xlane.xlu0 %2079
      %v2081 = vlaneseq
      %v2082 = vshrl.u32 %v2081, 7
      %v2083 = vsub.s32 4, %v2082
      %v2084 = vrot.slane %v1776, %v2083
      %v2085 = vmul.f32 %v2077, %v2084
      %v2086 = vmul.f32 %v2080, %v2084
      %v2087 = vadd.f32 %v2071, %v2085
      %v2088 = vadd.f32 %v2072, %v2086
      %v2089 = vmul.f32 %v1977, %v1185
      %v2090 = vmul.f32 %v1978, %v1186
      %v2091 = vsel %vm466, %v2089, 0.0
      %2092 = vadd.xlane.f32.xlu0 %v2091
      %v2093 = vpop.xlane.xlu0 %2092
      %v2094 = vsel %vm466, %v2090, 0.0
      %2095 = vadd.xlane.f32.xlu0 %v2094
      %v2096 = vpop.xlane.xlu0 %2095
      %v2097 = vlaneseq
      %v2098 = vshrl.u32 %v2097, 7
      %v2099 = vsub.s32 5, %v2098
      %v2100 = vrot.slane %v1776, %v2099
      %v2101 = vmul.f32 %v2093, %v2100
      %v2102 = vmul.f32 %v2096, %v2100
      %v2103 = vadd.f32 %v2087, %v2101
      %v2104 = vadd.f32 %v2088, %v2102
      %v2105 = vmul.f32 %v1977, %v1474
      %v2106 = vmul.f32 %v1978, %v1475
      %v2107 = vsel %vm466, %v2105, 0.0
      %2108 = vadd.xlane.f32.xlu0 %v2107
      %v2109 = vpop.xlane.xlu0 %2108
      %v2110 = vsel %vm466, %v2106, 0.0
      %2111 = vadd.xlane.f32.xlu0 %v2110
      %v2112 = vpop.xlane.xlu0 %2111
      %v2113 = vlaneseq
      %v2114 = vshrl.u32 %v2113, 7
      %v2115 = vsub.s32 6, %v2114
      %v2116 = vrot.slane %v1776, %v2115
      %v2117 = vmul.f32 %v2109, %v2116
      %v2118 = vmul.f32 %v2112, %v2116
      %v2119 = vadd.f32 %v2103, %v2117
      %v2120 = vadd.f32 %v2104, %v2118
      %2121 = vset.pattern.permute.xlu0 13
      %2122 = vperm.xlu0 %2121, %v1825
      %v2123 = vpop.permute.xlu0 %2122
      %2125 = vset.pattern.permute.xlu0 13
      %2126 = vperm.xlu0 %2125, %v1828
      %v2127 = vpop.permute.xlu0 %2126
      %v2129 = vmul.f32 %v2123, %v297
      %v2130 = vmul.f32 %v2127, %v298
      %2131 = vrot.lane.b32.xlu0 %v1831, 127
      %v2132 = vpop.permute.xlu0 %2131
      %2133 = vrot.lane.b32.xlu0 %v1831, 125
      %v2134 = vpop.permute.xlu0 %2133
      %v2136 = vsel %vm1847, %v2132, 0
      %v2139 = vsel %vm1847, %v2134, 0
      %2141 = vmatprep.subr.bf16.mxu0 0
      %2142 = vmatpush1.bf16.xpose.msra.mxu0 %v2139
      %2143 = vmatprep.subr.bf16.mxu0 0
      %2144 = vmatpush1.bf16.xpose.msra.mxu0 0
      %2145 = vmatprep.subr.bf16.mxu0 0
      %2146 = vmatpush1.bf16.xpose.msra.mxu0 0
      %2147 = vmatprep.subr.bf16.mxu0 0
      %2148 = vmatpush1.bf16.xpose.msra.mxu0 0
      %2149 = vmatprep.subr.bf16.mxu0 0
      %2150 = vmatpush1.bf16.xpose.msra.mxu0 0
      %2151 = vmatprep.subr.bf16.mxu0 0
      %2152 = vmatpush1.bf16.xpose.msra.mxu0 0
      %2153 = vmatprep.subr.bf16.mxu0 0
      %2154 = vmatpush1.bf16.xpose.msra.mxu0 0
      %2155 = vmatprep.subr.bf16.mxu0 0
      %2156 = vmatpush1.bf16.xpose.msra.mxu0 0
      %2157 = vmatprep.subr.bf16.mxu0 0
      %2158 = vmatpush1.bf16.xpose.msra.mxu0 0
      %2159 = vmatprep.subr.bf16.mxu0 0
      %2160 = vmatpush1.bf16.xpose.msra.mxu0 0
      %2161 = vmatprep.subr.bf16.mxu0 0
      %2162 = vmatpush1.bf16.xpose.msra.mxu0 0
      %2163 = vmatprep.subr.bf16.mxu0 0
      %2164 = vmatpush1.bf16.xpose.msra.mxu0 0
      %2165 = vmatprep.subr.bf16.mxu0 0
      %2166 = vmatpush1.bf16.xpose.msra.mxu0 0
      %2167 = vmatprep.subr.bf16.mxu0 0
      %2168 = vmatpush1.bf16.xpose.msra.mxu0 0
      %2169 = vmatprep.subr.bf16.mxu0 0
      %2170 = vmatpush1.bf16.xpose.msra.mxu0 0
      %2171 = vmatprep.subr.bf16.mxu0 0
      %2172 = vmatpush1.bf16.xpose.msra.mxu0 0
      %2173 = vmatprep.mubr.bf16.mxu0 0
      %2174 = vmatmul.mubr.bf16.gmra.mrb[0].mxu0 %v2136
      %v2175 = vpop.f32.mrb[0].mxu0
      %v2176 = vadd.f32 %v2129, %v2175
      %v2177 = vpop.f32.mrb[0].mxu0
      %v2178 = vpop.f32.mrb[0].mxu0
      %v2179 = vadd.f32 %v2130, %v2178
      %v2180 = vpop.f32.mrb[0].mxu0
      %2181 = vdwg.mxu0
      %2182 = vset.pattern.permute.xlu0 14
      %2183 = vperm.xlu0 %2182, %v1825
      %v2184 = vpop.permute.xlu0 %2183
      %2186 = vset.pattern.permute.xlu0 14
      %2187 = vperm.xlu0 %2186, %v1828
      %v2188 = vpop.permute.xlu0 %2187
      %v2190 = vmul.f32 %v2184, %v299
      %v2191 = vmul.f32 %v2188, %v300
      %v2192 = vadd.f32 %v2176, %v2190
      %v2193 = vadd.f32 %v2179, %v2191
      %2194 = vset.pattern.permute.xlu0 15
      %2195 = vperm.xlu0 %2194, %v1825
      %v2196 = vpop.permute.xlu0 %2195
      %2198 = vset.pattern.permute.xlu0 15
      %2199 = vperm.xlu0 %2198, %v1828
      %v2200 = vpop.permute.xlu0 %2199
      %v2202 = vmul.f32 %v2196, %v301
      %v2203 = vmul.f32 %v2200, %v302
      %v2204 = vadd.f32 %v2192, %v2202
      %v2205 = vadd.f32 %v2193, %v2203
      %2206 = vset.pattern.permute.xlu0 16
      %2207 = vperm.xlu0 %2206, %v1825
      %v2208 = vpop.permute.xlu0 %2207
      %2210 = vset.pattern.permute.xlu0 16
      %2211 = vperm.xlu0 %2210, %v1828
      %v2212 = vpop.permute.xlu0 %2211
      %v2214 = vmul.f32 %v2208, %v303
      %v2215 = vmul.f32 %v2212, %v304
      %v2216 = vadd.f32 %v2204, %v2214
      %v2217 = vadd.f32 %v2205, %v2215
      %2218 = vset.pattern.permute.xlu0 17
      %2219 = vperm.xlu0 %2218, %v1825
      %v2220 = vpop.permute.xlu0 %2219
      %2222 = vset.pattern.permute.xlu0 17
      %2223 = vperm.xlu0 %2222, %v1828
      %v2224 = vpop.permute.xlu0 %2223
      %v2226 = vmul.f32 %v2220, %v1185
      %v2227 = vmul.f32 %v2224, %v1186
      %v2228 = vadd.f32 %v2216, %v2226
      %v2229 = vadd.f32 %v2217, %v2227
      %2230 = vset.pattern.permute.xlu0 18
      %2231 = vperm.xlu0 %2230, %v1825
      %v2232 = vpop.permute.xlu0 %2231
      %2234 = vset.pattern.permute.xlu0 18
      %2235 = vperm.xlu0 %2234, %v1828
      %v2236 = vpop.permute.xlu0 %2235
      %v2238 = vmul.f32 %v2232, %v1474
      %v2239 = vmul.f32 %v2236, %v1475
      %v2240 = vadd.f32 %v2228, %v2238
      %v2241 = vadd.f32 %v2229, %v2239
      %v2242 = vadd.f32 %v2240, %v295
      %v2243 = vadd.f32 %v2241, %v296
      %v2244 = vsel %vm466, %v2242, -inf
      %2245 = vmax.xlane.f32.xlu0 %v2244
      %v2246 = vpop.xlane.xlu0 %2245
      %v2247 = vsel %vm466, %v2243, -inf
      %2248 = vmax.xlane.f32.xlu0 %v2247
      %v2249 = vpop.xlane.xlu0 %2248
      %v2250 = vsub.f32 %v2242, %v2246
      %v2251 = vsub.f32 %v2243, %v2249
      %v2252 = vmul.f32 %v2250, 1.442695
      %v2253 = vpow.pop %v2252
      %v2254 = vmul.f32 %v2251, 1.442695
      %v2255 = vpow.pop %v2254
      %v2256 = vsel %vm466, %v2253, 0.0
      %2257 = vadd.xlane.f32.xlu0 %v2256
      %v2258 = vpop.xlane.xlu0 %2257
      %v2259 = vsel %vm466, %v2255, 0.0
      %2260 = vadd.xlane.f32.xlu0 %v2259
      %v2261 = vpop.xlane.xlu0 %2260
      %v2262 = vrcp.pop %v2258
      %v2263 = vrcp.pop %v2261
      %v2264 = vmul.f32 %v2253, %v2262
      %v2265 = vmul.f32 %v2255, %v2263
      %v2266 = vpack.c.bf16 %v2265, %v2264
      %v2267 = vmul.f32 %v2264, %v297
      %v2268 = vmul.f32 %v2265, %v298
      %v2269 = vsel %vm466, %v2267, 0.0
      %2270 = vadd.xlane.f32.xlu0 %v2269
      %v2271 = vpop.xlane.xlu0 %2270
      %v2272 = vsel %vm466, %v2268, 0.0
      %2273 = vadd.xlane.f32.xlu0 %v2272
      %v2274 = vpop.xlane.xlu0 %2273
      %v2275 = vmul.f32 %v2271, %v1991
      %v2276 = vmul.f32 %v2274, %v1991
      %2277 = vrot.lane.b32.xlu0 %v1831, 123
      %v2278 = vpop.permute.xlu0 %2277
      %2282 = vrot.lane.b32.xlu0 %v2275, 127
      %v2283 = vpop.permute.xlu0 %2282
      %2284 = vrot.lane.b32.xlu0 %v2276, 127
      %v2285 = vpop.permute.xlu0 %2284
      %v2289 = vsel %vm466, %v2266, 0
      %2291 = vmatprep.subr.bf16.mxu0 0
      %2292 = vmatpush1.bf16.msra.mxu0 %v2278
      %2293 = vmatprep.subr.bf16.mxu0 0
      %2294 = vmatpush1.bf16.msra.mxu0 0
      %2295 = vmatprep.subr.bf16.mxu0 0
      %2296 = vmatpush1.bf16.msra.mxu0 0
      %2297 = vmatprep.subr.bf16.mxu0 0
      %2298 = vmatpush1.bf16.msra.mxu0 0
      %2299 = vmatprep.subr.bf16.mxu0 0
      %2300 = vmatpush1.bf16.msra.mxu0 0
      %2301 = vmatprep.subr.bf16.mxu0 0
      %2302 = vmatpush1.bf16.msra.mxu0 0
      %2303 = vmatprep.subr.bf16.mxu0 0
      %2304 = vmatpush1.bf16.msra.mxu0 0
      %2305 = vmatprep.subr.bf16.mxu0 0
      %2306 = vmatpush1.bf16.msra.mxu0 0
      %2307 = vmatprep.subr.bf16.mxu0 0
      %2308 = vmatpush1.bf16.msra.mxu0 0
      %2309 = vmatprep.subr.bf16.mxu0 0
      %2310 = vmatpush1.bf16.msra.mxu0 0
      %2311 = vmatprep.subr.bf16.mxu0 0
      %2312 = vmatpush1.bf16.msra.mxu0 0
      %2313 = vmatprep.subr.bf16.mxu0 0
      %2314 = vmatpush1.bf16.msra.mxu0 0
      %2315 = vmatprep.subr.bf16.mxu0 0
      %2316 = vmatpush1.bf16.msra.mxu0 0
      %2317 = vmatprep.subr.bf16.mxu0 0
      %2318 = vmatpush1.bf16.msra.mxu0 0
      %2319 = vmatprep.subr.bf16.mxu0 0
      %2320 = vmatpush1.bf16.msra.mxu0 0
      %2321 = vmatprep.subr.bf16.mxu0 0
      %2322 = vmatpush1.bf16.msra.mxu0 0
      %2323 = vmatprep.mubr.bf16.mxu0 0
      %2324 = vmatmul.mubr.bf16.gmra.mrb[0].mxu0 %v2289
      %v2325 = vpop.f32.mrb[0].mxu0
      %v2326 = vadd.f32 %v2283, %v2325
      %v2327 = vpop.f32.mrb[0].mxu0
      %v2328 = vpop.f32.mrb[0].mxu0
      %v2329 = vadd.f32 %v2285, %v2328
      %v2330 = vpop.f32.mrb[0].mxu0
      %2331 = vdwg.mxu0
      %v2332 = vmul.f32 %v2264, %v299
      %v2333 = vmul.f32 %v2265, %v300
      %v2334 = vsel %vm466, %v2332, 0.0
      %2335 = vadd.xlane.f32.xlu0 %v2334
      %v2336 = vpop.xlane.xlu0 %2335
      %v2337 = vsel %vm466, %v2333, 0.0
      %2338 = vadd.xlane.f32.xlu0 %v2337
      %v2339 = vpop.xlane.xlu0 %2338
      %v2340 = vmul.f32 %v2336, %v2052
      %v2341 = vmul.f32 %v2339, %v2052
      %2344 = vrot.lane.b32.xlu0 %v2340, 127
      %v2345 = vpop.permute.xlu0 %2344
      %2346 = vrot.lane.b32.xlu0 %v2341, 127
      %v2347 = vpop.permute.xlu0 %2346
      %v2350 = vadd.f32 %v2326, %v2345
      %v2351 = vadd.f32 %v2329, %v2347
      %v2352 = vmul.f32 %v2264, %v301
      %v2353 = vmul.f32 %v2265, %v302
      %v2354 = vsel %vm466, %v2352, 0.0
      %2355 = vadd.xlane.f32.xlu0 %v2354
      %v2356 = vpop.xlane.xlu0 %2355
      %v2357 = vsel %vm466, %v2353, 0.0
      %2358 = vadd.xlane.f32.xlu0 %v2357
      %v2359 = vpop.xlane.xlu0 %2358
      %v2360 = vmul.f32 %v2356, %v2068
      %v2361 = vmul.f32 %v2359, %v2068
      %2364 = vrot.lane.b32.xlu0 %v2360, 127
      %v2365 = vpop.permute.xlu0 %2364
      %2366 = vrot.lane.b32.xlu0 %v2361, 127
      %v2367 = vpop.permute.xlu0 %2366
      %v2370 = vadd.f32 %v2350, %v2365
      %v2371 = vadd.f32 %v2351, %v2367
      %v2372 = vmul.f32 %v2264, %v303
      %v2373 = vmul.f32 %v2265, %v304
      %v2374 = vsel %vm466, %v2372, 0.0
      %2375 = vadd.xlane.f32.xlu0 %v2374
      %v2376 = vpop.xlane.xlu0 %2375
      %v2377 = vsel %vm466, %v2373, 0.0
      %2378 = vadd.xlane.f32.xlu0 %v2377
      %v2379 = vpop.xlane.xlu0 %2378
      %v2380 = vmul.f32 %v2376, %v2084
      %v2381 = vmul.f32 %v2379, %v2084
      %2384 = vrot.lane.b32.xlu0 %v2380, 127
      %v2385 = vpop.permute.xlu0 %2384
      %2386 = vrot.lane.b32.xlu0 %v2381, 127
      %v2387 = vpop.permute.xlu0 %2386
      %v2390 = vadd.f32 %v2370, %v2385
      %v2391 = vadd.f32 %v2371, %v2387
      %v2392 = vmul.f32 %v2264, %v1185
      %v2393 = vmul.f32 %v2265, %v1186
      %v2394 = vsel %vm466, %v2392, 0.0
      %2395 = vadd.xlane.f32.xlu0 %v2394
      %v2396 = vpop.xlane.xlu0 %2395
      %v2397 = vsel %vm466, %v2393, 0.0
      %2398 = vadd.xlane.f32.xlu0 %v2397
      %v2399 = vpop.xlane.xlu0 %2398
      %v2400 = vmul.f32 %v2396, %v2100
      %v2401 = vmul.f32 %v2399, %v2100
      %2404 = vrot.lane.b32.xlu0 %v2400, 127
      %v2405 = vpop.permute.xlu0 %2404
      %2406 = vrot.lane.b32.xlu0 %v2401, 127
      %v2407 = vpop.permute.xlu0 %2406
      %v2410 = vadd.f32 %v2390, %v2405
      %v2411 = vadd.f32 %v2391, %v2407
      %v2412 = vmul.f32 %v2264, %v1474
      %v2413 = vmul.f32 %v2265, %v1475
      %v2414 = vsel %vm466, %v2412, 0.0
      %2415 = vadd.xlane.f32.xlu0 %v2414
      %v2416 = vpop.xlane.xlu0 %2415
      %v2417 = vsel %vm466, %v2413, 0.0
      %2418 = vadd.xlane.f32.xlu0 %v2417
      %v2419 = vpop.xlane.xlu0 %2418
      %v2420 = vmul.f32 %v2416, %v2116
      %v2421 = vmul.f32 %v2419, %v2116
      %2424 = vrot.lane.b32.xlu0 %v2420, 127
      %v2425 = vpop.permute.xlu0 %2424
      %2426 = vrot.lane.b32.xlu0 %v2421, 127
      %v2427 = vpop.permute.xlu0 %2426
      %v2430 = vadd.f32 %v2410, %v2425
      %v2431 = vadd.f32 %v2411, %v2427
      %v2432 = vadd.f32 %v2119, %v2430
      %v2433 = vadd.f32 %v2120, %v2431
      %v2434 = vmul.f32 %v2432, 0.5
      %v2435 = vmul.f32 %v2433, 0.5
      %v2436 = vlaneseq
      %v2437 = vshrl.u32 %v2436, 7
      %v2438 = vsub.s32 7, %v2437
      %v2439 = vrot.slane %v1776, %v2438
      %v2440 = vmul.f32 %v2434, %v2439
      %v2441 = vmul.f32 %v2435, %v2439
      %v2442 = vlaneseq
      %v2443 = vshrl.u32 %v2442, 7
      %v2444 = vsub.s32 0, %v2443
      %v2445 = vrot.slane %v1777, %v2444
      %2447 = vrot.lane.b32.xlu0 %v2445, 6
      %v2448 = vpop.permute.xlu0 %2447
      %v2450 = vmul.f32 %v1825, %v2448
      %v2451 = vmul.f32 %v1828, %v2448
      %2454 = vrot.lane.b32.xlu0 %v2450, 122
      %v2455 = vpop.permute.xlu0 %2454
      %2456 = vrot.lane.b32.xlu0 %v2451, 122
      %v2457 = vpop.permute.xlu0 %2456
      %v2460 = vadd.f32 %v2440, %v2455
      %v2461 = vadd.f32 %v2441, %v2457
      %v2462 = vadd.f32 %v2460, 0.0
      %v2463 = vadd.f32 %v2461, 0.0
      %v2464 = vxor.u32 %v2462, 2147483648
      %v2465 = vxor.u32 %v2463, 2147483648
      %v2466 = vmul.f32 %v2464, 1.442695
      %v2467 = vpow.pop %v2466
      %v2468 = vmul.f32 %v2465, 1.442695
      %v2469 = vpow.pop %v2468
      %v2470 = vadd.f32 %v2467, 1.0
      %v2471 = vadd.f32 %v2469, 1.0
      %v2472 = vrcp.pop %v2470
      %v2473 = vmul.f32 1.0, %v2472
      %v2474 = vrcp.pop %v2471
      %v2475 = vmul.f32 1.0, %v2474
      %2476 = vrot.lane.b32.xlu0 %v1825, 122
      %v2477 = vpop.permute.xlu0 %2476
      %2478 = vrot.lane.b32.xlu0 %v1828, 122
      %v2479 = vpop.permute.xlu0 %2478
      %v2482 = vmul.f32 %v2473, %v2477
      %v2483 = vmul.f32 %v2475, %v2479
      %v2484 = vsub.f32 1.0, %v2473
      %v2485 = vsub.f32 1.0, %v2475
      %v2486 = vmul.f32 %v2484, %v2434
      %v2487 = vmul.f32 %v2485, %v2435
      %v2488 = vadd.f32 %v2482, %v2486
      %v2489 = vadd.f32 %v2483, %v2487
      %v2490 = vxor.u32 %v2488, 2147483648
      %v2491 = vxor.u32 %v2489, 2147483648
      %v2492 = vmul.f32 %v2490, 1.442695
      %v2493 = vpow.pop %v2492
      %v2494 = vmul.f32 %v2491, 1.442695
      %v2495 = vpow.pop %v2494
      %v2496 = vadd.f32 %v2493, 1.0
      %v2497 = vadd.f32 %v2495, 1.0
      %v2498 = vrcp.pop %v2496
      %v2499 = vmul.f32 1.0, %v2498
      %v2500 = vrcp.pop %v2497
      %v2501 = vmul.f32 1.0, %v2500
      %2502 = vst.msk [vmem:[%s291] sm:$0xff] %vm1847, %v2499
      %2503 = vst.msk [vmem:[%s291 + $0x8] sm:$0xff] %vm1847, %v2501
      %p2504 = scmp.lt.s32.totalorder %s17, 3
      %s2505 = scalar_select %p2504, %s17, 3
      %s2506 = smul.addr %s2505, 2
      %s2507 = smul.addr %s2506, 8
      %s2508 = scalar_lea.vmem %s6, %s2507
      // Predicated region
      $region45: #{_lambda_.1} parent=43 // pred_check
        %p2509 = pneg %p176
      $region46: #{_lambda_.1} parent=43 // pred_check_branch
        %2511 = sbr.rel (%p2509) target = $region48
      $region47: #{_lambda_.1} parent=43 // pred_region
        _
      $region48: #{_lambda_.1} parent=43 // pred_fallthru
        _
    $region44: #{_lambda_.1} parent=5 // pred_fallthru
      _
    %p2512 = scmp.le.s32.totalorder 2, %s12
    // Predicated region
    $region49: #{_lambda_.1} parent=5 // pred_check
      %p2513 = pneg %p2512
    $region50: #{_lambda_.1} parent=5 // pred_check_branch
      %2515 = sbr.rel (%p2513) target = $region52
    $region51: #{_lambda_.1} parent=5 // pred_region
      %s2516 = ssub.s32 %s12, 2
      // Predicated region
      $region53: #{_lambda_.1} parent=51 // pred_check
        %p2517 = pneg %p182
      $region54: #{_lambda_.1} parent=51 // pred_check_branch
        %2519 = sbr.rel (%p2517) target = $region56
      $region55: #{_lambda_.1} parent=51 // pred_region
        %p2520 = scmp.lt.s32.totalorder %s18, 3
        %s2521 = scalar_select %p2520, %s18, 3
        %s2522 = smul.addr %s2521, 2
        %s2523 = smul.addr %s2522, 8
        %s2524 = scalar_lea.vmem %s6, %s2523
      $region56: #{_lambda_.1} parent=51 // pred_fallthru
        _
    $region52: #{_lambda_.1} parent=5 // pred_fallthru
      _
  $region6: #{_lambda_.1} parent=0 // loop_footer
    %s16 = sadd.s32 1, %s12
  $region7: #{_lambda_.1} parent=0 // loop_footer_branch
    %11 = sbr.rel target = $region3
  $region8: #{_lambda_.1} parent=0 // loop_exit
    _

</llo_original>
